<compile_context>
chip_gen: v7x
topology: tpu7x:2x2x1
jax: 0.10.0
libtpu: 0.0.40
codegen_flags: <defaults>
</compile_context>

<pallas_src>
import functools

import jax
import jax.numpy as jnp
from jax.experimental import pallas as pl
from jax.experimental.pallas import tpu as pltpu

LANES = 128       # padded channel / hidden width (lane-dense stores, MXU N)
_ROW_ALIGN = 16   # bf16 sublane packing -> keep row tiles 16-aligned


# ----------------------------------------------------------------------------
# Pallas kernels
# ----------------------------------------------------------------------------
def _conv_relu_pool_kernel(a_ref, w_ref, b_ref, o_ref):
    """a_ref is (4, tm, K): the 4 candidates of each 2x2 pool window in
    im2col form (bf16).  ONE MXU pass over all 4 candidates:
        out = relu(max_i (a[i] @ w + b))   (== max_i relu(a[i] @ w + b))."""
    a = a_ref[...]                                       # (4, tm, K)  bf16
    four, tm, k = a.shape
    w = w_ref[...]                                       # (K, 128)    bf16
    b = b_ref[...]                                       # (1, 128)    f32
    acc = jnp.dot(a.reshape(four * tm, k), w,
                  preferred_element_type=jnp.float32)    # (4*tm, 128) f32
    acc = acc.reshape(four, tm, w.shape[1]) + b          # bias broadcast
    o_ref[...] = jnp.maximum(jnp.max(acc, axis=0), 0.0).astype(o_ref.dtype)


def _fc_fused_kernel(x_ref, w1_ref, b1_ref, w2_ref, b2_ref, w3_ref, b3_ref,
                     o_ref, *, num_classes):
    """relu(x@w1+b1) -> relu(.@w2+b2) -> .@w3+b3 -> log_softmax.
    Weights are bf16, 128-lane padded, VMEM-resident; accumulation, bias/ReLU
    epilogues, the padded-column mask and the softmax are f32."""
    h = jnp.dot(x_ref[...], w1_ref[...], preferred_element_type=jnp.float32)
    h = jnp.maximum(h + b1_ref[...], 0.0)
    h = jnp.dot(h.astype(jnp.bfloat16), w2_ref[...],
                preferred_element_type=jnp.float32)
    h = jnp.maximum(h + b2_ref[...], 0.0)
    logits = jnp.dot(h.astype(jnp.bfloat16), w3_ref[...],
                     preferred_element_type=jnp.float32)
    logits = logits + b3_ref[...]
    # Mask padded logit columns out of the softmax (keep this in f32).
    col = jax.lax.broadcasted_iota(jnp.int32, logits.shape, 1)
    logits = jnp.where(col < num_classes, logits, jnp.float32(-1e30))
    m = jnp.max(logits, axis=-1, keepdims=True)
    s = logits - m
    lse = jnp.log(jnp.sum(jnp.exp(s), axis=-1, keepdims=True))
    o_ref[...] = (s - lse).astype(o_ref.dtype)


# ----------------------------------------------------------------------------
# Tiling / padding helpers
# ----------------------------------------------------------------------------
def _round_up(x, m):
    return ((x + m - 1) // m) * m


def _num_tensorcores_per_chip():
    """v7x has 2 TensorCores sharded via the 'parallel' grid axis."""
    try:
        kind = jax.devices()[0].device_kind.lower()
        if "v7" in kind:
            return 2
    except Exception:
        pass
    return 1


def _row_tiling(m, max_tile, min_blocks=1):
    """Balanced row tile (multiple of 16, ~<= max_tile) + padded row count.
    Avoids the m=max_tile+eps -> 2x-padding pathology and lets v7x force a
    >=2-block grid so both TensorCores get work."""
    blocks = max(pl.cdiv(m, max_tile), min_blocks, 1)
    tm = _round_up(pl.cdiv(m, blocks), _ROW_ALIGN)
    mp = _round_up(m, tm)
    return tm, mp


# ----------------------------------------------------------------------------
# JAX glue: im2col with the 4 pooling candidates pre-split
# ----------------------------------------------------------------------------
def _im2col_pool4(x_nhwc, kh, kw, pad):
    """Patches in (c_in, ky, kx) column order (matches the OIHW weight
    reshape), arranged as (4, n*hp*wp, K): the 4 candidates of each 2x2
    pooling window over the conv output grid."""
    n, h, w, c = x_nhwc.shape
    xp = jnp.pad(x_nhwc, ((0, 0), (pad, pad), (pad, pad), (0, 0)))
    ho = h + 2 * pad - kh + 1
    wo = w + 2 * pad - kw + 1
    assert ho % 2 == 0 and wo % 2 == 0, "2x2 pool expects even conv output"
    hp_, wp_ = ho // 2, wo // 2
    cols = []
    for ci in range(c):
        for dy in range(kh):
            for dx in range(kw):
                cols.append(xp[:, dy:dy + ho, dx:dx + wo, ci])
    patches = jnp.stack(cols, axis=-1)            # (n, ho, wo, K)
    k = c * kh * kw
    slabs = jnp.stack(
        [
            patches[:, 0:2 * hp_:2, 0:2 * wp_:2, :],
            patches[:, 0:2 * hp_:2, 1:2 * wp_:2, :],
            patches[:, 1:2 * hp_:2, 0:2 * wp_:2, :],
            patches[:, 1:2 * hp_:2, 1:2 * wp_:2, :],
        ],
        axis=0,
    ).reshape(4, n * hp_ * wp_, k)
    return slabs, hp_, wp_


# ----------------------------------------------------------------------------
# Pallas wrappers
# ----------------------------------------------------------------------------
def conv_relu_pool(x_nhwc, w_oihw, b, kh, kw, pad, *, max_tile=2048):
    """Fused conv(kh x kw, pad) + bias + ReLU + 2x2 max-pool on NHWC input."""
    n, _, _, c_in = x_nhwc.shape
    c_out = w_oihw.shape[0]
    k = c_in * kh * kw

    slabs, hp_, wp_ = _im2col_pool4(x_nhwc.astype(jnp.bfloat16), kh, kw, pad)
    m = n * hp_ * wp_
    tm, mp = _row_tiling(m, max_tile, min_blocks=_num_tensorcores_per_chip())
    if mp != m:
        slabs = jnp.pad(slabs, ((0, 0), (0, mp - m), (0, 0)))

    # Weights (K, C_out) padded to 128 lanes -> lane-dense output stores.
    wmat = jnp.zeros((k, LANES), jnp.bfloat16).at[:, :c_out].set(
        w_oihw.reshape(c_out, k).T.astype(jnp.bfloat16))
    bmat = jnp.zeros((1, LANES), jnp.float32).at[:, :c_out].set(
        b.reshape(1, c_out).astype(jnp.float32))

    cost = pl.CostEstimate(
        flops=2 * 4 * mp * k * LANES,
        transcendentals=0,
        bytes_accessed=int(slabs.size) * 2 + k * LANES * 2 + LANES * 4
        + mp * LANES * 4)

    out = pl.pallas_call(
        _conv_relu_pool_kernel,
        out_shape=jax.ShapeDtypeStruct((mp, LANES), jnp.float32),
        grid=(mp // tm,),
        in_specs=[
            pl.BlockSpec((4, tm, k), lambda i: (0, i, 0)),
            pl.BlockSpec((k, LANES), lambda i: (0, 0)),
            pl.BlockSpec((1, LANES), lambda i: (0, 0)),
        ],
        out_specs=pl.BlockSpec((tm, LANES), lambda i: (i, 0)),
        compiler_params=pltpu.CompilerParams(dimension_semantics=("parallel",)),
        cost_estimate=cost,
    )(slabs, wmat, bmat)
    return out[:m, :c_out].reshape(n, hp_, wp_, c_out)


def fc_stack_log_softmax(flat, fw1, fb1, fw2, fb2, fw3, fb3, *,
                         num_classes=10, max_tile=2048):
    """Fused fc1+ReLU+fc2+ReLU+fc3+log_softmax.  Weight out-dims padded to
    128 lanes (120/84/10 -> 128); padded columns are zero so they stay exactly
    zero through the ReLUs and are masked out of the softmax."""
    n, k = flat.shape

    def pad_w(w_t, rows):
        buf = jnp.zeros((rows, LANES), jnp.bfloat16)
        return buf.at[:w_t.shape[0], :w_t.shape[1]].set(
            w_t.astype(jnp.bfloat16))

    def pad_b(b_):
        return jnp.zeros((1, LANES), jnp.float32).at[0, :b_.shape[0]].set(
            b_.astype(jnp.float32))

    w1 = pad_w(fw1.T, k)          # (400, 128)
    w2 = pad_w(fw2.T, LANES)      # (128, 128)
    w3 = pad_w(fw3.T, LANES)      # (128, 128)
    b1, b2, b3 = pad_b(fb1), pad_b(fb2), pad_b(fb3)

    tm, mp = _row_tiling(n, max_tile, min_blocks=_num_tensorcores_per_chip())
    xin = flat.astype(jnp.bfloat16)
    if mp != n:
        xin = jnp.pad(xin, ((0, mp - n), (0, 0)))

    cost = pl.CostEstimate(
        flops=2 * mp * (k * LANES + 2 * LANES * LANES),
        transcendentals=mp * (LANES + 2),
        bytes_accessed=mp * k * 2 + (k + 2 * LANES) * LANES * 2
        + 3 * LANES * 4 + mp * LANES * 4)

    kernel = functools.partial(_fc_fused_kernel, num_classes=num_classes)
    out = pl.pallas_call(
        kernel,
        out_shape=jax.ShapeDtypeStruct((mp, LANES), jnp.float32),
        grid=(mp // tm,),
        in_specs=[
            pl.BlockSpec((tm, k), lambda i: (i, 0)),
            pl.BlockSpec((k, LANES), lambda i: (0, 0)),
            pl.BlockSpec((1, LANES), lambda i: (0, 0)),
            pl.BlockSpec((LANES, LANES), lambda i: (0, 0)),
            pl.BlockSpec((1, LANES), lambda i: (0, 0)),
            pl.BlockSpec((LANES, LANES), lambda i: (0, 0)),
            pl.BlockSpec((1, LANES), lambda i: (0, 0)),
        ],
        out_specs=pl.BlockSpec((tm, LANES), lambda i: (i, 0)),
        compiler_params=pltpu.CompilerParams(dimension_semantics=("parallel",)),
        cost_estimate=cost,
    )(xin, w1, b1, w2, b2, w3, b3)
    return out[:n, :num_classes]


# ----------------------------------------------------------------------------
# Parameter init and forward
# ----------------------------------------------------------------------------
def init_params(key):
    ks = jax.random.split(key, 10)

    def w(k, shape, scale):
        return jax.random.normal(k, shape, dtype=jnp.float32) * scale

    return (
        w(ks[0], (6, 1, 3, 3), 0.2), w(ks[1], (6,), 0.1),       # conv1
        w(ks[2], (16, 6, 5, 5), 0.1), w(ks[3], (16,), 0.1),     # conv2
        w(ks[4], (120, 400), 0.1), w(ks[5], (120,), 0.1),       # fc1
        w(ks[6], (84, 120), 0.1), w(ks[7], (84,), 0.1),         # fc2
        w(ks[8], (10, 84), 0.3), w(ks[9], (10,), 0.1),          # fc3
    )


def watermarked_forward(x_nchw, params):
    (w1, b1, w2, b2, fw1, fb1, fw2, fb2, fw3, fb3) = params
    n = x_nchw.shape[0]
    x = jnp.transpose(x_nchw, (0, 2, 3, 1))                 # NCHW -> NHWC

    # conv1 (1->6, 3x3, pad 1) + ReLU + 2x2 pool -> (n, 14, 14, 6)
    y = conv_relu_pool(x, w1, b1, 3, 3, 1, max_tile=4096)
    # conv2 (6->16, 5x5, no pad) + ReLU + 2x2 pool -> (n, 5, 5, 16)
    y = conv_relu_pool(y, w2, b2, 5, 5, 0, max_tile=2048)

    # dropout1 / dropout2: identity (eval mode)
    # Flatten straight from NHWC (no transpose); permute fc1's columns from
    # PyTorch's (c, h, w) flatten order to our (h, w, c) order instead.
    hp_, wp_, c = y.shape[1], y.shape[2], y.shape[3]
    flat = y.reshape(n, hp_ * wp_ * c)                       # (n, 400)
    fw1_hwc = fw1.reshape(fw1.shape[0], c, hp_, wp_).transpose(
        0, 2, 3, 1).reshape(fw1.shape[0], hp_ * wp_ * c)

    # fc1 -> ReLU -> fc2 -> ReLU -> fc3 -> log_softmax, fused
    return fc_stack_log_softmax(flat, fw1_hwc, fb1, fw2, fb2, fw3, fb3)


# ----------------------------------------------------------------------------
# Pure-JAX reference (independent path: XLA conv / reduce_window, all f32)
# ----------------------------------------------------------------------------
def reference_forward(x, params):
    (w1, b1, w2, b2, fw1, fb1, fw2, fb2, fw3, fb3) = params
    dn = ("NCHW", "OIHW", "NCHW")
    y = jax.lax.conv_general_dilated(
        x, w1, (1, 1), ((1, 1), (1, 1)), dimension_numbers=dn)
    y = jax.nn.relu(y + b1[None, :, None, None])
    y = jax.lax.reduce_window(y, -jnp.inf, jax.lax.max,
                              (1, 1, 2, 2), (1, 1, 2, 2), "VALID")
    y = jax.lax.conv_general_dilated(
        y, w2, (1, 1), "VALID", dimension_numbers=dn)
    y = jax.nn.relu(y + b2[None, :, None, None])
    y = jax.lax.reduce_window(y, -jnp.inf, jax.lax.max,
                              (1, 1, 2, 2), (1, 1, 2, 2), "VALID")
    y = y.reshape(y.shape[0], -1)
    y = jax.nn.relu(jnp.dot(y, fw1.T) + fb1)
    y = jax.nn.relu(jnp.dot(y, fw2.T) + fb2)
    y = jnp.dot(y, fw3.T) + fb3
    return jax.nn.log_softmax(y, axis=1)


if __name__ == "__main__":
    key = jax.random.PRNGKey(0)
    kx, kp = jax.random.split(key)
    # fc1 in_features=400 implies the canonical 28x28 single-channel input.
    x = jax.random.normal(kx, (2, 1, 28, 28), dtype=jnp.float32)
    params = init_params(kp)

    fwd = jax.jit(watermarked_forward)
    out = jax.block_until_ready(fwd(x, params))
    ref = jax.block_until_ready(reference_forward(x, params))

    assert out.shape == (2, 10), out.shape
    max_err = float(jnp.max(jnp.abs(out - ref)))
    assert jnp.allclose(out, ref, atol=3e-2, rtol=3e-2), (
        "mismatch vs reference", max_err)
    print("KERNEL_OK")
</pallas_src>

<mosaic_0001>
module attributes {stable_mosaic.version = 11 : i64} {
  func.func @_conv_relu_pool_kernel(%arg0: i32, %arg1: memref<4x400x9xbf16, #tpu.memory_space<vmem>>, %arg2: memref<9x128xbf16, #tpu.memory_space<vmem>>, %arg3: memref<1x128xf32, #tpu.memory_space<vmem>>, %arg4: memref<400x128xf32, #tpu.memory_space<vmem>>) attributes {dimension_semantics = [#tpu.dimension_semantics<parallel>], iteration_bounds = array<i64: 1>, scalar_prefetch = 0 : i64, scratch_operands = 0 : i64, tpu.core_type = #tpu.core_type<tc>, window_params = [{transform_indices = @transform_0, window_bounds = array<i64: 4, 400, 9>}, {pipeline_mode = #tpu.pipeline_mode<synchronous>, transform_indices = @transform_1, window_bounds = array<i64: 9, 128>}, {pipeline_mode = #tpu.pipeline_mode<synchronous>, transform_indices = @transform_2, window_bounds = array<i64: 1, 128>}, {transform_indices = @transform_3, window_bounds = array<i64: 400, 128>}]} {
    %c0 = arith.constant 0 : index
    %c0_0 = arith.constant 0 : index
    %c0_1 = arith.constant 0 : index
    %0 = vector.load %arg1[%c0, %c0_0, %c0_1] : memref<4x400x9xbf16, #tpu.memory_space<vmem>>, vector<4x400x9xbf16>
    %c0_2 = arith.constant 0 : index
    %c0_3 = arith.constant 0 : index
    %1 = vector.load %arg2[%c0_2, %c0_3] : memref<9x128xbf16, #tpu.memory_space<vmem>>, vector<9x128xbf16>
    %c0_4 = arith.constant 0 : index
    %c0_5 = arith.constant 0 : index
    %2 = vector.load %arg3[%c0_4, %c0_5] : memref<1x128xf32, #tpu.memory_space<vmem>>, vector<1x128xf32>
    %3 = vector.shape_cast %0 : vector<4x400x9xbf16> to vector<1600x9xbf16>
    %cst = arith.constant dense<0.000000e+00> : vector<1600x128xf32>
    %4 = tpu.matmul %3, %1, %cst {dimension_numbers = #tpu.dot_dimension_numbers<[1], [0], [0], [1], [0, 0, 1, 1], [], []>} : vector<1600x9xbf16>, vector<9x128xbf16>, vector<1600x128xf32> -> vector<1600x128xf32>
    %5 = vector.shape_cast %4 : vector<1600x128xf32> to vector<4x400x128xf32>
    %6 = vector.shape_cast %2 : vector<1x128xf32> to vector<1x1x128xf32>
    %7 = vector.broadcast %6 : vector<1x1x128xf32> to vector<4x400x128xf32>
    %8 = arith.addf %5, %7 : vector<4x400x128xf32>
    %cst_6 = arith.constant dense<0xFF800000> : vector<400x128xf32>
    %9 = vector.multi_reduction <maximumf>, %8, %cst_6 [0] : vector<4x400x128xf32> to vector<400x128xf32>
    %cst_7 = arith.constant 0.000000e+00 : f32
    %10 = vector.broadcast %cst_7 : f32 to vector<400x128xf32>
    %11 = arith.maximumf %9, %10 : vector<400x128xf32>
    %c0_8 = arith.constant 0 : index
    %c0_9 = arith.constant 0 : index
    %12 = vector.load %arg4[%c0_8, %c0_9] : memref<400x128xf32, #tpu.memory_space<vmem>>, vector<400x128xf32>
    tpu.vector_store %arg4[%c0_8, %c0_9], %11 {strides = array<i32>} : memref<400x128xf32, #tpu.memory_space<vmem>>, vector<400x128xf32>,
    return
  }
  func.func @transform_0(%arg0: i32) -> (i32, i32, i32) {
    %c0_i32 = arith.constant 0 : i32
    %c0_i32_0 = arith.constant 0 : i32
    %c0_i32_1 = arith.constant 0 : i32
    return %c0_i32, %arg0, %c0_i32_0 : i32, i32, i32
  }
  func.func @transform_1(%arg0: i32) -> (i32, i32) {
    %c0_i32 = arith.constant 0 : i32
    %c0_i32_0 = arith.constant 0 : i32
    %c0_i32_1 = arith.constant 0 : i32
    return %c0_i32, %c0_i32_0 : i32, i32
  }
  func.func @transform_2(%arg0: i32) -> (i32, i32) {
    %c0_i32 = arith.constant 0 : i32
    %c0_i32_0 = arith.constant 0 : i32
    %c0_i32_1 = arith.constant 0 : i32
    return %c0_i32, %c0_i32_0 : i32, i32
  }
  func.func @transform_3(%arg0: i32) -> (i32, i32) {
    %c0_i32 = arith.constant 0 : i32
    %c0_i32_0 = arith.constant 0 : i32
    return %arg0, %c0_i32 : i32, i32
  }
}

module attributes {stable_mosaic.version = 11 : i64} {
  func.func @_conv_relu_pool_kernel(%arg0: i32, %arg1: memref<4x64x150xbf16, #tpu.memory_space<vmem>>, %arg2: memref<150x128xbf16, #tpu.memory_space<vmem>>, %arg3: memref<1x128xf32, #tpu.memory_space<vmem>>, %arg4: memref<64x128xf32, #tpu.memory_space<vmem>>) attributes {dimension_semantics = [#tpu.dimension_semantics<parallel>], iteration_bounds = array<i64: 1>, scalar_prefetch = 0 : i64, scratch_operands = 0 : i64, tpu.core_type = #tpu.core_type<tc>, window_params = [{transform_indices = @transform_0, window_bounds = array<i64: 4, 64, 150>}, {pipeline_mode = #tpu.pipeline_mode<synchronous>, transform_indices = @transform_1, window_bounds = array<i64: 150, 128>}, {pipeline_mode = #tpu.pipeline_mode<synchronous>, transform_indices = @transform_2, window_bounds = array<i64: 1, 128>}, {transform_indices = @transform_3, window_bounds = array<i64: 64, 128>}]} {
    %c0 = arith.constant 0 : index
    %c0_0 = arith.constant 0 : index
    %c0_1 = arith.constant 0 : index
    %0 = vector.load %arg1[%c0, %c0_0, %c0_1] : memref<4x64x150xbf16, #tpu.memory_space<vmem>>, vector<4x64x150xbf16>
    %c0_2 = arith.constant 0 : index
    %c0_3 = arith.constant 0 : index
    %1 = vector.load %arg2[%c0_2, %c0_3] : memref<150x128xbf16, #tpu.memory_space<vmem>>, vector<150x128xbf16>
    %c0_4 = arith.constant 0 : index
    %c0_5 = arith.constant 0 : index
    %2 = vector.load %arg3[%c0_4, %c0_5] : memref<1x128xf32, #tpu.memory_space<vmem>>, vector<1x128xf32>
    %3 = vector.shape_cast %0 : vector<4x64x150xbf16> to vector<256x150xbf16>
    %cst = arith.constant dense<0.000000e+00> : vector<256x128xf32>
    %4 = tpu.matmul %3, %1, %cst {dimension_numbers = #tpu.dot_dimension_numbers<[1], [0], [0], [1], [0, 0, 1, 1], [], []>} : vector<256x150xbf16>, vector<150x128xbf16>, vector<256x128xf32> -> vector<256x128xf32>
    %5 = vector.shape_cast %4 : vector<256x128xf32> to vector<4x64x128xf32>
    %6 = vector.shape_cast %2 : vector<1x128xf32> to vector<1x1x128xf32>
    %7 = vector.broadcast %6 : vector<1x1x128xf32> to vector<4x64x128xf32>
    %8 = arith.addf %5, %7 : vector<4x64x128xf32>
    %cst_6 = arith.constant dense<0xFF800000> : vector<64x128xf32>
    %9 = vector.multi_reduction <maximumf>, %8, %cst_6 [0] : vector<4x64x128xf32> to vector<64x128xf32>
    %cst_7 = arith.constant 0.000000e+00 : f32
    %10 = vector.broadcast %cst_7 : f32 to vector<64x128xf32>
    %11 = arith.maximumf %9, %10 : vector<64x128xf32>
    %c0_8 = arith.constant 0 : index
    %c0_9 = arith.constant 0 : index
    %12 = vector.load %arg4[%c0_8, %c0_9] : memref<64x128xf32, #tpu.memory_space<vmem>>, vector<64x128xf32>
    tpu.vector_store %arg4[%c0_8, %c0_9], %11 {strides = array<i32>} : memref<64x128xf32, #tpu.memory_space<vmem>>, vector<64x128xf32>,
    return
  }
  func.func @transform_0(%arg0: i32) -> (i32, i32, i32) {
    %c0_i32 = arith.constant 0 : i32
    %c0_i32_0 = arith.constant 0 : i32
    %c0_i32_1 = arith.constant 0 : i32
    return %c0_i32, %arg0, %c0_i32_0 : i32, i32, i32
  }
  func.func @transform_1(%arg0: i32) -> (i32, i32) {
    %c0_i32 = arith.constant 0 : i32
    %c0_i32_0 = arith.constant 0 : i32
    %c0_i32_1 = arith.constant 0 : i32
    return %c0_i32, %c0_i32_0 : i32, i32
  }
  func.func @transform_2(%arg0: i32) -> (i32, i32) {
    %c0_i32 = arith.constant 0 : i32
    %c0_i32_0 = arith.constant 0 : i32
    %c0_i32_1 = arith.constant 0 : i32
    return %c0_i32, %c0_i32_0 : i32, i32
  }
  func.func @transform_3(%arg0: i32) -> (i32, i32) {
    %c0_i32 = arith.constant 0 : i32
    %c0_i32_0 = arith.constant 0 : i32
    return %arg0, %c0_i32 : i32, i32
  }
}

module attributes {stable_mosaic.version = 11 : i64} {
  func.func @_fc_fused_kernel(%arg0: i32, %arg1: memref<16x400xbf16, #tpu.memory_space<vmem>>, %arg2: memref<400x128xbf16, #tpu.memory_space<vmem>>, %arg3: memref<1x128xf32, #tpu.memory_space<vmem>>, %arg4: memref<128x128xbf16, #tpu.memory_space<vmem>>, %arg5: memref<1x128xf32, #tpu.memory_space<vmem>>, %arg6: memref<128x128xbf16, #tpu.memory_space<vmem>>, %arg7: memref<1x128xf32, #tpu.memory_space<vmem>>, %arg8: memref<16x128xf32, #tpu.memory_space<vmem>>) attributes {dimension_semantics = [#tpu.dimension_semantics<parallel>], iteration_bounds = array<i64: 1>, scalar_prefetch = 0 : i64, scratch_operands = 0 : i64, tpu.core_type = #tpu.core_type<tc>, window_params = [{transform_indices = @transform_0, window_bounds = array<i64: 16, 400>}, {pipeline_mode = #tpu.pipeline_mode<synchronous>, transform_indices = @transform_1, window_bounds = array<i64: 400, 128>}, {pipeline_mode = #tpu.pipeline_mode<synchronous>, transform_indices = @transform_2, window_bounds = array<i64: 1, 128>}, {pipeline_mode = #tpu.pipeline_mode<synchronous>, transform_indices = @transform_3, window_bounds = array<i64: 128, 128>}, {pipeline_mode = #tpu.pipeline_mode<synchronous>, transform_indices = @transform_4, window_bounds = array<i64: 1, 128>}, {pipeline_mode = #tpu.pipeline_mode<synchronous>, transform_indices = @transform_5, window_bounds = array<i64: 128, 128>}, {pipeline_mode = #tpu.pipeline_mode<synchronous>, transform_indices = @transform_6, window_bounds = array<i64: 1, 128>}, {transform_indices = @transform_7, window_bounds = array<i64: 16, 128>}]} {
    %c0 = arith.constant 0 : index
    %c0_0 = arith.constant 0 : index
    %0 = vector.load %arg1[%c0, %c0_0] : memref<16x400xbf16, #tpu.memory_space<vmem>>, vector<16x400xbf16>
    %c0_1 = arith.constant 0 : index
    %c0_2 = arith.constant 0 : index
    %1 = vector.load %arg2[%c0_1, %c0_2] : memref<400x128xbf16, #tpu.memory_space<vmem>>, vector<400x128xbf16>
    %cst = arith.constant dense<0.000000e+00> : vector<16x128xf32>
    %2 = tpu.matmul %0, %1, %cst {dimension_numbers = #tpu.dot_dimension_numbers<[1], [0], [0], [1], [0, 0, 1, 1], [], []>} : vector<16x400xbf16>, vector<400x128xbf16>, vector<16x128xf32> -> vector<16x128xf32>
    %c0_3 = arith.constant 0 : index
    %c0_4 = arith.constant 0 : index
    %3 = vector.load %arg3[%c0_3, %c0_4] : memref<1x128xf32, #tpu.memory_space<vmem>>, vector<1x128xf32>
    %4 = vector.broadcast %3 : vector<1x128xf32> to vector<16x128xf32>
    %5 = arith.addf %2, %4 : vector<16x128xf32>
    %cst_5 = arith.constant 0.000000e+00 : f32
    %6 = vector.broadcast %cst_5 : f32 to vector<16x128xf32>
    %7 = arith.maximumf %5, %6 : vector<16x128xf32>
    %8 = arith.truncf %7 : vector<16x128xf32> to vector<16x128xbf16>
    %c0_6 = arith.constant 0 : index
    %c0_7 = arith.constant 0 : index
    %9 = vector.load %arg4[%c0_6, %c0_7] : memref<128x128xbf16, #tpu.memory_space<vmem>>, vector<128x128xbf16>
    %cst_8 = arith.constant dense<0.000000e+00> : vector<16x128xf32>
    %10 = tpu.matmul %8, %9, %cst_8 {dimension_numbers = #tpu.dot_dimension_numbers<[1], [0], [0], [1], [0, 0, 1, 1], [], []>} : vector<16x128xbf16>, vector<128x128xbf16>, vector<16x128xf32> -> vector<16x128xf32>
    %c0_9 = arith.constant 0 : index
    %c0_10 = arith.constant 0 : index
    %11 = vector.load %arg5[%c0_9, %c0_10] : memref<1x128xf32, #tpu.memory_space<vmem>>, vector<1x128xf32>
    %12 = vector.broadcast %11 : vector<1x128xf32> to vector<16x128xf32>
    %13 = arith.addf %10, %12 : vector<16x128xf32>
    %cst_11 = arith.constant 0.000000e+00 : f32
    %14 = vector.broadcast %cst_11 : f32 to vector<16x128xf32>
    %15 = arith.maximumf %13, %14 : vector<16x128xf32>
    %16 = arith.truncf %15 : vector<16x128xf32> to vector<16x128xbf16>
    %c0_12 = arith.constant 0 : index
    %c0_13 = arith.constant 0 : index
    %17 = vector.load %arg6[%c0_12, %c0_13] : memref<128x128xbf16, #tpu.memory_space<vmem>>, vector<128x128xbf16>
    %cst_14 = arith.constant dense<0.000000e+00> : vector<16x128xf32>
    %18 = tpu.matmul %16, %17, %cst_14 {dimension_numbers = #tpu.dot_dimension_numbers<[1], [0], [0], [1], [0, 0, 1, 1], [], []>} : vector<16x128xbf16>, vector<128x128xbf16>, vector<16x128xf32> -> vector<16x128xf32>
    %c0_15 = arith.constant 0 : index
    %c0_16 = arith.constant 0 : index
    %19 = vector.load %arg7[%c0_15, %c0_16] : memref<1x128xf32, #tpu.memory_space<vmem>>, vector<1x128xf32>
    %20 = vector.broadcast %19 : vector<1x128xf32> to vector<16x128xf32>
    %21 = arith.addf %18, %20 : vector<16x128xf32>
    %22 = tpu.iota {dimensions = array<i32: 1>} : vector<16x128xi32>
    %c10_i32 = arith.constant 10 : i32
    %23 = vector.broadcast %c10_i32 : i32 to vector<16x128xi32>
    %24 = arith.cmpi slt, %22, %23 : vector<16x128xi32>
    %cst_17 = arith.constant -1.000000e+30 : f32
    %25 = vector.broadcast %cst_17 : f32 to vector<16x128xf32>
    %26 = arith.select %24, %21, %25 : vector<16x128xi1>, vector<16x128xf32>
    %cst_18 = arith.constant dense<0xFF800000> : vector<16xf32>
    %27 = vector.multi_reduction <maximumf>, %26, %cst_18 [1] : vector<16x128xf32> to vector<16xf32>
    %28 = vector.shape_cast %27 : vector<16xf32> to vector<16x1xf32>
    %29 = vector.broadcast %28 : vector<16x1xf32> to vector<16x128xf32>
    %30 = arith.subf %26, %29 : vector<16x128xf32>
    %31 = math.exp %30 : vector<16x128xf32>
    %cst_19 = arith.constant dense<0.000000e+00> : vector<16xf32>
    %32 = vector.multi_reduction <add>, %31, %cst_19 [1] : vector<16x128xf32> to vector<16xf32>
    %33 = vector.shape_cast %32 : vector<16xf32> to vector<16x1xf32>
    %34 = math.log %33 : vector<16x1xf32>
    %35 = vector.broadcast %34 : vector<16x1xf32> to vector<16x128xf32>
    %36 = arith.subf %30, %35 : vector<16x128xf32>
    %c0_20 = arith.constant 0 : index
    %c0_21 = arith.constant 0 : index
    %37 = vector.load %arg8[%c0_20, %c0_21] : memref<16x128xf32, #tpu.memory_space<vmem>>, vector<16x128xf32>
    tpu.vector_store %arg8[%c0_20, %c0_21], %36 {strides = array<i32>} : memref<16x128xf32, #tpu.memory_space<vmem>>, vector<16x128xf32>,
    return
  }
  func.func @transform_0(%arg0: i32) -> (i32, i32) {
    %c0_i32 = arith.constant 0 : i32
    %c0_i32_0 = arith.constant 0 : i32
    return %arg0, %c0_i32 : i32, i32
  }
  func.func @transform_1(%arg0: i32) -> (i32, i32) {
    %c0_i32 = arith.constant 0 : i32
    %c0_i32_0 = arith.constant 0 : i32
    %c0_i32_1 = arith.constant 0 : i32
    return %c0_i32, %c0_i32_0 : i32, i32
  }
  func.func @transform_2(%arg0: i32) -> (i32, i32) {
    %c0_i32 = arith.constant 0 : i32
    %c0_i32_0 = arith.constant 0 : i32
    %c0_i32_1 = arith.constant 0 : i32
    return %c0_i32, %c0_i32_0 : i32, i32
  }
  func.func @transform_3(%arg0: i32) -> (i32, i32) {
    %c0_i32 = arith.constant 0 : i32
    %c0_i32_0 = arith.constant 0 : i32
    %c0_i32_1 = arith.constant 0 : i32
    return %c0_i32, %c0_i32_0 : i32, i32
  }
  func.func @transform_4(%arg0: i32) -> (i32, i32) {
    %c0_i32 = arith.constant 0 : i32
    %c0_i32_0 = arith.constant 0 : i32
    %c0_i32_1 = arith.constant 0 : i32
    return %c0_i32, %c0_i32_0 : i32, i32
  }
  func.func @transform_5(%arg0: i32) -> (i32, i32) {
    %c0_i32 = arith.constant 0 : i32
    %c0_i32_0 = arith.constant 0 : i32
    %c0_i32_1 = arith.constant 0 : i32
    return %c0_i32, %c0_i32_0 : i32, i32
  }
  func.func @transform_6(%arg0: i32) -> (i32, i32) {
    %c0_i32 = arith.constant 0 : i32
    %c0_i32_0 = arith.constant 0 : i32
    %c0_i32_1 = arith.constant 0 : i32
    return %c0_i32, %c0_i32_0 : i32, i32
  }
  func.func @transform_7(%arg0: i32) -> (i32, i32) {
    %c0_i32 = arith.constant 0 : i32
    %c0_i32_0 = arith.constant 0 : i32
    return %arg0, %c0_i32 : i32, i32
  }
}

</mosaic_0001>

<llo_original>
// kernel: watermarked_forward.3
$region0: #{watermarked_forward.3}
  #allocation0 [shape = 'u32[]', space=smem, size = 0x4, offset = 0x4, fixed_abs, tag = 'smem constant byte address 0x4 - core index']
  #allocation1 [shape = 'u32[144,128]{1,0:T(1,128)}', space=vmem, size = 0x12000, scoped, tag = 'internal scratch']
  %s0 = inlined_call_operand.vmem [shape: bf16[4,400,9], index: 0, kind: input, shape index: {}]
  %s1 = inlined_call_operand.vmem [shape: bf16[9,128], index: 1, kind: input, shape index: {}]
  %s2 = inlined_call_operand.vmem [shape: f32[1,128], index: 2, kind: input, shape index: {}]
  %s3 = inlined_call_operand.vmem [shape: f32[400,128], index: 3, kind: output, shape index: {}]
  %s4 = sld [smem:[#allocation0]]
  $region22: #{watermarked_forward.3} parent=0
    _
  %s6 = ssub.s32 1, %s4
  %s7 = scalar_select 0, %s6, %s4
  // Predicated region
  $region2: #{watermarked_forward.3} parent=0 // pred_check
    _
  $region3: #{watermarked_forward.3} parent=0 // pred_check_branch
    %9 = sbr.rel (0) target = $region5
  $region4: #{watermarked_forward.3} parent=0 // pred_region
    _
  $region5: #{watermarked_forward.3} parent=0 // pred_fallthru
    _
  // Predicated region
  $region6: #{watermarked_forward.3} parent=0 // pred_check
    _
  $region7: #{watermarked_forward.3} parent=0 // pred_check_branch
    %11 = sbr.rel (0) target = $region9
  $region8: #{watermarked_forward.3} parent=0 // pred_region
    _
  $region9: #{watermarked_forward.3} parent=0 // pred_fallthru
    _
  // Predicated region
  $region10: #{watermarked_forward.3} parent=0 // pred_check
    _
  $region11: #{watermarked_forward.3} parent=0 // pred_check_branch
    %13 = sbr.rel (0) target = $region13
  $region12: #{watermarked_forward.3} parent=0 // pred_region
    _
  $region13: #{watermarked_forward.3} parent=0 // pred_fallthru
    _
  %v15 = vld [vmem:[%s0] sm:$0xf]
  %v16 = vld [vmem:[%s0 + $0x4] sm:$0xf]
  %v17 = vld [vmem:[%s0 + $0x8] sm:$0xf]
  %v18 = vld [vmem:[%s0 + $0xc] sm:$0xf]
  %v19 = vld [vmem:[%s0 + $0x10] sm:$0xf]
  %v20 = vld [vmem:[%s0 + $0x14] sm:$0xf]
  %v21 = vld [vmem:[%s0 + $0x18] sm:$0xf]
  %v22 = vld [vmem:[%s0 + $0x1c] sm:$0xf]
  %v23 = vld [vmem:[%s0 + $0x20] sm:$0xf]
  %v24 = vld [vmem:[%s0 + $0x24] sm:$0xf]
  %v25 = vld [vmem:[%s0 + $0x28] sm:$0xf]
  %v26 = vld [vmem:[%s0 + $0x2c] sm:$0xf]
  %v27 = vld [vmem:[%s0 + $0x30] sm:$0xf]
  %v28 = vld [vmem:[%s0 + $0x34] sm:$0xf]
  %v29 = vld [vmem:[%s0 + $0x38] sm:$0xf]
  %v30 = vld [vmem:[%s0 + $0x3c] sm:$0xf]
  %v31 = vld [vmem:[%s0 + $0x40] sm:$0xf]
  %v32 = vld [vmem:[%s0 + $0x44] sm:$0xf]
  %v33 = vld [vmem:[%s0 + $0x48] sm:$0xf]
  %v34 = vld [vmem:[%s0 + $0x4c] sm:$0xf]
  %v35 = vld [vmem:[%s0 + $0x50] sm:$0xf]
  %v36 = vld [vmem:[%s0 + $0x54] sm:$0xf]
  %v37 = vld [vmem:[%s0 + $0x58] sm:$0xf]
  %v38 = vld [vmem:[%s0 + $0x5c] sm:$0xf]
  %v39 = vld [vmem:[%s0 + $0x60] sm:$0xf]
  %v40 = vld [vmem:[%s0 + $0x64] sm:$0xf]
  %v41 = vld [vmem:[%s0 + $0x68] sm:$0xf]
  %v42 = vld [vmem:[%s0 + $0x6c] sm:$0xf]
  %v43 = vld [vmem:[%s0 + $0x70] sm:$0xf]
  %v44 = vld [vmem:[%s0 + $0x74] sm:$0xf]
  %v45 = vld [vmem:[%s0 + $0x78] sm:$0xf]
  %v46 = vld [vmem:[%s0 + $0x7c] sm:$0xf]
  %v47 = vld [vmem:[%s0 + $0x80] sm:$0xf]
  %v48 = vld [vmem:[%s0 + $0x84] sm:$0xf]
  %v49 = vld [vmem:[%s0 + $0x88] sm:$0xf]
  %v50 = vld [vmem:[%s0 + $0x8c] sm:$0xf]
  %v51 = vld [vmem:[%s0 + $0x90] sm:$0xf]
  %v52 = vld [vmem:[%s0 + $0x94] sm:$0xf]
  %v53 = vld [vmem:[%s0 + $0x98] sm:$0xf]
  %v54 = vld [vmem:[%s0 + $0x9c] sm:$0xf]
  %v55 = vld [vmem:[%s0 + $0xa0] sm:$0xf]
  %v56 = vld [vmem:[%s0 + $0xa4] sm:$0xf]
  %v57 = vld [vmem:[%s0 + $0xa8] sm:$0xf]
  %v58 = vld [vmem:[%s0 + $0xac] sm:$0xf]
  %v59 = vld [vmem:[%s0 + $0xb0] sm:$0xf]
  %v60 = vld [vmem:[%s0 + $0xb4] sm:$0xf]
  %v61 = vld [vmem:[%s0 + $0xb8] sm:$0xf]
  %v62 = vld [vmem:[%s0 + $0xbc] sm:$0xf]
  %v63 = vld [vmem:[%s0 + $0xc0] sm:$0xf]
  %v64 = vld [vmem:[%s0 + $0xc4] sm:$0xf]
  %v65 = vld [vmem:[%s0 + $0xc8] sm:$0xf]
  %v66 = vld [vmem:[%s0 + $0xcc] sm:$0xf]
  %v67 = vld [vmem:[%s0 + $0xd0] sm:$0xf]
  %v68 = vld [vmem:[%s0 + $0xd4] sm:$0xf]
  %v69 = vld [vmem:[%s0 + $0xd8] sm:$0xf]
  %v70 = vld [vmem:[%s0 + $0xdc] sm:$0xf]
  %v71 = vld [vmem:[%s0 + $0xe0] sm:$0xf]
  %v72 = vld [vmem:[%s0 + $0xe4] sm:$0xf]
  %v73 = vld [vmem:[%s0 + $0xe8] sm:$0xf]
  %v74 = vld [vmem:[%s0 + $0xec] sm:$0xf]
  %v75 = vld [vmem:[%s0 + $0xf0] sm:$0xf]
  %v76 = vld [vmem:[%s0 + $0xf4] sm:$0xf]
  %v77 = vld [vmem:[%s0 + $0xf8] sm:$0xf]
  %v78 = vld [vmem:[%s0 + $0xfc] sm:$0xf]
  %v79 = vld [vmem:[%s0 + $0x100] sm:$0xf]
  %v80 = vld [vmem:[%s0 + $0x104] sm:$0xf]
  %v81 = vld [vmem:[%s0 + $0x108] sm:$0xf]
  %v82 = vld [vmem:[%s0 + $0x10c] sm:$0xf]
  %v83 = vld [vmem:[%s0 + $0x110] sm:$0xf]
  %v84 = vld [vmem:[%s0 + $0x114] sm:$0xf]
  %v85 = vld [vmem:[%s0 + $0x118] sm:$0xf]
  %v86 = vld [vmem:[%s0 + $0x11c] sm:$0xf]
  %v87 = vld [vmem:[%s0 + $0x120] sm:$0xf]
  %v88 = vld [vmem:[%s0 + $0x124] sm:$0xf]
  %v89 = vld [vmem:[%s0 + $0x128] sm:$0xf]
  %v90 = vld [vmem:[%s0 + $0x12c] sm:$0xf]
  %v91 = vld [vmem:[%s0 + $0x130] sm:$0xf]
  %v92 = vld [vmem:[%s0 + $0x134] sm:$0xf]
  %v93 = vld [vmem:[%s0 + $0x138] sm:$0xf]
  %v94 = vld [vmem:[%s0 + $0x13c] sm:$0xf]
  %v95 = vld [vmem:[%s0 + $0x140] sm:$0xf]
  %v96 = vld [vmem:[%s0 + $0x144] sm:$0xf]
  %v97 = vld [vmem:[%s0 + $0x148] sm:$0xf]
  %v98 = vld [vmem:[%s0 + $0x14c] sm:$0xf]
  %v99 = vld [vmem:[%s0 + $0x150] sm:$0xf]
  %v100 = vld [vmem:[%s0 + $0x154] sm:$0xf]
  %v101 = vld [vmem:[%s0 + $0x158] sm:$0xf]
  %v102 = vld [vmem:[%s0 + $0x15c] sm:$0xf]
  %v103 = vld [vmem:[%s0 + $0x160] sm:$0xf]
  %v104 = vld [vmem:[%s0 + $0x164] sm:$0xf]
  %v105 = vld [vmem:[%s0 + $0x168] sm:$0xf]
  %v106 = vld [vmem:[%s0 + $0x16c] sm:$0xf]
  %v107 = vld [vmem:[%s0 + $0x170] sm:$0xf]
  %v108 = vld [vmem:[%s0 + $0x174] sm:$0xf]
  %v109 = vld [vmem:[%s0 + $0x178] sm:$0xf]
  %v110 = vld [vmem:[%s0 + $0x17c] sm:$0xf]
  %v111 = vld [vmem:[%s0 + $0x180] sm:$0xf]
  %v112 = vld [vmem:[%s0 + $0x184] sm:$0xf]
  %v113 = vld [vmem:[%s0 + $0x188] sm:$0xf]
  %v114 = vld [vmem:[%s0 + $0x18c] sm:$0xf]
  %v115 = vld [vmem:[%s0 + $0x190] sm:$0xf]
  %v116 = vld [vmem:[%s0 + $0x194] sm:$0xf]
  %v117 = vld [vmem:[%s0 + $0x198] sm:$0xf]
  %v118 = vld [vmem:[%s0 + $0x19c] sm:$0xf]
  %v119 = vld [vmem:[%s0 + $0x1a0] sm:$0xf]
  %v120 = vld [vmem:[%s0 + $0x1a4] sm:$0xf]
  %v121 = vld [vmem:[%s0 + $0x1a8] sm:$0xf]
  %v122 = vld [vmem:[%s0 + $0x1ac] sm:$0xf]
  %v123 = vld [vmem:[%s0 + $0x1b0] sm:$0xf]
  %v124 = vld [vmem:[%s0 + $0x1b4] sm:$0xf]
  %v125 = vld [vmem:[%s0 + $0x1b8] sm:$0xf]
  %v126 = vld [vmem:[%s0 + $0x1bc] sm:$0xf]
  %v127 = vld [vmem:[%s0 + $0x1c0] sm:$0xf]
  %v128 = vld [vmem:[%s0 + $0x1c4] sm:$0xf]
  %v129 = vld [vmem:[%s0 + $0x1c8] sm:$0xf]
  %v130 = vld [vmem:[%s0 + $0x1cc] sm:$0xf]
  %v131 = vld [vmem:[%s0 + $0x1d0] sm:$0xf]
  %v132 = vld [vmem:[%s0 + $0x1d4] sm:$0xf]
  %v133 = vld [vmem:[%s0 + $0x1d8] sm:$0xf]
  %v134 = vld [vmem:[%s0 + $0x1dc] sm:$0xf]
  %v135 = vld [vmem:[%s0 + $0x1e0] sm:$0xf]
  %v136 = vld [vmem:[%s0 + $0x1e4] sm:$0xf]
  %v137 = vld [vmem:[%s0 + $0x1e8] sm:$0xf]
  %v138 = vld [vmem:[%s0 + $0x1ec] sm:$0xf]
  %v139 = vld [vmem:[%s0 + $0x1f0] sm:$0xf]
  %v140 = vld [vmem:[%s0 + $0x1f4] sm:$0xf]
  %v141 = vld [vmem:[%s0 + $0x1f8] sm:$0xf]
  %v142 = vld [vmem:[%s0 + $0x1fc] sm:$0xf]
  %v143 = vld [vmem:[%s0 + $0x200] sm:$0xf]
  %v144 = vld [vmem:[%s0 + $0x204] sm:$0xf]
  %v145 = vld [vmem:[%s0 + $0x208] sm:$0xf]
  %v146 = vld [vmem:[%s0 + $0x20c] sm:$0xf]
  %v147 = vld [vmem:[%s0 + $0x210] sm:$0xf]
  %v148 = vld [vmem:[%s0 + $0x214] sm:$0xf]
  %v149 = vld [vmem:[%s0 + $0x218] sm:$0xf]
  %v150 = vld [vmem:[%s0 + $0x21c] sm:$0xf]
  %v151 = vld [vmem:[%s0 + $0x220] sm:$0xf]
  %v152 = vld [vmem:[%s0 + $0x224] sm:$0xf]
  %v153 = vld [vmem:[%s0 + $0x228] sm:$0xf]
  %v154 = vld [vmem:[%s0 + $0x22c] sm:$0xf]
  %v155 = vld [vmem:[%s0 + $0x230] sm:$0xf]
  %v156 = vld [vmem:[%s0 + $0x234] sm:$0xf]
  %v157 = vld [vmem:[%s0 + $0x238] sm:$0xf]
  %v158 = vld [vmem:[%s0 + $0x23c] sm:$0xf]
  %v159 = vld [vmem:[%s0 + $0x240] sm:$0xf]
  %v160 = vld [vmem:[%s0 + $0x244] sm:$0xf]
  %v161 = vld [vmem:[%s0 + $0x248] sm:$0xf]
  %v162 = vld [vmem:[%s0 + $0x24c] sm:$0xf]
  %v163 = vld [vmem:[%s0 + $0x250] sm:$0xf]
  %v164 = vld [vmem:[%s0 + $0x254] sm:$0xf]
  %v165 = vld [vmem:[%s0 + $0x258] sm:$0xf]
  %v166 = vld [vmem:[%s0 + $0x25c] sm:$0xf]
  %v167 = vld [vmem:[%s0 + $0x260] sm:$0xf]
  %v168 = vld [vmem:[%s0 + $0x264] sm:$0xf]
  %v169 = vld [vmem:[%s0 + $0x268] sm:$0xf]
  %v170 = vld [vmem:[%s0 + $0x26c] sm:$0xf]
  %v171 = vld [vmem:[%s0 + $0x270] sm:$0xf]
  %v172 = vld [vmem:[%s0 + $0x274] sm:$0xf]
  %v173 = vld [vmem:[%s0 + $0x278] sm:$0xf]
  %v174 = vld [vmem:[%s0 + $0x27c] sm:$0xf]
  %v175 = vld [vmem:[%s0 + $0x280] sm:$0xf]
  %v176 = vld [vmem:[%s0 + $0x284] sm:$0xf]
  %v177 = vld [vmem:[%s0 + $0x288] sm:$0xf]
  %v178 = vld [vmem:[%s0 + $0x28c] sm:$0xf]
  %v179 = vld [vmem:[%s0 + $0x290] sm:$0xf]
  %v180 = vld [vmem:[%s0 + $0x294] sm:$0xf]
  %v181 = vld [vmem:[%s0 + $0x298] sm:$0xf]
  %v182 = vld [vmem:[%s0 + $0x29c] sm:$0xf]
  %v183 = vld [vmem:[%s0 + $0x2a0] sm:$0xf]
  %v184 = vld [vmem:[%s0 + $0x2a4] sm:$0xf]
  %v185 = vld [vmem:[%s0 + $0x2a8] sm:$0xf]
  %v186 = vld [vmem:[%s0 + $0x2ac] sm:$0xf]
  %v187 = vld [vmem:[%s0 + $0x2b0] sm:$0xf]
  %v188 = vld [vmem:[%s0 + $0x2b4] sm:$0xf]
  %v189 = vld [vmem:[%s0 + $0x2b8] sm:$0xf]
  %v190 = vld [vmem:[%s0 + $0x2bc] sm:$0xf]
  %v191 = vld [vmem:[%s0 + $0x2c0] sm:$0xf]
  %v192 = vld [vmem:[%s0 + $0x2c4] sm:$0xf]
  %v193 = vld [vmem:[%s0 + $0x2c8] sm:$0xf]
  %v194 = vld [vmem:[%s0 + $0x2cc] sm:$0xf]
  %v195 = vld [vmem:[%s0 + $0x2d0] sm:$0xf]
  %v196 = vld [vmem:[%s0 + $0x2d4] sm:$0xf]
  %v197 = vld [vmem:[%s0 + $0x2d8] sm:$0xf]
  %v198 = vld [vmem:[%s0 + $0x2dc] sm:$0xf]
  %v199 = vld [vmem:[%s0 + $0x2e0] sm:$0xf]
  %v200 = vld [vmem:[%s0 + $0x2e4] sm:$0xf]
  %v201 = vld [vmem:[%s0 + $0x2e8] sm:$0xf]
  %v202 = vld [vmem:[%s0 + $0x2ec] sm:$0xf]
  %v203 = vld [vmem:[%s0 + $0x2f0] sm:$0xf]
  %v204 = vld [vmem:[%s0 + $0x2f4] sm:$0xf]
  %v205 = vld [vmem:[%s0 + $0x2f8] sm:$0xf]
  %v206 = vld [vmem:[%s0 + $0x2fc] sm:$0xf]
  %v207 = vld [vmem:[%s0 + $0x300] sm:$0xf]
  %v208 = vld [vmem:[%s0 + $0x304] sm:$0xf]
  %v209 = vld [vmem:[%s0 + $0x308] sm:$0xf]
  %v210 = vld [vmem:[%s0 + $0x30c] sm:$0xf]
  %v211 = vld [vmem:[%s0 + $0x310] sm:$0xf]
  %v212 = vld [vmem:[%s0 + $0x314] sm:$0xf]
  %v213 = vld [vmem:[%s0 + $0x318] sm:$0xf]
  %v214 = vld [vmem:[%s0 + $0x31c] sm:$0xf]
  %v215 = vld [vmem:[%s1] sm:$0xf]
  %v216 = vld [vmem:[%s1 + $0x4] sm:$0x1]
  %v217 = vld [vmem:[%s2] sm:$0x1]
  %v418 = vunpack.c.l.b16 %v15
  %v419 = vunpack.c.l.b16 %v16
  %v420 = vunpack.c.l.b16 %v17
  %v421 = vunpack.c.l.b16 %v18
  %v422 = vunpack.c.l.b16 %v19
  %v423 = vunpack.c.l.b16 %v20
  %v424 = vunpack.c.l.b16 %v21
  %v425 = vunpack.c.l.b16 %v22
  %v426 = vunpack.c.l.b16 %v23
  %v427 = vunpack.c.l.b16 %v24
  %v428 = vunpack.c.l.b16 %v25
  %v429 = vunpack.c.l.b16 %v26
  %v430 = vunpack.c.l.b16 %v27
  %v431 = vunpack.c.l.b16 %v28
  %v432 = vunpack.c.l.b16 %v29
  %v433 = vunpack.c.l.b16 %v30
  %v434 = vunpack.c.l.b16 %v31
  %v435 = vunpack.c.l.b16 %v32
  %v436 = vunpack.c.l.b16 %v33
  %v437 = vunpack.c.l.b16 %v34
  %v438 = vunpack.c.l.b16 %v35
  %v439 = vunpack.c.l.b16 %v36
  %v440 = vunpack.c.l.b16 %v37
  %v441 = vunpack.c.l.b16 %v38
  %v442 = vunpack.c.l.b16 %v39
  %v443 = vunpack.c.l.b16 %v40
  %v444 = vunpack.c.l.b16 %v41
  %v445 = vunpack.c.l.b16 %v42
  %v446 = vunpack.c.l.b16 %v43
  %v447 = vunpack.c.l.b16 %v44
  %v448 = vunpack.c.l.b16 %v45
  %v449 = vunpack.c.l.b16 %v46
  %v450 = vunpack.c.l.b16 %v47
  %v451 = vunpack.c.l.b16 %v48
  %v452 = vunpack.c.l.b16 %v49
  %v453 = vunpack.c.l.b16 %v50
  %v454 = vunpack.c.l.b16 %v51
  %v455 = vunpack.c.l.b16 %v52
  %v456 = vunpack.c.l.b16 %v53
  %v457 = vunpack.c.l.b16 %v54
  %v458 = vunpack.c.l.b16 %v55
  %v459 = vunpack.c.l.b16 %v56
  %v460 = vunpack.c.l.b16 %v57
  %v461 = vunpack.c.l.b16 %v58
  %v462 = vunpack.c.l.b16 %v59
  %v463 = vunpack.c.l.b16 %v60
  %v464 = vunpack.c.l.b16 %v61
  %v465 = vunpack.c.l.b16 %v62
  %v466 = vunpack.c.l.b16 %v63
  %v467 = vunpack.c.l.b16 %v64
  %v468 = vunpack.c.l.b16 %v65
  %v469 = vunpack.c.l.b16 %v66
  %v470 = vunpack.c.l.b16 %v67
  %v471 = vunpack.c.l.b16 %v68
  %v472 = vunpack.c.l.b16 %v69
  %v473 = vunpack.c.l.b16 %v70
  %v474 = vunpack.c.l.b16 %v71
  %v475 = vunpack.c.l.b16 %v72
  %v476 = vunpack.c.l.b16 %v73
  %v477 = vunpack.c.l.b16 %v74
  %v478 = vunpack.c.l.b16 %v75
  %v479 = vunpack.c.l.b16 %v76
  %v480 = vunpack.c.l.b16 %v77
  %v481 = vunpack.c.l.b16 %v78
  %v482 = vunpack.c.l.b16 %v79
  %v483 = vunpack.c.l.b16 %v80
  %v484 = vunpack.c.l.b16 %v81
  %v485 = vunpack.c.l.b16 %v82
  %v486 = vunpack.c.l.b16 %v83
  %v487 = vunpack.c.l.b16 %v84
  %v488 = vunpack.c.l.b16 %v85
  %v489 = vunpack.c.l.b16 %v86
  %v490 = vunpack.c.l.b16 %v87
  %v491 = vunpack.c.l.b16 %v88
  %v492 = vunpack.c.l.b16 %v89
  %v493 = vunpack.c.l.b16 %v90
  %v494 = vunpack.c.l.b16 %v91
  %v495 = vunpack.c.l.b16 %v92
  %v496 = vunpack.c.l.b16 %v93
  %v497 = vunpack.c.l.b16 %v94
  %v498 = vunpack.c.l.b16 %v95
  %v499 = vunpack.c.l.b16 %v96
  %v500 = vunpack.c.l.b16 %v97
  %v501 = vunpack.c.l.b16 %v98
  %v502 = vunpack.c.l.b16 %v99
  %v503 = vunpack.c.l.b16 %v100
  %v504 = vunpack.c.l.b16 %v101
  %v505 = vunpack.c.l.b16 %v102
  %v506 = vunpack.c.l.b16 %v103
  %v507 = vunpack.c.l.b16 %v104
  %v508 = vunpack.c.l.b16 %v105
  %v509 = vunpack.c.l.b16 %v106
  %v510 = vunpack.c.l.b16 %v107
  %v511 = vunpack.c.l.b16 %v108
  %v512 = vunpack.c.l.b16 %v109
  %v513 = vunpack.c.l.b16 %v110
  %v514 = vunpack.c.l.b16 %v111
  %v515 = vunpack.c.l.b16 %v112
  %v516 = vunpack.c.l.b16 %v113
  %v517 = vunpack.c.l.b16 %v114
  %v518 = vunpack.c.l.b16 %v115
  %v519 = vunpack.c.l.b16 %v116
  %v520 = vunpack.c.l.b16 %v117
  %v521 = vunpack.c.l.b16 %v118
  %v522 = vunpack.c.l.b16 %v119
  %v523 = vunpack.c.l.b16 %v120
  %v524 = vunpack.c.l.b16 %v121
  %v525 = vunpack.c.l.b16 %v122
  %v526 = vunpack.c.l.b16 %v123
  %v527 = vunpack.c.l.b16 %v124
  %v528 = vunpack.c.l.b16 %v125
  %v529 = vunpack.c.l.b16 %v126
  %v530 = vunpack.c.l.b16 %v127
  %v531 = vunpack.c.l.b16 %v128
  %v532 = vunpack.c.l.b16 %v129
  %v533 = vunpack.c.l.b16 %v130
  %v534 = vunpack.c.l.b16 %v131
  %v535 = vunpack.c.l.b16 %v132
  %v536 = vunpack.c.l.b16 %v133
  %v537 = vunpack.c.l.b16 %v134
  %v538 = vunpack.c.l.b16 %v135
  %v539 = vunpack.c.l.b16 %v136
  %v540 = vunpack.c.l.b16 %v137
  %v541 = vunpack.c.l.b16 %v138
  %v542 = vunpack.c.l.b16 %v139
  %v543 = vunpack.c.l.b16 %v140
  %v544 = vunpack.c.l.b16 %v141
  %v545 = vunpack.c.l.b16 %v142
  %v546 = vunpack.c.l.b16 %v143
  %v547 = vunpack.c.l.b16 %v144
  %v548 = vunpack.c.l.b16 %v145
  %v549 = vunpack.c.l.b16 %v146
  %v550 = vunpack.c.l.b16 %v147
  %v551 = vunpack.c.l.b16 %v148
  %v552 = vunpack.c.l.b16 %v149
  %v553 = vunpack.c.l.b16 %v150
  %v554 = vunpack.c.l.b16 %v151
  %v555 = vunpack.c.l.b16 %v152
  %v556 = vunpack.c.l.b16 %v153
  %v557 = vunpack.c.l.b16 %v154
  %v558 = vunpack.c.l.b16 %v155
  %v559 = vunpack.c.l.b16 %v156
  %v560 = vunpack.c.l.b16 %v157
  %v561 = vunpack.c.l.b16 %v158
  %v562 = vunpack.c.l.b16 %v159
  %v563 = vunpack.c.l.b16 %v160
  %v564 = vunpack.c.l.b16 %v161
  %v565 = vunpack.c.l.b16 %v162
  %v566 = vunpack.c.l.b16 %v163
  %v567 = vunpack.c.l.b16 %v164
  %v568 = vunpack.c.l.b16 %v165
  %v569 = vunpack.c.l.b16 %v166
  %v570 = vunpack.c.l.b16 %v167
  %v571 = vunpack.c.l.b16 %v168
  %v572 = vunpack.c.l.b16 %v169
  %v573 = vunpack.c.l.b16 %v170
  %v574 = vunpack.c.l.b16 %v171
  %v575 = vunpack.c.l.b16 %v172
  %v576 = vunpack.c.l.b16 %v173
  %v577 = vunpack.c.l.b16 %v174
  %v578 = vunpack.c.l.b16 %v175
  %v579 = vunpack.c.l.b16 %v176
  %v580 = vunpack.c.l.b16 %v177
  %v581 = vunpack.c.l.b16 %v178
  %v582 = vunpack.c.l.b16 %v179
  %v583 = vunpack.c.l.b16 %v180
  %v584 = vunpack.c.l.b16 %v181
  %v585 = vunpack.c.l.b16 %v182
  %v586 = vunpack.c.l.b16 %v183
  %v587 = vunpack.c.l.b16 %v184
  %v588 = vunpack.c.l.b16 %v185
  %v589 = vunpack.c.l.b16 %v186
  %v590 = vunpack.c.l.b16 %v187
  %v591 = vunpack.c.l.b16 %v188
  %v592 = vunpack.c.l.b16 %v189
  %v593 = vunpack.c.l.b16 %v190
  %v594 = vunpack.c.l.b16 %v191
  %v595 = vunpack.c.l.b16 %v192
  %v596 = vunpack.c.l.b16 %v193
  %v597 = vunpack.c.l.b16 %v194
  %v598 = vunpack.c.l.b16 %v195
  %v599 = vunpack.c.l.b16 %v196
  %v600 = vunpack.c.l.b16 %v197
  %v601 = vunpack.c.l.b16 %v198
  %v602 = vunpack.c.l.b16 %v199
  %v603 = vunpack.c.l.b16 %v200
  %v604 = vunpack.c.l.b16 %v201
  %v605 = vunpack.c.l.b16 %v202
  %v606 = vunpack.c.l.b16 %v203
  %v607 = vunpack.c.l.b16 %v204
  %v608 = vunpack.c.l.b16 %v205
  %v609 = vunpack.c.l.b16 %v206
  %v610 = vunpack.c.l.b16 %v207
  %v611 = vunpack.c.l.b16 %v208
  %v612 = vunpack.c.l.b16 %v209
  %v613 = vunpack.c.l.b16 %v210
  %v614 = vunpack.c.l.b16 %v211
  %v615 = vunpack.c.l.b16 %v212
  %v616 = vunpack.c.l.b16 %v213
  %v617 = vunpack.c.l.b16 %v214
  %v618 = vpack.c.b16 %v419, %v418
  %v619 = vpack.c.b16 %v421, %v420
  %v620 = vpack.c.b16 %v423, %v422
  %v621 = vpack.c.b16 %v425, %v424
  %v622 = vpack.c.b16 %v427, %v426
  %v623 = vpack.c.b16 %v429, %v428
  %v624 = vpack.c.b16 %v431, %v430
  %v625 = vpack.c.b16 %v433, %v432
  %v626 = vpack.c.b16 %v435, %v434
  %v627 = vpack.c.b16 %v437, %v436
  %v628 = vpack.c.b16 %v439, %v438
  %v629 = vpack.c.b16 %v441, %v440
  %v630 = vpack.c.b16 %v443, %v442
  %v631 = vpack.c.b16 %v445, %v444
  %v632 = vpack.c.b16 %v447, %v446
  %v633 = vpack.c.b16 %v449, %v448
  %v634 = vpack.c.b16 %v451, %v450
  %v635 = vpack.c.b16 %v453, %v452
  %v636 = vpack.c.b16 %v455, %v454
  %v637 = vpack.c.b16 %v457, %v456
  %v638 = vpack.c.b16 %v459, %v458
  %v639 = vpack.c.b16 %v461, %v460
  %v640 = vpack.c.b16 %v463, %v462
  %v641 = vpack.c.b16 %v465, %v464
  %v642 = vpack.c.b16 %v467, %v466
  %v643 = vpack.c.b16 %v469, %v468
  %v644 = vpack.c.b16 %v471, %v470
  %v645 = vpack.c.b16 %v473, %v472
  %v646 = vpack.c.b16 %v475, %v474
  %v647 = vpack.c.b16 %v477, %v476
  %v648 = vpack.c.b16 %v479, %v478
  %v649 = vpack.c.b16 %v481, %v480
  %v650 = vpack.c.b16 %v483, %v482
  %v651 = vpack.c.b16 %v485, %v484
  %v652 = vpack.c.b16 %v487, %v486
  %v653 = vpack.c.b16 %v489, %v488
  %v654 = vpack.c.b16 %v491, %v490
  %v655 = vpack.c.b16 %v493, %v492
  %v656 = vpack.c.b16 %v495, %v494
  %v657 = vpack.c.b16 %v497, %v496
  %v658 = vpack.c.b16 %v499, %v498
  %v659 = vpack.c.b16 %v501, %v500
  %v660 = vpack.c.b16 %v503, %v502
  %v661 = vpack.c.b16 %v505, %v504
  %v662 = vpack.c.b16 %v507, %v506
  %v663 = vpack.c.b16 %v509, %v508
  %v664 = vpack.c.b16 %v511, %v510
  %v665 = vpack.c.b16 %v513, %v512
  %v666 = vpack.c.b16 %v515, %v514
  %v667 = vpack.c.b16 %v517, %v516
  %v668 = vpack.c.b16 %v519, %v518
  %v669 = vpack.c.b16 %v521, %v520
  %v670 = vpack.c.b16 %v523, %v522
  %v671 = vpack.c.b16 %v525, %v524
  %v672 = vpack.c.b16 %v527, %v526
  %v673 = vpack.c.b16 %v529, %v528
  %v674 = vpack.c.b16 %v531, %v530
  %v675 = vpack.c.b16 %v533, %v532
  %v676 = vpack.c.b16 %v535, %v534
  %v677 = vpack.c.b16 %v537, %v536
  %v678 = vpack.c.b16 %v539, %v538
  %v679 = vpack.c.b16 %v541, %v540
  %v680 = vpack.c.b16 %v543, %v542
  %v681 = vpack.c.b16 %v545, %v544
  %v682 = vpack.c.b16 %v547, %v546
  %v683 = vpack.c.b16 %v549, %v548
  %v684 = vpack.c.b16 %v551, %v550
  %v685 = vpack.c.b16 %v553, %v552
  %v686 = vpack.c.b16 %v555, %v554
  %v687 = vpack.c.b16 %v557, %v556
  %v688 = vpack.c.b16 %v559, %v558
  %v689 = vpack.c.b16 %v561, %v560
  %v690 = vpack.c.b16 %v563, %v562
  %v691 = vpack.c.b16 %v565, %v564
  %v692 = vpack.c.b16 %v567, %v566
  %v693 = vpack.c.b16 %v569, %v568
  %v694 = vpack.c.b16 %v571, %v570
  %v695 = vpack.c.b16 %v573, %v572
  %v696 = vpack.c.b16 %v575, %v574
  %v697 = vpack.c.b16 %v577, %v576
  %v698 = vpack.c.b16 %v579, %v578
  %v699 = vpack.c.b16 %v581, %v580
  %v700 = vpack.c.b16 %v583, %v582
  %v701 = vpack.c.b16 %v585, %v584
  %v702 = vpack.c.b16 %v587, %v586
  %v703 = vpack.c.b16 %v589, %v588
  %v704 = vpack.c.b16 %v591, %v590
  %v705 = vpack.c.b16 %v593, %v592
  %v706 = vpack.c.b16 %v595, %v594
  %v707 = vpack.c.b16 %v597, %v596
  %v708 = vpack.c.b16 %v599, %v598
  %v709 = vpack.c.b16 %v601, %v600
  %v710 = vpack.c.b16 %v603, %v602
  %v711 = vpack.c.b16 %v605, %v604
  %v712 = vpack.c.b16 %v607, %v606
  %v713 = vpack.c.b16 %v609, %v608
  %v714 = vpack.c.b16 %v611, %v610
  %v715 = vpack.c.b16 %v613, %v612
  %v716 = vpack.c.b16 %v615, %v614
  %v717 = vpack.c.b16 %v617, %v616
  %v720 = vunpack.c.l.b16 %v215
  %v721 = vunpack.c.l.b16 %v216
  %v722 = vpack.c.b16 %v721, %v720
  %vm723 = vcmask 72704
  %v725 = vsel %vm723, %v618, 0
  %v728 = vsel %vm723, %v619, 0
  %v731 = vsel %vm723, %v620, 0
  %v734 = vsel %vm723, %v621, 0
  %v737 = vsel %vm723, %v622, 0
  %v740 = vsel %vm723, %v623, 0
  %v743 = vsel %vm723, %v624, 0
  %v746 = vsel %vm723, %v625, 0
  %v749 = vsel %vm723, %v626, 0
  %v752 = vsel %vm723, %v627, 0
  %v755 = vsel %vm723, %v628, 0
  %v758 = vsel %vm723, %v629, 0
  %v761 = vsel %vm723, %v630, 0
  %v764 = vsel %vm723, %v631, 0
  %v767 = vsel %vm723, %v632, 0
  %v770 = vsel %vm723, %v633, 0
  %v773 = vsel %vm723, %v634, 0
  %v776 = vsel %vm723, %v635, 0
  %v779 = vsel %vm723, %v636, 0
  %v782 = vsel %vm723, %v637, 0
  %v785 = vsel %vm723, %v638, 0
  %v788 = vsel %vm723, %v639, 0
  %v791 = vsel %vm723, %v640, 0
  %v794 = vsel %vm723, %v641, 0
  %v797 = vsel %vm723, %v642, 0
  %v800 = vsel %vm723, %v643, 0
  %v803 = vsel %vm723, %v644, 0
  %v806 = vsel %vm723, %v645, 0
  %v809 = vsel %vm723, %v646, 0
  %v812 = vsel %vm723, %v647, 0
  %v815 = vsel %vm723, %v648, 0
  %v818 = vsel %vm723, %v649, 0
  %v821 = vsel %vm723, %v650, 0
  %v824 = vsel %vm723, %v651, 0
  %v827 = vsel %vm723, %v652, 0
  %v830 = vsel %vm723, %v653, 0
  %v833 = vsel %vm723, %v654, 0
  %v836 = vsel %vm723, %v655, 0
  %v839 = vsel %vm723, %v656, 0
  %v842 = vsel %vm723, %v657, 0
  %v845 = vsel %vm723, %v658, 0
  %v848 = vsel %vm723, %v659, 0
  %v851 = vsel %vm723, %v660, 0
  %v854 = vsel %vm723, %v661, 0
  %v857 = vsel %vm723, %v662, 0
  %v860 = vsel %vm723, %v663, 0
  %v863 = vsel %vm723, %v664, 0
  %v866 = vsel %vm723, %v665, 0
  %v869 = vsel %vm723, %v666, 0
  %v872 = vsel %vm723, %v667, 0
  %v875 = vsel %vm723, %v668, 0
  %v878 = vsel %vm723, %v669, 0
  %v881 = vsel %vm723, %v670, 0
  %v884 = vsel %vm723, %v671, 0
  %v887 = vsel %vm723, %v672, 0
  %v890 = vsel %vm723, %v673, 0
  %v893 = vsel %vm723, %v674, 0
  %v896 = vsel %vm723, %v675, 0
  %v899 = vsel %vm723, %v676, 0
  %v902 = vsel %vm723, %v677, 0
  %v905 = vsel %vm723, %v678, 0
  %v908 = vsel %vm723, %v679, 0
  %v911 = vsel %vm723, %v680, 0
  %v914 = vsel %vm723, %v681, 0
  %v917 = vsel %vm723, %v682, 0
  %v920 = vsel %vm723, %v683, 0
  %v923 = vsel %vm723, %v684, 0
  %v926 = vsel %vm723, %v685, 0
  %v929 = vsel %vm723, %v686, 0
  %v932 = vsel %vm723, %v687, 0
  %v935 = vsel %vm723, %v688, 0
  %v938 = vsel %vm723, %v689, 0
  %v941 = vsel %vm723, %v690, 0
  %v944 = vsel %vm723, %v691, 0
  %v947 = vsel %vm723, %v692, 0
  %v950 = vsel %vm723, %v693, 0
  %v953 = vsel %vm723, %v694, 0
  %v956 = vsel %vm723, %v695, 0
  %v959 = vsel %vm723, %v696, 0
  %v962 = vsel %vm723, %v697, 0
  %v965 = vsel %vm723, %v698, 0
  %v968 = vsel %vm723, %v699, 0
  %v971 = vsel %vm723, %v700, 0
  %v974 = vsel %vm723, %v701, 0
  %v977 = vsel %vm723, %v702, 0
  %v980 = vsel %vm723, %v703, 0
  %v983 = vsel %vm723, %v704, 0
  %v986 = vsel %vm723, %v705, 0
  %v989 = vsel %vm723, %v706, 0
  %v992 = vsel %vm723, %v707, 0
  %v995 = vsel %vm723, %v708, 0
  %v998 = vsel %vm723, %v709, 0
  %v1001 = vsel %vm723, %v710, 0
  %v1004 = vsel %vm723, %v711, 0
  %v1007 = vsel %vm723, %v712, 0
  %v1010 = vsel %vm723, %v713, 0
  %v1013 = vsel %vm723, %v714, 0
  %v1016 = vsel %vm723, %v715, 0
  %v1019 = vsel %vm723, %v716, 0
  %v1022 = vsel %vm723, %v717, 0
  %vm1024 = vcmask 1043456
  %vm1025 = vcmask 1044480
  %v1026 = vsel %vm1024, 4294967295, 65535
  %v1027 = vsel %vm1025, %v1026, 0
  %v1029 = vand.u32 %v722, %v1027
  %1031 = vmatprep.subr.bf16.mxu0 0
  %1032 = vmatpush1.bf16.msra.mxu0 %v1029
  %1033 = vmatprep.subr.bf16.mxu0 0
  %1034 = vmatpush1.bf16.msra.mxu0 0
  %1035 = vmatprep.subr.bf16.mxu0 0
  %1036 = vmatpush1.bf16.msra.mxu0 0
  %1037 = vmatprep.subr.bf16.mxu0 0
  %1038 = vmatpush1.bf16.msra.mxu0 0
  %1039 = vmatprep.subr.bf16.mxu0 0
  %1040 = vmatpush1.bf16.msra.mxu0 0
  %1041 = vmatprep.subr.bf16.mxu0 0
  %1042 = vmatpush1.bf16.msra.mxu0 0
  %1043 = vmatprep.subr.bf16.mxu0 0
  %1044 = vmatpush1.bf16.msra.mxu0 0
  %1045 = vmatprep.subr.bf16.mxu0 0
  %1046 = vmatpush1.bf16.msra.mxu0 0
  %1047 = vmatprep.subr.bf16.mxu0 0
  %1048 = vmatpush1.bf16.msra.mxu0 0
  %1049 = vmatprep.subr.bf16.mxu0 0
  %1050 = vmatpush1.bf16.msra.mxu0 0
  %1051 = vmatprep.subr.bf16.mxu0 0
  %1052 = vmatpush1.bf16.msra.mxu0 0
  %1053 = vmatprep.subr.bf16.mxu0 0
  %1054 = vmatpush1.bf16.msra.mxu0 0
  %1055 = vmatprep.subr.bf16.mxu0 0
  %1056 = vmatpush1.bf16.msra.mxu0 0
  %1057 = vmatprep.subr.bf16.mxu0 0
  %1058 = vmatpush1.bf16.msra.mxu0 0
  %1059 = vmatprep.subr.bf16.mxu0 0
  %1060 = vmatpush1.bf16.msra.mxu0 0
  %1061 = vmatprep.subr.bf16.mxu0 0
  %1062 = vmatpush1.bf16.msra.mxu0 0
  %1063 = vmatprep.mubr.bf16.mxu0 0
  %1064 = vmatmul.mubr.bf16.gmra.mrb[0].mxu0 %v725
  %v1065 = vpop.f32.mrb[0].mxu0
  %v1066 = vadd.f32 0.0, %v1065
  %v1067 = vpop.f32.mrb[0].mxu0
  %v1068 = vpop.f32.mrb[0].mxu0
  %v1069 = vadd.f32 0.0, %v1068
  %v1070 = vpop.f32.mrb[0].mxu0
  %1071 = vmatprep.mubr.bf16.mxu0 0
  %1072 = vmatmul.mubr.bf16.gmra.mrb[0].mxu0 %v728
  %v1073 = vpop.f32.mrb[0].mxu0
  %v1074 = vadd.f32 0.0, %v1073
  %v1075 = vpop.f32.mrb[0].mxu0
  %v1076 = vpop.f32.mrb[0].mxu0
  %v1077 = vadd.f32 0.0, %v1076
  %v1078 = vpop.f32.mrb[0].mxu0
  %1079 = vmatprep.mubr.bf16.mxu0 0
  %1080 = vmatmul.mubr.bf16.gmra.mrb[0].mxu0 %v731
  %v1081 = vpop.f32.mrb[0].mxu0
  %v1082 = vadd.f32 0.0, %v1081
  %v1083 = vpop.f32.mrb[0].mxu0
  %v1084 = vpop.f32.mrb[0].mxu0
  %v1085 = vadd.f32 0.0, %v1084
  %v1086 = vpop.f32.mrb[0].mxu0
  %1087 = vmatprep.mubr.bf16.mxu0 0
  %1088 = vmatmul.mubr.bf16.gmra.mrb[0].mxu0 %v734
  %v1089 = vpop.f32.mrb[0].mxu0
  %v1090 = vadd.f32 0.0, %v1089
  %v1091 = vpop.f32.mrb[0].mxu0
  %v1092 = vpop.f32.mrb[0].mxu0
  %v1093 = vadd.f32 0.0, %v1092
  %v1094 = vpop.f32.mrb[0].mxu0
  %1095 = vmatprep.mubr.bf16.mxu0 0
  %1096 = vmatmul.mubr.bf16.gmra.mrb[0].mxu0 %v737
  %v1097 = vpop.f32.mrb[0].mxu0
  %v1098 = vadd.f32 0.0, %v1097
  %v1099 = vpop.f32.mrb[0].mxu0
  %v1100 = vpop.f32.mrb[0].mxu0
  %v1101 = vadd.f32 0.0, %v1100
  %v1102 = vpop.f32.mrb[0].mxu0
  %1103 = vmatprep.mubr.bf16.mxu0 0
  %1104 = vmatmul.mubr.bf16.gmra.mrb[0].mxu0 %v740
  %v1105 = vpop.f32.mrb[0].mxu0
  %v1106 = vadd.f32 0.0, %v1105
  %v1107 = vpop.f32.mrb[0].mxu0
  %v1108 = vpop.f32.mrb[0].mxu0
  %v1109 = vadd.f32 0.0, %v1108
  %v1110 = vpop.f32.mrb[0].mxu0
  %1111 = vmatprep.mubr.bf16.mxu0 0
  %1112 = vmatmul.mubr.bf16.gmra.mrb[0].mxu0 %v743
  %v1113 = vpop.f32.mrb[0].mxu0
  %v1114 = vadd.f32 0.0, %v1113
  %v1115 = vpop.f32.mrb[0].mxu0
  %v1116 = vpop.f32.mrb[0].mxu0
  %v1117 = vadd.f32 0.0, %v1116
  %v1118 = vpop.f32.mrb[0].mxu0
  %1119 = vmatprep.mubr.bf16.mxu0 0
  %1120 = vmatmul.mubr.bf16.gmra.mrb[0].mxu0 %v746
  %v1121 = vpop.f32.mrb[0].mxu0
  %v1122 = vadd.f32 0.0, %v1121
  %v1123 = vpop.f32.mrb[0].mxu0
  %v1124 = vpop.f32.mrb[0].mxu0
  %v1125 = vadd.f32 0.0, %v1124
  %v1126 = vpop.f32.mrb[0].mxu0
  %1127 = vmatprep.mubr.bf16.mxu0 0
  %1128 = vmatmul.mubr.bf16.gmra.mrb[0].mxu0 %v749
  %v1129 = vpop.f32.mrb[0].mxu0
  %v1130 = vadd.f32 0.0, %v1129
  %v1131 = vpop.f32.mrb[0].mxu0
  %v1132 = vpop.f32.mrb[0].mxu0
  %v1133 = vadd.f32 0.0, %v1132
  %v1134 = vpop.f32.mrb[0].mxu0
  %1135 = vmatprep.mubr.bf16.mxu0 0
  %1136 = vmatmul.mubr.bf16.gmra.mrb[0].mxu0 %v752
  %v1137 = vpop.f32.mrb[0].mxu0
  %v1138 = vadd.f32 0.0, %v1137
  %v1139 = vpop.f32.mrb[0].mxu0
  %v1140 = vpop.f32.mrb[0].mxu0
  %v1141 = vadd.f32 0.0, %v1140
  %v1142 = vpop.f32.mrb[0].mxu0
  %1143 = vmatprep.mubr.bf16.mxu0 0
  %1144 = vmatmul.mubr.bf16.gmra.mrb[0].mxu0 %v755
  %v1145 = vpop.f32.mrb[0].mxu0
  %v1146 = vadd.f32 0.0, %v1145
  %v1147 = vpop.f32.mrb[0].mxu0
  %v1148 = vpop.f32.mrb[0].mxu0
  %v1149 = vadd.f32 0.0, %v1148
  %v1150 = vpop.f32.mrb[0].mxu0
  %1151 = vmatprep.mubr.bf16.mxu0 0
  %1152 = vmatmul.mubr.bf16.gmra.mrb[0].mxu0 %v758
  %v1153 = vpop.f32.mrb[0].mxu0
  %v1154 = vadd.f32 0.0, %v1153
  %v1155 = vpop.f32.mrb[0].mxu0
  %v1156 = vpop.f32.mrb[0].mxu0
  %v1157 = vadd.f32 0.0, %v1156
  %v1158 = vpop.f32.mrb[0].mxu0
  %1159 = vmatprep.mubr.bf16.mxu0 0
  %1160 = vmatmul.mubr.bf16.gmra.mrb[0].mxu0 %v761
  %v1161 = vpop.f32.mrb[0].mxu0
  %v1162 = vadd.f32 0.0, %v1161
  %v1163 = vpop.f32.mrb[0].mxu0
  %v1164 = vpop.f32.mrb[0].mxu0
  %v1165 = vadd.f32 0.0, %v1164
  %v1166 = vpop.f32.mrb[0].mxu0
  %1167 = vmatprep.mubr.bf16.mxu0 0
  %1168 = vmatmul.mubr.bf16.gmra.mrb[0].mxu0 %v764
  %v1169 = vpop.f32.mrb[0].mxu0
  %v1170 = vadd.f32 0.0, %v1169
  %v1171 = vpop.f32.mrb[0].mxu0
  %v1172 = vpop.f32.mrb[0].mxu0
  %v1173 = vadd.f32 0.0, %v1172
  %v1174 = vpop.f32.mrb[0].mxu0
  %1175 = vmatprep.mubr.bf16.mxu0 0
  %1176 = vmatmul.mubr.bf16.gmra.mrb[0].mxu0 %v767
  %v1177 = vpop.f32.mrb[0].mxu0
  %v1178 = vadd.f32 0.0, %v1177
  %v1179 = vpop.f32.mrb[0].mxu0
  %v1180 = vpop.f32.mrb[0].mxu0
  %v1181 = vadd.f32 0.0, %v1180
  %v1182 = vpop.f32.mrb[0].mxu0
  %1183 = vmatprep.mubr.bf16.mxu0 0
  %1184 = vmatmul.mubr.bf16.gmra.mrb[0].mxu0 %v770
  %v1185 = vpop.f32.mrb[0].mxu0
  %v1186 = vadd.f32 0.0, %v1185
  %v1187 = vpop.f32.mrb[0].mxu0
  %v1188 = vpop.f32.mrb[0].mxu0
  %v1189 = vadd.f32 0.0, %v1188
  %v1190 = vpop.f32.mrb[0].mxu0
  %1191 = vmatprep.mubr.bf16.mxu0 0
  %1192 = vmatmul.mubr.bf16.gmra.mrb[0].mxu0 %v773
  %v1193 = vpop.f32.mrb[0].mxu0
  %v1194 = vadd.f32 0.0, %v1193
  %v1195 = vpop.f32.mrb[0].mxu0
  %v1196 = vpop.f32.mrb[0].mxu0
  %v1197 = vadd.f32 0.0, %v1196
  %v1198 = vpop.f32.mrb[0].mxu0
  %1199 = vmatprep.mubr.bf16.mxu0 0
  %1200 = vmatmul.mubr.bf16.gmra.mrb[0].mxu0 %v776
  %v1201 = vpop.f32.mrb[0].mxu0
  %v1202 = vadd.f32 0.0, %v1201
  %v1203 = vpop.f32.mrb[0].mxu0
  %v1204 = vpop.f32.mrb[0].mxu0
  %v1205 = vadd.f32 0.0, %v1204
  %v1206 = vpop.f32.mrb[0].mxu0
  %1207 = vmatprep.mubr.bf16.mxu0 0
  %1208 = vmatmul.mubr.bf16.gmra.mrb[0].mxu0 %v779
  %v1209 = vpop.f32.mrb[0].mxu0
  %v1210 = vadd.f32 0.0, %v1209
  %v1211 = vpop.f32.mrb[0].mxu0
  %v1212 = vpop.f32.mrb[0].mxu0
  %v1213 = vadd.f32 0.0, %v1212
  %v1214 = vpop.f32.mrb[0].mxu0
  %1215 = vmatprep.mubr.bf16.mxu0 0
  %1216 = vmatmul.mubr.bf16.gmra.mrb[0].mxu0 %v782
  %v1217 = vpop.f32.mrb[0].mxu0
  %v1218 = vadd.f32 0.0, %v1217
  %v1219 = vpop.f32.mrb[0].mxu0
  %v1220 = vpop.f32.mrb[0].mxu0
  %v1221 = vadd.f32 0.0, %v1220
  %v1222 = vpop.f32.mrb[0].mxu0
  %1223 = vmatprep.mubr.bf16.mxu0 0
  %1224 = vmatmul.mubr.bf16.gmra.mrb[0].mxu0 %v785
  %v1225 = vpop.f32.mrb[0].mxu0
  %v1226 = vadd.f32 0.0, %v1225
  %v1227 = vpop.f32.mrb[0].mxu0
  %v1228 = vpop.f32.mrb[0].mxu0
  %v1229 = vadd.f32 0.0, %v1228
  %v1230 = vpop.f32.mrb[0].mxu0
  %1231 = vmatprep.mubr.bf16.mxu0 0
  %1232 = vmatmul.mubr.bf16.gmra.mrb[0].mxu0 %v788
  %v1233 = vpop.f32.mrb[0].mxu0
  %v1234 = vadd.f32 0.0, %v1233
  %v1235 = vpop.f32.mrb[0].mxu0
  %v1236 = vpop.f32.mrb[0].mxu0
  %v1237 = vadd.f32 0.0, %v1236
  %v1238 = vpop.f32.mrb[0].mxu0
  %1239 = vmatprep.mubr.bf16.mxu0 0
  %1240 = vmatmul.mubr.bf16.gmra.mrb[0].mxu0 %v791
  %v1241 = vpop.f32.mrb[0].mxu0
  %v1242 = vadd.f32 0.0, %v1241
  %v1243 = vpop.f32.mrb[0].mxu0
  %v1244 = vpop.f32.mrb[0].mxu0
  %v1245 = vadd.f32 0.0, %v1244
  %v1246 = vpop.f32.mrb[0].mxu0
  %1247 = vmatprep.mubr.bf16.mxu0 0
  %1248 = vmatmul.mubr.bf16.gmra.mrb[0].mxu0 %v794
  %v1249 = vpop.f32.mrb[0].mxu0
  %v1250 = vadd.f32 0.0, %v1249
  %v1251 = vpop.f32.mrb[0].mxu0
  %v1252 = vpop.f32.mrb[0].mxu0
  %v1253 = vadd.f32 0.0, %v1252
  %v1254 = vpop.f32.mrb[0].mxu0
  %1255 = vmatprep.mubr.bf16.mxu0 0
  %1256 = vmatmul.mubr.bf16.gmra.mrb[0].mxu0 %v797
  %v1257 = vpop.f32.mrb[0].mxu0
  %v1258 = vadd.f32 0.0, %v1257
  %v1259 = vpop.f32.mrb[0].mxu0
  %v1260 = vpop.f32.mrb[0].mxu0
  %v1261 = vadd.f32 0.0, %v1260
  %v1262 = vpop.f32.mrb[0].mxu0
  %1263 = vmatprep.mubr.bf16.mxu0 0
  %1264 = vmatmul.mubr.bf16.gmra.mrb[0].mxu0 %v800
  %v1265 = vpop.f32.mrb[0].mxu0
  %v1266 = vadd.f32 0.0, %v1265
  %v1267 = vpop.f32.mrb[0].mxu0
  %v1268 = vpop.f32.mrb[0].mxu0
  %v1269 = vadd.f32 0.0, %v1268
  %v1270 = vpop.f32.mrb[0].mxu0
  %1271 = vmatprep.mubr.bf16.mxu0 0
  %1272 = vmatmul.mubr.bf16.gmra.mrb[0].mxu0 %v803
  %v1273 = vpop.f32.mrb[0].mxu0
  %v1274 = vadd.f32 0.0, %v1273
  %v1275 = vpop.f32.mrb[0].mxu0
  %v1276 = vpop.f32.mrb[0].mxu0
  %v1277 = vadd.f32 0.0, %v1276
  %v1278 = vpop.f32.mrb[0].mxu0
  %1279 = vmatprep.mubr.bf16.mxu0 0
  %1280 = vmatmul.mubr.bf16.gmra.mrb[0].mxu0 %v806
  %v1281 = vpop.f32.mrb[0].mxu0
  %v1282 = vadd.f32 0.0, %v1281
  %v1283 = vpop.f32.mrb[0].mxu0
  %v1284 = vpop.f32.mrb[0].mxu0
  %v1285 = vadd.f32 0.0, %v1284
  %v1286 = vpop.f32.mrb[0].mxu0
  %1287 = vmatprep.mubr.bf16.mxu0 0
  %1288 = vmatmul.mubr.bf16.gmra.mrb[0].mxu0 %v809
  %v1289 = vpop.f32.mrb[0].mxu0
  %v1290 = vadd.f32 0.0, %v1289
  %v1291 = vpop.f32.mrb[0].mxu0
  %v1292 = vpop.f32.mrb[0].mxu0
  %v1293 = vadd.f32 0.0, %v1292
  %v1294 = vpop.f32.mrb[0].mxu0
  %1295 = vmatprep.mubr.bf16.mxu0 0
  %1296 = vmatmul.mubr.bf16.gmra.mrb[0].mxu0 %v812
  %v1297 = vpop.f32.mrb[0].mxu0
  %v1298 = vadd.f32 0.0, %v1297
  %v1299 = vpop.f32.mrb[0].mxu0
  %v1300 = vpop.f32.mrb[0].mxu0
  %v1301 = vadd.f32 0.0, %v1300
  %v1302 = vpop.f32.mrb[0].mxu0
  %1303 = vmatprep.mubr.bf16.mxu0 0
  %1304 = vmatmul.mubr.bf16.gmra.mrb[0].mxu0 %v815
  %v1305 = vpop.f32.mrb[0].mxu0
  %v1306 = vadd.f32 0.0, %v1305
  %v1307 = vpop.f32.mrb[0].mxu0
  %v1308 = vpop.f32.mrb[0].mxu0
  %v1309 = vadd.f32 0.0, %v1308
  %v1310 = vpop.f32.mrb[0].mxu0
  %1311 = vmatprep.mubr.bf16.mxu0 0
  %1312 = vmatmul.mubr.bf16.gmra.mrb[0].mxu0 %v818
  %v1313 = vpop.f32.mrb[0].mxu0
  %v1314 = vadd.f32 0.0, %v1313
  %v1315 = vpop.f32.mrb[0].mxu0
  %v1316 = vpop.f32.mrb[0].mxu0
  %v1317 = vadd.f32 0.0, %v1316
  %v1318 = vpop.f32.mrb[0].mxu0
  %1319 = vmatprep.mubr.bf16.mxu0 0
  %1320 = vmatmul.mubr.bf16.gmra.mrb[0].mxu0 %v821
  %v1321 = vpop.f32.mrb[0].mxu0
  %v1322 = vadd.f32 0.0, %v1321
  %v1323 = vpop.f32.mrb[0].mxu0
  %v1324 = vpop.f32.mrb[0].mxu0
  %v1325 = vadd.f32 0.0, %v1324
  %v1326 = vpop.f32.mrb[0].mxu0
  %1327 = vmatprep.mubr.bf16.mxu0 0
  %1328 = vmatmul.mubr.bf16.gmra.mrb[0].mxu0 %v824
  %v1329 = vpop.f32.mrb[0].mxu0
  %v1330 = vadd.f32 0.0, %v1329
  %v1331 = vpop.f32.mrb[0].mxu0
  %v1332 = vpop.f32.mrb[0].mxu0
  %v1333 = vadd.f32 0.0, %v1332
  %v1334 = vpop.f32.mrb[0].mxu0
  %1335 = vmatprep.mubr.bf16.mxu0 0
  %1336 = vmatmul.mubr.bf16.gmra.mrb[0].mxu0 %v827
  %v1337 = vpop.f32.mrb[0].mxu0
  %v1338 = vadd.f32 0.0, %v1337
  %v1339 = vpop.f32.mrb[0].mxu0
  %v1340 = vpop.f32.mrb[0].mxu0
  %v1341 = vadd.f32 0.0, %v1340
  %v1342 = vpop.f32.mrb[0].mxu0
  %1343 = vmatprep.mubr.bf16.mxu0 0
  %1344 = vmatmul.mubr.bf16.gmra.mrb[0].mxu0 %v830
  %v1345 = vpop.f32.mrb[0].mxu0
  %v1346 = vadd.f32 0.0, %v1345
  %v1347 = vpop.f32.mrb[0].mxu0
  %v1348 = vpop.f32.mrb[0].mxu0
  %v1349 = vadd.f32 0.0, %v1348
  %v1350 = vpop.f32.mrb[0].mxu0
  %1351 = vmatprep.mubr.bf16.mxu0 0
  %1352 = vmatmul.mubr.bf16.gmra.mrb[0].mxu0 %v833
  %v1353 = vpop.f32.mrb[0].mxu0
  %v1354 = vadd.f32 0.0, %v1353
  %v1355 = vpop.f32.mrb[0].mxu0
  %v1356 = vpop.f32.mrb[0].mxu0
  %v1357 = vadd.f32 0.0, %v1356
  %v1358 = vpop.f32.mrb[0].mxu0
  %1359 = vmatprep.mubr.bf16.mxu0 0
  %1360 = vmatmul.mubr.bf16.gmra.mrb[0].mxu0 %v836
  %v1361 = vpop.f32.mrb[0].mxu0
  %v1362 = vadd.f32 0.0, %v1361
  %v1363 = vpop.f32.mrb[0].mxu0
  %v1364 = vpop.f32.mrb[0].mxu0
  %v1365 = vadd.f32 0.0, %v1364
  %v1366 = vpop.f32.mrb[0].mxu0
  %1367 = vmatprep.mubr.bf16.mxu0 0
  %1368 = vmatmul.mubr.bf16.gmra.mrb[0].mxu0 %v839
  %v1369 = vpop.f32.mrb[0].mxu0
  %v1370 = vadd.f32 0.0, %v1369
  %v1371 = vpop.f32.mrb[0].mxu0
  %v1372 = vpop.f32.mrb[0].mxu0
  %v1373 = vadd.f32 0.0, %v1372
  %v1374 = vpop.f32.mrb[0].mxu0
  %1375 = vmatprep.mubr.bf16.mxu0 0
  %1376 = vmatmul.mubr.bf16.gmra.mrb[0].mxu0 %v842
  %v1377 = vpop.f32.mrb[0].mxu0
  %v1378 = vadd.f32 0.0, %v1377
  %v1379 = vpop.f32.mrb[0].mxu0
  %v1380 = vpop.f32.mrb[0].mxu0
  %v1381 = vadd.f32 0.0, %v1380
  %v1382 = vpop.f32.mrb[0].mxu0
  %1383 = vmatprep.mubr.bf16.mxu0 0
  %1384 = vmatmul.mubr.bf16.gmra.mrb[0].mxu0 %v845
  %v1385 = vpop.f32.mrb[0].mxu0
  %v1386 = vadd.f32 0.0, %v1385
  %v1387 = vpop.f32.mrb[0].mxu0
  %v1388 = vpop.f32.mrb[0].mxu0
  %v1389 = vadd.f32 0.0, %v1388
  %v1390 = vpop.f32.mrb[0].mxu0
  %1391 = vmatprep.mubr.bf16.mxu0 0
  %1392 = vmatmul.mubr.bf16.gmra.mrb[0].mxu0 %v848
  %v1393 = vpop.f32.mrb[0].mxu0
  %v1394 = vadd.f32 0.0, %v1393
  %v1395 = vpop.f32.mrb[0].mxu0
  %v1396 = vpop.f32.mrb[0].mxu0
  %v1397 = vadd.f32 0.0, %v1396
  %v1398 = vpop.f32.mrb[0].mxu0
  %1399 = vmatprep.mubr.bf16.mxu0 0
  %1400 = vmatmul.mubr.bf16.gmra.mrb[0].mxu0 %v851
  %v1401 = vpop.f32.mrb[0].mxu0
  %v1402 = vadd.f32 0.0, %v1401
  %v1403 = vpop.f32.mrb[0].mxu0
  %v1404 = vpop.f32.mrb[0].mxu0
  %v1405 = vadd.f32 0.0, %v1404
  %v1406 = vpop.f32.mrb[0].mxu0
  %1407 = vmatprep.mubr.bf16.mxu0 0
  %1408 = vmatmul.mubr.bf16.gmra.mrb[0].mxu0 %v854
  %v1409 = vpop.f32.mrb[0].mxu0
  %v1410 = vadd.f32 0.0, %v1409
  %v1411 = vpop.f32.mrb[0].mxu0
  %v1412 = vpop.f32.mrb[0].mxu0
  %v1413 = vadd.f32 0.0, %v1412
  %v1414 = vpop.f32.mrb[0].mxu0
  %1415 = vmatprep.mubr.bf16.mxu0 0
  %1416 = vmatmul.mubr.bf16.gmra.mrb[0].mxu0 %v857
  %v1417 = vpop.f32.mrb[0].mxu0
  %v1418 = vadd.f32 0.0, %v1417
  %v1419 = vpop.f32.mrb[0].mxu0
  %v1420 = vpop.f32.mrb[0].mxu0
  %v1421 = vadd.f32 0.0, %v1420
  %v1422 = vpop.f32.mrb[0].mxu0
  %1423 = vmatprep.mubr.bf16.mxu0 0
  %1424 = vmatmul.mubr.bf16.gmra.mrb[0].mxu0 %v860
  %v1425 = vpop.f32.mrb[0].mxu0
  %v1426 = vadd.f32 0.0, %v1425
  %v1427 = vpop.f32.mrb[0].mxu0
  %v1428 = vpop.f32.mrb[0].mxu0
  %v1429 = vadd.f32 0.0, %v1428
  %v1430 = vpop.f32.mrb[0].mxu0
  %1431 = vmatprep.mubr.bf16.mxu0 0
  %1432 = vmatmul.mubr.bf16.gmra.mrb[0].mxu0 %v863
  %v1433 = vpop.f32.mrb[0].mxu0
  %v1434 = vadd.f32 0.0, %v1433
  %v1435 = vpop.f32.mrb[0].mxu0
  %v1436 = vpop.f32.mrb[0].mxu0
  %v1437 = vadd.f32 0.0, %v1436
  %v1438 = vpop.f32.mrb[0].mxu0
  %1439 = vmatprep.mubr.bf16.mxu0 0
  %1440 = vmatmul.mubr.bf16.gmra.mrb[0].mxu0 %v866
  %v1441 = vpop.f32.mrb[0].mxu0
  %v1442 = vadd.f32 0.0, %v1441
  %v1443 = vpop.f32.mrb[0].mxu0
  %v1444 = vpop.f32.mrb[0].mxu0
  %v1445 = vadd.f32 0.0, %v1444
  %v1446 = vpop.f32.mrb[0].mxu0
  %1447 = vmatprep.mubr.bf16.mxu0 0
  %1448 = vmatmul.mubr.bf16.gmra.mrb[0].mxu0 %v869
  %v1449 = vpop.f32.mrb[0].mxu0
  %v1450 = vadd.f32 0.0, %v1449
  %v1451 = vpop.f32.mrb[0].mxu0
  %v1452 = vpop.f32.mrb[0].mxu0
  %v1453 = vadd.f32 0.0, %v1452
  %v1454 = vpop.f32.mrb[0].mxu0
  %1455 = vmatprep.mubr.bf16.mxu0 0
  %1456 = vmatmul.mubr.bf16.gmra.mrb[0].mxu0 %v872
  %v1457 = vpop.f32.mrb[0].mxu0
  %v1458 = vadd.f32 0.0, %v1457
  %v1459 = vpop.f32.mrb[0].mxu0
  %v1460 = vpop.f32.mrb[0].mxu0
  %v1461 = vadd.f32 0.0, %v1460
  %v1462 = vpop.f32.mrb[0].mxu0
  %1463 = vmatprep.mubr.bf16.mxu0 0
  %1464 = vmatmul.mubr.bf16.gmra.mrb[0].mxu0 %v875
  %v1465 = vpop.f32.mrb[0].mxu0
  %v1466 = vadd.f32 0.0, %v1465
  %v1467 = vpop.f32.mrb[0].mxu0
  %v1468 = vpop.f32.mrb[0].mxu0
  %v1469 = vadd.f32 0.0, %v1468
  %v1470 = vpop.f32.mrb[0].mxu0
  %1471 = vmatprep.mubr.bf16.mxu0 0
  %1472 = vmatmul.mubr.bf16.gmra.mrb[0].mxu0 %v878
  %v1473 = vpop.f32.mrb[0].mxu0
  %v1474 = vadd.f32 0.0, %v1473
  %v1475 = vpop.f32.mrb[0].mxu0
  %v1476 = vpop.f32.mrb[0].mxu0
  %v1477 = vadd.f32 0.0, %v1476
  %v1478 = vpop.f32.mrb[0].mxu0
  %1479 = vmatprep.mubr.bf16.mxu0 0
  %1480 = vmatmul.mubr.bf16.gmra.mrb[0].mxu0 %v881
  %v1481 = vpop.f32.mrb[0].mxu0
  %v1482 = vadd.f32 0.0, %v1481
  %v1483 = vpop.f32.mrb[0].mxu0
  %v1484 = vpop.f32.mrb[0].mxu0
  %v1485 = vadd.f32 0.0, %v1484
  %v1486 = vpop.f32.mrb[0].mxu0
  %1487 = vmatprep.mubr.bf16.mxu0 0
  %1488 = vmatmul.mubr.bf16.gmra.mrb[0].mxu0 %v884
  %v1489 = vpop.f32.mrb[0].mxu0
  %v1490 = vadd.f32 0.0, %v1489
  %v1491 = vpop.f32.mrb[0].mxu0
  %v1492 = vpop.f32.mrb[0].mxu0
  %v1493 = vadd.f32 0.0, %v1492
  %v1494 = vpop.f32.mrb[0].mxu0
  %1495 = vmatprep.mubr.bf16.mxu0 0
  %1496 = vmatmul.mubr.bf16.gmra.mrb[0].mxu0 %v887
  %v1497 = vpop.f32.mrb[0].mxu0
  %v1498 = vadd.f32 0.0, %v1497
  %v1499 = vpop.f32.mrb[0].mxu0
  %v1500 = vpop.f32.mrb[0].mxu0
  %v1501 = vadd.f32 0.0, %v1500
  %v1502 = vpop.f32.mrb[0].mxu0
  %1503 = vmatprep.mubr.bf16.mxu0 0
  %1504 = vmatmul.mubr.bf16.gmra.mrb[0].mxu0 %v890
  %v1505 = vpop.f32.mrb[0].mxu0
  %v1506 = vadd.f32 0.0, %v1505
  %v1507 = vpop.f32.mrb[0].mxu0
  %v1508 = vpop.f32.mrb[0].mxu0
  %v1509 = vadd.f32 0.0, %v1508
  %v1510 = vpop.f32.mrb[0].mxu0
  %1511 = vmatprep.mubr.bf16.mxu0 0
  %1512 = vmatmul.mubr.bf16.gmra.mrb[0].mxu0 %v893
  %v1513 = vpop.f32.mrb[0].mxu0
  %v1514 = vadd.f32 0.0, %v1513
  %v1515 = vpop.f32.mrb[0].mxu0
  %v1516 = vpop.f32.mrb[0].mxu0
  %v1517 = vadd.f32 0.0, %v1516
  %v1518 = vpop.f32.mrb[0].mxu0
  %1519 = vmatprep.mubr.bf16.mxu0 0
  %1520 = vmatmul.mubr.bf16.gmra.mrb[0].mxu0 %v896
  %v1521 = vpop.f32.mrb[0].mxu0
  %v1522 = vadd.f32 0.0, %v1521
  %v1523 = vpop.f32.mrb[0].mxu0
  %v1524 = vpop.f32.mrb[0].mxu0
  %v1525 = vadd.f32 0.0, %v1524
  %v1526 = vpop.f32.mrb[0].mxu0
  %1527 = vmatprep.mubr.bf16.mxu0 0
  %1528 = vmatmul.mubr.bf16.gmra.mrb[0].mxu0 %v899
  %v1529 = vpop.f32.mrb[0].mxu0
  %v1530 = vadd.f32 0.0, %v1529
  %v1531 = vpop.f32.mrb[0].mxu0
  %v1532 = vpop.f32.mrb[0].mxu0
  %v1533 = vadd.f32 0.0, %v1532
  %v1534 = vpop.f32.mrb[0].mxu0
  %1535 = vmatprep.mubr.bf16.mxu0 0
  %1536 = vmatmul.mubr.bf16.gmra.mrb[0].mxu0 %v902
  %v1537 = vpop.f32.mrb[0].mxu0
  %v1538 = vadd.f32 0.0, %v1537
  %v1539 = vpop.f32.mrb[0].mxu0
  %v1540 = vpop.f32.mrb[0].mxu0
  %v1541 = vadd.f32 0.0, %v1540
  %v1542 = vpop.f32.mrb[0].mxu0
  %1543 = vmatprep.mubr.bf16.mxu0 0
  %1544 = vmatmul.mubr.bf16.gmra.mrb[0].mxu0 %v905
  %v1545 = vpop.f32.mrb[0].mxu0
  %v1546 = vadd.f32 0.0, %v1545
  %v1547 = vpop.f32.mrb[0].mxu0
  %v1548 = vpop.f32.mrb[0].mxu0
  %v1549 = vadd.f32 0.0, %v1548
  %v1550 = vpop.f32.mrb[0].mxu0
  %1551 = vmatprep.mubr.bf16.mxu0 0
  %1552 = vmatmul.mubr.bf16.gmra.mrb[0].mxu0 %v908
  %v1553 = vpop.f32.mrb[0].mxu0
  %v1554 = vadd.f32 0.0, %v1553
  %v1555 = vpop.f32.mrb[0].mxu0
  %v1556 = vpop.f32.mrb[0].mxu0
  %v1557 = vadd.f32 0.0, %v1556
  %v1558 = vpop.f32.mrb[0].mxu0
  %1559 = vmatprep.mubr.bf16.mxu0 0
  %1560 = vmatmul.mubr.bf16.gmra.mrb[0].mxu0 %v911
  %v1561 = vpop.f32.mrb[0].mxu0
  %v1562 = vadd.f32 0.0, %v1561
  %v1563 = vpop.f32.mrb[0].mxu0
  %v1564 = vpop.f32.mrb[0].mxu0
  %v1565 = vadd.f32 0.0, %v1564
  %v1566 = vpop.f32.mrb[0].mxu0
  %1567 = vmatprep.mubr.bf16.mxu0 0
  %1568 = vmatmul.mubr.bf16.gmra.mrb[0].mxu0 %v914
  %v1569 = vpop.f32.mrb[0].mxu0
  %v1570 = vadd.f32 0.0, %v1569
  %v1571 = vpop.f32.mrb[0].mxu0
  %v1572 = vpop.f32.mrb[0].mxu0
  %v1573 = vadd.f32 0.0, %v1572
  %v1574 = vpop.f32.mrb[0].mxu0
  %1575 = vmatprep.mubr.bf16.mxu0 0
  %1576 = vmatmul.mubr.bf16.gmra.mrb[0].mxu0 %v917
  %v1577 = vpop.f32.mrb[0].mxu0
  %v1578 = vadd.f32 0.0, %v1577
  %v1579 = vpop.f32.mrb[0].mxu0
  %v1580 = vpop.f32.mrb[0].mxu0
  %v1581 = vadd.f32 0.0, %v1580
  %v1582 = vpop.f32.mrb[0].mxu0
  %1583 = vmatprep.mubr.bf16.mxu0 0
  %1584 = vmatmul.mubr.bf16.gmra.mrb[0].mxu0 %v920
  %v1585 = vpop.f32.mrb[0].mxu0
  %v1586 = vadd.f32 0.0, %v1585
  %v1587 = vpop.f32.mrb[0].mxu0
  %v1588 = vpop.f32.mrb[0].mxu0
  %v1589 = vadd.f32 0.0, %v1588
  %v1590 = vpop.f32.mrb[0].mxu0
  %1591 = vmatprep.mubr.bf16.mxu0 0
  %1592 = vmatmul.mubr.bf16.gmra.mrb[0].mxu0 %v923
  %v1593 = vpop.f32.mrb[0].mxu0
  %v1594 = vadd.f32 0.0, %v1593
  %v1595 = vpop.f32.mrb[0].mxu0
  %v1596 = vpop.f32.mrb[0].mxu0
  %v1597 = vadd.f32 0.0, %v1596
  %v1598 = vpop.f32.mrb[0].mxu0
  %1599 = vmatprep.mubr.bf16.mxu0 0
  %1600 = vmatmul.mubr.bf16.gmra.mrb[0].mxu0 %v926
  %v1601 = vpop.f32.mrb[0].mxu0
  %v1602 = vadd.f32 0.0, %v1601
  %v1603 = vpop.f32.mrb[0].mxu0
  %v1604 = vpop.f32.mrb[0].mxu0
  %v1605 = vadd.f32 0.0, %v1604
  %v1606 = vpop.f32.mrb[0].mxu0
  %1607 = vmatprep.mubr.bf16.mxu0 0
  %1608 = vmatmul.mubr.bf16.gmra.mrb[0].mxu0 %v929
  %v1609 = vpop.f32.mrb[0].mxu0
  %v1610 = vadd.f32 0.0, %v1609
  %v1611 = vpop.f32.mrb[0].mxu0
  %v1612 = vpop.f32.mrb[0].mxu0
  %v1613 = vadd.f32 0.0, %v1612
  %v1614 = vpop.f32.mrb[0].mxu0
  %1615 = vmatprep.mubr.bf16.mxu0 0
  %1616 = vmatmul.mubr.bf16.gmra.mrb[0].mxu0 %v932
  %v1617 = vpop.f32.mrb[0].mxu0
  %v1618 = vadd.f32 0.0, %v1617
  %v1619 = vpop.f32.mrb[0].mxu0
  %v1620 = vpop.f32.mrb[0].mxu0
  %v1621 = vadd.f32 0.0, %v1620
  %v1622 = vpop.f32.mrb[0].mxu0
  %1623 = vmatprep.mubr.bf16.mxu0 0
  %1624 = vmatmul.mubr.bf16.gmra.mrb[0].mxu0 %v935
  %v1625 = vpop.f32.mrb[0].mxu0
  %v1626 = vadd.f32 0.0, %v1625
  %v1627 = vpop.f32.mrb[0].mxu0
  %v1628 = vpop.f32.mrb[0].mxu0
  %v1629 = vadd.f32 0.0, %v1628
  %v1630 = vpop.f32.mrb[0].mxu0
  %1631 = vmatprep.mubr.bf16.mxu0 0
  %1632 = vmatmul.mubr.bf16.gmra.mrb[0].mxu0 %v938
  %v1633 = vpop.f32.mrb[0].mxu0
  %v1634 = vadd.f32 0.0, %v1633
  %v1635 = vpop.f32.mrb[0].mxu0
  %v1636 = vpop.f32.mrb[0].mxu0
  %v1637 = vadd.f32 0.0, %v1636
  %v1638 = vpop.f32.mrb[0].mxu0
  %1639 = vmatprep.mubr.bf16.mxu0 0
  %1640 = vmatmul.mubr.bf16.gmra.mrb[0].mxu0 %v941
  %v1641 = vpop.f32.mrb[0].mxu0
  %v1642 = vadd.f32 0.0, %v1641
  %v1643 = vpop.f32.mrb[0].mxu0
  %v1644 = vpop.f32.mrb[0].mxu0
  %v1645 = vadd.f32 0.0, %v1644
  %v1646 = vpop.f32.mrb[0].mxu0
  %1647 = vmatprep.mubr.bf16.mxu0 0
  %1648 = vmatmul.mubr.bf16.gmra.mrb[0].mxu0 %v944
  %v1649 = vpop.f32.mrb[0].mxu0
  %v1650 = vadd.f32 0.0, %v1649
  %v1651 = vpop.f32.mrb[0].mxu0
  %v1652 = vpop.f32.mrb[0].mxu0
  %v1653 = vadd.f32 0.0, %v1652
  %v1654 = vpop.f32.mrb[0].mxu0
  %1655 = vmatprep.mubr.bf16.mxu0 0
  %1656 = vmatmul.mubr.bf16.gmra.mrb[0].mxu0 %v947
  %v1657 = vpop.f32.mrb[0].mxu0
  %v1658 = vadd.f32 0.0, %v1657
  %v1659 = vpop.f32.mrb[0].mxu0
  %v1660 = vpop.f32.mrb[0].mxu0
  %v1661 = vadd.f32 0.0, %v1660
  %v1662 = vpop.f32.mrb[0].mxu0
  %1663 = vmatprep.mubr.bf16.mxu0 0
  %1664 = vmatmul.mubr.bf16.gmra.mrb[0].mxu0 %v950
  %v1665 = vpop.f32.mrb[0].mxu0
  %v1666 = vadd.f32 0.0, %v1665
  %v1667 = vpop.f32.mrb[0].mxu0
  %v1668 = vpop.f32.mrb[0].mxu0
  %v1669 = vadd.f32 0.0, %v1668
  %v1670 = vpop.f32.mrb[0].mxu0
  %1671 = vmatprep.mubr.bf16.mxu0 0
  %1672 = vmatmul.mubr.bf16.gmra.mrb[0].mxu0 %v953
  %v1673 = vpop.f32.mrb[0].mxu0
  %v1674 = vadd.f32 0.0, %v1673
  %v1675 = vpop.f32.mrb[0].mxu0
  %v1676 = vpop.f32.mrb[0].mxu0
  %v1677 = vadd.f32 0.0, %v1676
  %v1678 = vpop.f32.mrb[0].mxu0
  %1679 = vmatprep.mubr.bf16.mxu0 0
  %1680 = vmatmul.mubr.bf16.gmra.mrb[0].mxu0 %v956
  %v1681 = vpop.f32.mrb[0].mxu0
  %v1682 = vadd.f32 0.0, %v1681
  %v1683 = vpop.f32.mrb[0].mxu0
  %v1684 = vpop.f32.mrb[0].mxu0
  %v1685 = vadd.f32 0.0, %v1684
  %v1686 = vpop.f32.mrb[0].mxu0
  %1687 = vmatprep.mubr.bf16.mxu0 0
  %1688 = vmatmul.mubr.bf16.gmra.mrb[0].mxu0 %v959
  %v1689 = vpop.f32.mrb[0].mxu0
  %v1690 = vadd.f32 0.0, %v1689
  %v1691 = vpop.f32.mrb[0].mxu0
  %v1692 = vpop.f32.mrb[0].mxu0
  %v1693 = vadd.f32 0.0, %v1692
  %v1694 = vpop.f32.mrb[0].mxu0
  %1695 = vmatprep.mubr.bf16.mxu0 0
  %1696 = vmatmul.mubr.bf16.gmra.mrb[0].mxu0 %v962
  %v1697 = vpop.f32.mrb[0].mxu0
  %v1698 = vadd.f32 0.0, %v1697
  %v1699 = vpop.f32.mrb[0].mxu0
  %v1700 = vpop.f32.mrb[0].mxu0
  %v1701 = vadd.f32 0.0, %v1700
  %v1702 = vpop.f32.mrb[0].mxu0
  %1703 = vmatprep.mubr.bf16.mxu0 0
  %1704 = vmatmul.mubr.bf16.gmra.mrb[0].mxu0 %v965
  %v1705 = vpop.f32.mrb[0].mxu0
  %v1706 = vadd.f32 0.0, %v1705
  %v1707 = vpop.f32.mrb[0].mxu0
  %v1708 = vpop.f32.mrb[0].mxu0
  %v1709 = vadd.f32 0.0, %v1708
  %v1710 = vpop.f32.mrb[0].mxu0
  %1711 = vmatprep.mubr.bf16.mxu0 0
  %1712 = vmatmul.mubr.bf16.gmra.mrb[0].mxu0 %v968
  %v1713 = vpop.f32.mrb[0].mxu0
  %v1714 = vadd.f32 0.0, %v1713
  %v1715 = vpop.f32.mrb[0].mxu0
  %v1716 = vpop.f32.mrb[0].mxu0
  %v1717 = vadd.f32 0.0, %v1716
  %v1718 = vpop.f32.mrb[0].mxu0
  %1719 = vmatprep.mubr.bf16.mxu0 0
  %1720 = vmatmul.mubr.bf16.gmra.mrb[0].mxu0 %v971
  %v1721 = vpop.f32.mrb[0].mxu0
  %v1722 = vadd.f32 0.0, %v1721
  %v1723 = vpop.f32.mrb[0].mxu0
  %v1724 = vpop.f32.mrb[0].mxu0
  %v1725 = vadd.f32 0.0, %v1724
  %v1726 = vpop.f32.mrb[0].mxu0
  %1727 = vmatprep.mubr.bf16.mxu0 0
  %1728 = vmatmul.mubr.bf16.gmra.mrb[0].mxu0 %v974
  %v1729 = vpop.f32.mrb[0].mxu0
  %v1730 = vadd.f32 0.0, %v1729
  %v1731 = vpop.f32.mrb[0].mxu0
  %v1732 = vpop.f32.mrb[0].mxu0
  %v1733 = vadd.f32 0.0, %v1732
  %v1734 = vpop.f32.mrb[0].mxu0
  %1735 = vmatprep.mubr.bf16.mxu0 0
  %1736 = vmatmul.mubr.bf16.gmra.mrb[0].mxu0 %v977
  %v1737 = vpop.f32.mrb[0].mxu0
  %v1738 = vadd.f32 0.0, %v1737
  %v1739 = vpop.f32.mrb[0].mxu0
  %v1740 = vpop.f32.mrb[0].mxu0
  %v1741 = vadd.f32 0.0, %v1740
  %v1742 = vpop.f32.mrb[0].mxu0
  %1743 = vmatprep.mubr.bf16.mxu0 0
  %1744 = vmatmul.mubr.bf16.gmra.mrb[0].mxu0 %v980
  %v1745 = vpop.f32.mrb[0].mxu0
  %v1746 = vadd.f32 0.0, %v1745
  %v1747 = vpop.f32.mrb[0].mxu0
  %v1748 = vpop.f32.mrb[0].mxu0
  %v1749 = vadd.f32 0.0, %v1748
  %v1750 = vpop.f32.mrb[0].mxu0
  %1751 = vmatprep.mubr.bf16.mxu0 0
  %1752 = vmatmul.mubr.bf16.gmra.mrb[0].mxu0 %v983
  %v1753 = vpop.f32.mrb[0].mxu0
  %v1754 = vadd.f32 0.0, %v1753
  %v1755 = vpop.f32.mrb[0].mxu0
  %v1756 = vpop.f32.mrb[0].mxu0
  %v1757 = vadd.f32 0.0, %v1756
  %v1758 = vpop.f32.mrb[0].mxu0
  %1759 = vmatprep.mubr.bf16.mxu0 0
  %1760 = vmatmul.mubr.bf16.gmra.mrb[0].mxu0 %v986
  %v1761 = vpop.f32.mrb[0].mxu0
  %v1762 = vadd.f32 0.0, %v1761
  %v1763 = vpop.f32.mrb[0].mxu0
  %v1764 = vpop.f32.mrb[0].mxu0
  %v1765 = vadd.f32 0.0, %v1764
  %v1766 = vpop.f32.mrb[0].mxu0
  %1767 = vmatprep.mubr.bf16.mxu0 0
  %1768 = vmatmul.mubr.bf16.gmra.mrb[0].mxu0 %v989
  %v1769 = vpop.f32.mrb[0].mxu0
  %v1770 = vadd.f32 0.0, %v1769
  %v1771 = vpop.f32.mrb[0].mxu0
  %v1772 = vpop.f32.mrb[0].mxu0
  %v1773 = vadd.f32 0.0, %v1772
  %v1774 = vpop.f32.mrb[0].mxu0
  %1775 = vmatprep.mubr.bf16.mxu0 0
  %1776 = vmatmul.mubr.bf16.gmra.mrb[0].mxu0 %v992
  %v1777 = vpop.f32.mrb[0].mxu0
  %v1778 = vadd.f32 0.0, %v1777
  %v1779 = vpop.f32.mrb[0].mxu0
  %v1780 = vpop.f32.mrb[0].mxu0
  %v1781 = vadd.f32 0.0, %v1780
  %v1782 = vpop.f32.mrb[0].mxu0
  %1783 = vmatprep.mubr.bf16.mxu0 0
  %1784 = vmatmul.mubr.bf16.gmra.mrb[0].mxu0 %v995
  %v1785 = vpop.f32.mrb[0].mxu0
  %v1786 = vadd.f32 0.0, %v1785
  %v1787 = vpop.f32.mrb[0].mxu0
  %v1788 = vpop.f32.mrb[0].mxu0
  %v1789 = vadd.f32 0.0, %v1788
  %v1790 = vpop.f32.mrb[0].mxu0
  %1791 = vmatprep.mubr.bf16.mxu0 0
  %1792 = vmatmul.mubr.bf16.gmra.mrb[0].mxu0 %v998
  %v1793 = vpop.f32.mrb[0].mxu0
  %v1794 = vadd.f32 0.0, %v1793
  %v1795 = vpop.f32.mrb[0].mxu0
  %v1796 = vpop.f32.mrb[0].mxu0
  %v1797 = vadd.f32 0.0, %v1796
  %v1798 = vpop.f32.mrb[0].mxu0
  %1799 = vmatprep.mubr.bf16.mxu0 0
  %1800 = vmatmul.mubr.bf16.gmra.mrb[0].mxu0 %v1001
  %v1801 = vpop.f32.mrb[0].mxu0
  %v1802 = vadd.f32 0.0, %v1801
  %v1803 = vpop.f32.mrb[0].mxu0
  %v1804 = vpop.f32.mrb[0].mxu0
  %v1805 = vadd.f32 0.0, %v1804
  %v1806 = vpop.f32.mrb[0].mxu0
  %1807 = vmatprep.mubr.bf16.mxu0 0
  %1808 = vmatmul.mubr.bf16.gmra.mrb[0].mxu0 %v1004
  %v1809 = vpop.f32.mrb[0].mxu0
  %v1810 = vadd.f32 0.0, %v1809
  %v1811 = vpop.f32.mrb[0].mxu0
  %v1812 = vpop.f32.mrb[0].mxu0
  %v1813 = vadd.f32 0.0, %v1812
  %v1814 = vpop.f32.mrb[0].mxu0
  %1815 = vmatprep.mubr.bf16.mxu0 0
  %1816 = vmatmul.mubr.bf16.gmra.mrb[0].mxu0 %v1007
  %v1817 = vpop.f32.mrb[0].mxu0
  %v1818 = vadd.f32 0.0, %v1817
  %v1819 = vpop.f32.mrb[0].mxu0
  %v1820 = vpop.f32.mrb[0].mxu0
  %v1821 = vadd.f32 0.0, %v1820
  %v1822 = vpop.f32.mrb[0].mxu0
  %1823 = vmatprep.mubr.bf16.mxu0 0
  %1824 = vmatmul.mubr.bf16.gmra.mrb[0].mxu0 %v1010
  %v1825 = vpop.f32.mrb[0].mxu0
  %v1826 = vadd.f32 0.0, %v1825
  %v1827 = vpop.f32.mrb[0].mxu0
  %v1828 = vpop.f32.mrb[0].mxu0
  %v1829 = vadd.f32 0.0, %v1828
  %v1830 = vpop.f32.mrb[0].mxu0
  %1831 = vmatprep.mubr.bf16.mxu0 0
  %1832 = vmatmul.mubr.bf16.gmra.mrb[0].mxu0 %v1013
  %v1833 = vpop.f32.mrb[0].mxu0
  %v1834 = vadd.f32 0.0, %v1833
  %v1835 = vpop.f32.mrb[0].mxu0
  %v1836 = vpop.f32.mrb[0].mxu0
  %v1837 = vadd.f32 0.0, %v1836
  %v1838 = vpop.f32.mrb[0].mxu0
  %1839 = vmatprep.mubr.bf16.mxu0 0
  %1840 = vmatmul.mubr.bf16.gmra.mrb[0].mxu0 %v1016
  %v1841 = vpop.f32.mrb[0].mxu0
  %v1842 = vadd.f32 0.0, %v1841
  %v1843 = vpop.f32.mrb[0].mxu0
  %v1844 = vpop.f32.mrb[0].mxu0
  %v1845 = vadd.f32 0.0, %v1844
  %v1846 = vpop.f32.mrb[0].mxu0
  %1847 = vmatprep.mubr.bf16.mxu0 0
  %1848 = vmatmul.mubr.bf16.gmra.mrb[0].mxu0 %v1019
  %v1849 = vpop.f32.mrb[0].mxu0
  %v1850 = vadd.f32 0.0, %v1849
  %v1851 = vpop.f32.mrb[0].mxu0
  %v1852 = vpop.f32.mrb[0].mxu0
  %v1853 = vadd.f32 0.0, %v1852
  %v1854 = vpop.f32.mrb[0].mxu0
  %1855 = vmatprep.mubr.bf16.mxu0 0
  %1856 = vmatmul.mubr.bf16.gmra.mrb[0].mxu0 %v1022
  %v1857 = vpop.f32.mrb[0].mxu0
  %v1858 = vadd.f32 0.0, %v1857
  %v1859 = vpop.f32.mrb[0].mxu0
  %v1860 = vpop.f32.mrb[0].mxu0
  %v1861 = vadd.f32 0.0, %v1860
  %v1862 = vpop.f32.mrb[0].mxu0
  %1863 = vdwg.mxu0
  %v1865 = vlaneseq
  %v1866 = vshrl.u32 %v1865, 7
  %v1867 = vsub.s32 0, %v1866
  %v1868 = vrot.slane %v217, %v1867
  %v1870 = vadd.f32 %v1066, %v1868
  %v1871 = vadd.f32 %v1069, %v1868
  %v1872 = vadd.f32 %v1074, %v1868
  %v1873 = vadd.f32 %v1077, %v1868
  %v1874 = vadd.f32 %v1082, %v1868
  %v1875 = vadd.f32 %v1085, %v1868
  %v1876 = vadd.f32 %v1090, %v1868
  %v1877 = vadd.f32 %v1093, %v1868
  %v1878 = vadd.f32 %v1098, %v1868
  %v1879 = vadd.f32 %v1101, %v1868
  %v1880 = vadd.f32 %v1106, %v1868
  %v1881 = vadd.f32 %v1109, %v1868
  %v1882 = vadd.f32 %v1114, %v1868
  %v1883 = vadd.f32 %v1117, %v1868
  %v1884 = vadd.f32 %v1122, %v1868
  %v1885 = vadd.f32 %v1125, %v1868
  %v1886 = vadd.f32 %v1130, %v1868
  %v1887 = vadd.f32 %v1133, %v1868
  %v1888 = vadd.f32 %v1138, %v1868
  %v1889 = vadd.f32 %v1141, %v1868
  %v1890 = vadd.f32 %v1146, %v1868
  %v1891 = vadd.f32 %v1149, %v1868
  %v1892 = vadd.f32 %v1154, %v1868
  %v1893 = vadd.f32 %v1157, %v1868
  %v1894 = vadd.f32 %v1162, %v1868
  %v1895 = vadd.f32 %v1165, %v1868
  %v1896 = vadd.f32 %v1170, %v1868
  %v1897 = vadd.f32 %v1173, %v1868
  %v1898 = vadd.f32 %v1178, %v1868
  %v1899 = vadd.f32 %v1181, %v1868
  %v1900 = vadd.f32 %v1186, %v1868
  %v1901 = vadd.f32 %v1189, %v1868
  %v1902 = vadd.f32 %v1194, %v1868
  %v1903 = vadd.f32 %v1197, %v1868
  %v1904 = vadd.f32 %v1202, %v1868
  %v1905 = vadd.f32 %v1205, %v1868
  %v1906 = vadd.f32 %v1210, %v1868
  %v1907 = vadd.f32 %v1213, %v1868
  %v1908 = vadd.f32 %v1218, %v1868
  %v1909 = vadd.f32 %v1221, %v1868
  %v1910 = vadd.f32 %v1226, %v1868
  %v1911 = vadd.f32 %v1229, %v1868
  %v1912 = vadd.f32 %v1234, %v1868
  %v1913 = vadd.f32 %v1237, %v1868
  %v1914 = vadd.f32 %v1242, %v1868
  %v1915 = vadd.f32 %v1245, %v1868
  %v1916 = vadd.f32 %v1250, %v1868
  %v1917 = vadd.f32 %v1253, %v1868
  %v1918 = vadd.f32 %v1258, %v1868
  %v1919 = vadd.f32 %v1261, %v1868
  %v1920 = vadd.f32 %v1266, %v1868
  %v1921 = vadd.f32 %v1269, %v1868
  %v1922 = vadd.f32 %v1274, %v1868
  %v1923 = vadd.f32 %v1277, %v1868
  %v1924 = vadd.f32 %v1282, %v1868
  %v1925 = vadd.f32 %v1285, %v1868
  %v1926 = vadd.f32 %v1290, %v1868
  %v1927 = vadd.f32 %v1293, %v1868
  %v1928 = vadd.f32 %v1298, %v1868
  %v1929 = vadd.f32 %v1301, %v1868
  %v1930 = vadd.f32 %v1306, %v1868
  %v1931 = vadd.f32 %v1309, %v1868
  %v1932 = vadd.f32 %v1314, %v1868
  %v1933 = vadd.f32 %v1317, %v1868
  %v1934 = vadd.f32 %v1322, %v1868
  %v1935 = vadd.f32 %v1325, %v1868
  %v1936 = vadd.f32 %v1330, %v1868
  %v1937 = vadd.f32 %v1333, %v1868
  %v1938 = vadd.f32 %v1338, %v1868
  %v1939 = vadd.f32 %v1341, %v1868
  %v1940 = vadd.f32 %v1346, %v1868
  %v1941 = vadd.f32 %v1349, %v1868
  %v1942 = vadd.f32 %v1354, %v1868
  %v1943 = vadd.f32 %v1357, %v1868
  %v1944 = vadd.f32 %v1362, %v1868
  %v1945 = vadd.f32 %v1365, %v1868
  %v1946 = vadd.f32 %v1370, %v1868
  %v1947 = vadd.f32 %v1373, %v1868
  %v1948 = vadd.f32 %v1378, %v1868
  %v1949 = vadd.f32 %v1381, %v1868
  %v1950 = vadd.f32 %v1386, %v1868
  %v1951 = vadd.f32 %v1389, %v1868
  %v1952 = vadd.f32 %v1394, %v1868
  %v1953 = vadd.f32 %v1397, %v1868
  %v1954 = vadd.f32 %v1402, %v1868
  %v1955 = vadd.f32 %v1405, %v1868
  %v1956 = vadd.f32 %v1410, %v1868
  %v1957 = vadd.f32 %v1413, %v1868
  %v1958 = vadd.f32 %v1418, %v1868
  %v1959 = vadd.f32 %v1421, %v1868
  %v1960 = vadd.f32 %v1426, %v1868
  %v1961 = vadd.f32 %v1429, %v1868
  %v1962 = vadd.f32 %v1434, %v1868
  %v1963 = vadd.f32 %v1437, %v1868
  %v1964 = vadd.f32 %v1442, %v1868
  %v1965 = vadd.f32 %v1445, %v1868
  %v1966 = vadd.f32 %v1450, %v1868
  %v1967 = vadd.f32 %v1453, %v1868
  %v1968 = vadd.f32 %v1458, %v1868
  %v1969 = vadd.f32 %v1461, %v1868
  %v1970 = vadd.f32 %v1466, %v1868
  %v1971 = vadd.f32 %v1469, %v1868
  %v1972 = vadd.f32 %v1474, %v1868
  %v1973 = vadd.f32 %v1477, %v1868
  %v1974 = vadd.f32 %v1482, %v1868
  %v1975 = vadd.f32 %v1485, %v1868
  %v1976 = vadd.f32 %v1490, %v1868
  %v1977 = vadd.f32 %v1493, %v1868
  %v1978 = vadd.f32 %v1498, %v1868
  %v1979 = vadd.f32 %v1501, %v1868
  %v1980 = vadd.f32 %v1506, %v1868
  %v1981 = vadd.f32 %v1509, %v1868
  %v1982 = vadd.f32 %v1514, %v1868
  %v1983 = vadd.f32 %v1517, %v1868
  %v1984 = vadd.f32 %v1522, %v1868
  %v1985 = vadd.f32 %v1525, %v1868
  %v1986 = vadd.f32 %v1530, %v1868
  %v1987 = vadd.f32 %v1533, %v1868
  %v1988 = vadd.f32 %v1538, %v1868
  %v1989 = vadd.f32 %v1541, %v1868
  %v1990 = vadd.f32 %v1546, %v1868
  %v1991 = vadd.f32 %v1549, %v1868
  %v1992 = vadd.f32 %v1554, %v1868
  %v1993 = vadd.f32 %v1557, %v1868
  %v1994 = vadd.f32 %v1562, %v1868
  %v1995 = vadd.f32 %v1565, %v1868
  %v1996 = vadd.f32 %v1570, %v1868
  %v1997 = vadd.f32 %v1573, %v1868
  %v1998 = vadd.f32 %v1578, %v1868
  %v1999 = vadd.f32 %v1581, %v1868
  %v2000 = vadd.f32 %v1586, %v1868
  %v2001 = vadd.f32 %v1589, %v1868
  %v2002 = vadd.f32 %v1594, %v1868
  %v2003 = vadd.f32 %v1597, %v1868
  %v2004 = vadd.f32 %v1602, %v1868
  %v2005 = vadd.f32 %v1605, %v1868
  %v2006 = vadd.f32 %v1610, %v1868
  %v2007 = vadd.f32 %v1613, %v1868
  %v2008 = vadd.f32 %v1618, %v1868
  %v2009 = vadd.f32 %v1621, %v1868
  %v2010 = vadd.f32 %v1626, %v1868
  %v2011 = vadd.f32 %v1629, %v1868
  %v2012 = vadd.f32 %v1634, %v1868
  %v2013 = vadd.f32 %v1637, %v1868
  %v2014 = vadd.f32 %v1642, %v1868
  %v2015 = vadd.f32 %v1645, %v1868
  %v2016 = vadd.f32 %v1650, %v1868
  %v2017 = vadd.f32 %v1653, %v1868
  %v2018 = vadd.f32 %v1658, %v1868
  %v2019 = vadd.f32 %v1661, %v1868
  %v2020 = vadd.f32 %v1666, %v1868
  %v2021 = vadd.f32 %v1669, %v1868
  %v2022 = vadd.f32 %v1674, %v1868
  %v2023 = vadd.f32 %v1677, %v1868
  %v2024 = vadd.f32 %v1682, %v1868
  %v2025 = vadd.f32 %v1685, %v1868
  %v2026 = vadd.f32 %v1690, %v1868
  %v2027 = vadd.f32 %v1693, %v1868
  %v2028 = vadd.f32 %v1698, %v1868
  %v2029 = vadd.f32 %v1701, %v1868
  %v2030 = vadd.f32 %v1706, %v1868
  %v2031 = vadd.f32 %v1709, %v1868
  %v2032 = vadd.f32 %v1714, %v1868
  %v2033 = vadd.f32 %v1717, %v1868
  %v2034 = vadd.f32 %v1722, %v1868
  %v2035 = vadd.f32 %v1725, %v1868
  %v2036 = vadd.f32 %v1730, %v1868
  %v2037 = vadd.f32 %v1733, %v1868
  %v2038 = vadd.f32 %v1738, %v1868
  %v2039 = vadd.f32 %v1741, %v1868
  %v2040 = vadd.f32 %v1746, %v1868
  %v2041 = vadd.f32 %v1749, %v1868
  %v2042 = vadd.f32 %v1754, %v1868
  %v2043 = vadd.f32 %v1757, %v1868
  %v2044 = vadd.f32 %v1762, %v1868
  %v2045 = vadd.f32 %v1765, %v1868
  %v2046 = vadd.f32 %v1770, %v1868
  %v2047 = vadd.f32 %v1773, %v1868
  %v2048 = vadd.f32 %v1778, %v1868
  %v2049 = vadd.f32 %v1781, %v1868
  %v2050 = vadd.f32 %v1786, %v1868
  %v2051 = vadd.f32 %v1789, %v1868
  %v2052 = vadd.f32 %v1794, %v1868
  %v2053 = vadd.f32 %v1797, %v1868
  %v2054 = vadd.f32 %v1802, %v1868
  %v2055 = vadd.f32 %v1805, %v1868
  %v2056 = vadd.f32 %v1810, %v1868
  %v2057 = vadd.f32 %v1813, %v1868
  %v2058 = vadd.f32 %v1818, %v1868
  %v2059 = vadd.f32 %v1821, %v1868
  %v2060 = vadd.f32 %v1826, %v1868
  %v2061 = vadd.f32 %v1829, %v1868
  %v2062 = vadd.f32 %v1834, %v1868
  %v2063 = vadd.f32 %v1837, %v1868
  %v2064 = vadd.f32 %v1842, %v1868
  %v2065 = vadd.f32 %v1845, %v1868
  %v2066 = vadd.f32 %v1850, %v1868
  %v2067 = vadd.f32 %v1853, %v1868
  %v2068 = vadd.f32 %v1858, %v1868
  %v2069 = vadd.f32 %v1861, %v1868
  %v2070 = vmax.f32 %v1870, %v1920
  %v2071 = vmax.f32 %v2070, %v1970
  %v2072 = vmax.f32 %v2071, %v2020
  %v2073 = vmax.f32 %v1871, %v1921
  %v2074 = vmax.f32 %v2073, %v1971
  %v2075 = vmax.f32 %v2074, %v2021
  %v2076 = vmax.f32 %v1872, %v1922
  %v2077 = vmax.f32 %v2076, %v1972
  %v2078 = vmax.f32 %v2077, %v2022
  %v2079 = vmax.f32 %v1873, %v1923
  %v2080 = vmax.f32 %v2079, %v1973
  %v2081 = vmax.f32 %v2080, %v2023
  %v2082 = vmax.f32 %v1874, %v1924
  %v2083 = vmax.f32 %v2082, %v1974
  %v2084 = vmax.f32 %v2083, %v2024
  %v2085 = vmax.f32 %v1875, %v1925
  %v2086 = vmax.f32 %v2085, %v1975
  %v2087 = vmax.f32 %v2086, %v2025
  %v2088 = vmax.f32 %v1876, %v1926
  %v2089 = vmax.f32 %v2088, %v1976
  %v2090 = vmax.f32 %v2089, %v2026
  %v2091 = vmax.f32 %v1877, %v1927
  %v2092 = vmax.f32 %v2091, %v1977
  %v2093 = vmax.f32 %v2092, %v2027
  %v2094 = vmax.f32 %v1878, %v1928
  %v2095 = vmax.f32 %v2094, %v1978
  %v2096 = vmax.f32 %v2095, %v2028
  %v2097 = vmax.f32 %v1879, %v1929
  %v2098 = vmax.f32 %v2097, %v1979
  %v2099 = vmax.f32 %v2098, %v2029
  %v2100 = vmax.f32 %v1880, %v1930
  %v2101 = vmax.f32 %v2100, %v1980
  %v2102 = vmax.f32 %v2101, %v2030
  %v2103 = vmax.f32 %v1881, %v1931
  %v2104 = vmax.f32 %v2103, %v1981
  %v2105 = vmax.f32 %v2104, %v2031
  %v2106 = vmax.f32 %v1882, %v1932
  %v2107 = vmax.f32 %v2106, %v1982
  %v2108 = vmax.f32 %v2107, %v2032
  %v2109 = vmax.f32 %v1883, %v1933
  %v2110 = vmax.f32 %v2109, %v1983
  %v2111 = vmax.f32 %v2110, %v2033
  %v2112 = vmax.f32 %v1884, %v1934
  %v2113 = vmax.f32 %v2112, %v1984
  %v2114 = vmax.f32 %v2113, %v2034
  %v2115 = vmax.f32 %v1885, %v1935
  %v2116 = vmax.f32 %v2115, %v1985
  %v2117 = vmax.f32 %v2116, %v2035
  %v2118 = vmax.f32 %v1886, %v1936
  %v2119 = vmax.f32 %v2118, %v1986
  %v2120 = vmax.f32 %v2119, %v2036
  %v2121 = vmax.f32 %v1887, %v1937
  %v2122 = vmax.f32 %v2121, %v1987
  %v2123 = vmax.f32 %v2122, %v2037
  %v2124 = vmax.f32 %v1888, %v1938
  %v2125 = vmax.f32 %v2124, %v1988
  %v2126 = vmax.f32 %v2125, %v2038
  %v2127 = vmax.f32 %v1889, %v1939
  %v2128 = vmax.f32 %v2127, %v1989
  %v2129 = vmax.f32 %v2128, %v2039
  %v2130 = vmax.f32 %v1890, %v1940
  %v2131 = vmax.f32 %v2130, %v1990
  %v2132 = vmax.f32 %v2131, %v2040
  %v2133 = vmax.f32 %v1891, %v1941
  %v2134 = vmax.f32 %v2133, %v1991
  %v2135 = vmax.f32 %v2134, %v2041
  %v2136 = vmax.f32 %v1892, %v1942
  %v2137 = vmax.f32 %v2136, %v1992
  %v2138 = vmax.f32 %v2137, %v2042
  %v2139 = vmax.f32 %v1893, %v1943
  %v2140 = vmax.f32 %v2139, %v1993
  %v2141 = vmax.f32 %v2140, %v2043
  %v2142 = vmax.f32 %v1894, %v1944
  %v2143 = vmax.f32 %v2142, %v1994
  %v2144 = vmax.f32 %v2143, %v2044
  %v2145 = vmax.f32 %v1895, %v1945
  %v2146 = vmax.f32 %v2145, %v1995
  %v2147 = vmax.f32 %v2146, %v2045
  %v2148 = vmax.f32 %v1896, %v1946
  %v2149 = vmax.f32 %v2148, %v1996
  %v2150 = vmax.f32 %v2149, %v2046
  %v2151 = vmax.f32 %v1897, %v1947
  %v2152 = vmax.f32 %v2151, %v1997
  %v2153 = vmax.f32 %v2152, %v2047
  %v2154 = vmax.f32 %v1898, %v1948
  %v2155 = vmax.f32 %v2154, %v1998
  %v2156 = vmax.f32 %v2155, %v2048
  %v2157 = vmax.f32 %v1899, %v1949
  %v2158 = vmax.f32 %v2157, %v1999
  %v2159 = vmax.f32 %v2158, %v2049
  %v2160 = vmax.f32 %v1900, %v1950
  %v2161 = vmax.f32 %v2160, %v2000
  %v2162 = vmax.f32 %v2161, %v2050
  %v2163 = vmax.f32 %v1901, %v1951
  %v2164 = vmax.f32 %v2163, %v2001
  %v2165 = vmax.f32 %v2164, %v2051
  %v2166 = vmax.f32 %v1902, %v1952
  %v2167 = vmax.f32 %v2166, %v2002
  %v2168 = vmax.f32 %v2167, %v2052
  %v2169 = vmax.f32 %v1903, %v1953
  %v2170 = vmax.f32 %v2169, %v2003
  %v2171 = vmax.f32 %v2170, %v2053
  %v2172 = vmax.f32 %v1904, %v1954
  %v2173 = vmax.f32 %v2172, %v2004
  %v2174 = vmax.f32 %v2173, %v2054
  %v2175 = vmax.f32 %v1905, %v1955
  %v2176 = vmax.f32 %v2175, %v2005
  %v2177 = vmax.f32 %v2176, %v2055
  %v2178 = vmax.f32 %v1906, %v1956
  %v2179 = vmax.f32 %v2178, %v2006
  %v2180 = vmax.f32 %v2179, %v2056
  %v2181 = vmax.f32 %v1907, %v1957
  %v2182 = vmax.f32 %v2181, %v2007
  %v2183 = vmax.f32 %v2182, %v2057
  %v2184 = vmax.f32 %v1908, %v1958
  %v2185 = vmax.f32 %v2184, %v2008
  %v2186 = vmax.f32 %v2185, %v2058
  %v2187 = vmax.f32 %v1909, %v1959
  %v2188 = vmax.f32 %v2187, %v2009
  %v2189 = vmax.f32 %v2188, %v2059
  %v2190 = vmax.f32 %v1910, %v1960
  %v2191 = vmax.f32 %v2190, %v2010
  %v2192 = vmax.f32 %v2191, %v2060
  %v2193 = vmax.f32 %v1911, %v1961
  %v2194 = vmax.f32 %v2193, %v2011
  %v2195 = vmax.f32 %v2194, %v2061
  %v2196 = vmax.f32 %v1912, %v1962
  %v2197 = vmax.f32 %v2196, %v2012
  %v2198 = vmax.f32 %v2197, %v2062
  %v2199 = vmax.f32 %v1913, %v1963
  %v2200 = vmax.f32 %v2199, %v2013
  %v2201 = vmax.f32 %v2200, %v2063
  %v2202 = vmax.f32 %v1914, %v1964
  %v2203 = vmax.f32 %v2202, %v2014
  %v2204 = vmax.f32 %v2203, %v2064
  %v2205 = vmax.f32 %v1915, %v1965
  %v2206 = vmax.f32 %v2205, %v2015
  %v2207 = vmax.f32 %v2206, %v2065
  %v2208 = vmax.f32 %v1916, %v1966
  %v2209 = vmax.f32 %v2208, %v2016
  %v2210 = vmax.f32 %v2209, %v2066
  %v2211 = vmax.f32 %v1917, %v1967
  %v2212 = vmax.f32 %v2211, %v2017
  %v2213 = vmax.f32 %v2212, %v2067
  %v2214 = vmax.f32 %v1918, %v1968
  %v2215 = vmax.f32 %v2214, %v2018
  %v2216 = vmax.f32 %v2215, %v2068
  %v2217 = vmax.f32 %v1919, %v1969
  %v2218 = vmax.f32 %v2217, %v2019
  %v2219 = vmax.f32 %v2218, %v2069
  %v2220 = vmax.f32 %v2072, 0.0
  %v2221 = vmax.f32 %v2075, 0.0
  %v2222 = vmax.f32 %v2078, 0.0
  %v2223 = vmax.f32 %v2081, 0.0
  %v2224 = vmax.f32 %v2084, 0.0
  %v2225 = vmax.f32 %v2087, 0.0
  %v2226 = vmax.f32 %v2090, 0.0
  %v2227 = vmax.f32 %v2093, 0.0
  %v2228 = vmax.f32 %v2096, 0.0
  %v2229 = vmax.f32 %v2099, 0.0
  %v2230 = vmax.f32 %v2102, 0.0
  %v2231 = vmax.f32 %v2105, 0.0
  %v2232 = vmax.f32 %v2108, 0.0
  %v2233 = vmax.f32 %v2111, 0.0
  %v2234 = vmax.f32 %v2114, 0.0
  %v2235 = vmax.f32 %v2117, 0.0
  %v2236 = vmax.f32 %v2120, 0.0
  %v2237 = vmax.f32 %v2123, 0.0
  %v2238 = vmax.f32 %v2126, 0.0
  %v2239 = vmax.f32 %v2129, 0.0
  %v2240 = vmax.f32 %v2132, 0.0
  %v2241 = vmax.f32 %v2135, 0.0
  %v2242 = vmax.f32 %v2138, 0.0
  %v2243 = vmax.f32 %v2141, 0.0
  %v2244 = vmax.f32 %v2144, 0.0
  %v2245 = vmax.f32 %v2147, 0.0
  %v2246 = vmax.f32 %v2150, 0.0
  %v2247 = vmax.f32 %v2153, 0.0
  %v2248 = vmax.f32 %v2156, 0.0
  %v2249 = vmax.f32 %v2159, 0.0
  %v2250 = vmax.f32 %v2162, 0.0
  %v2251 = vmax.f32 %v2165, 0.0
  %v2252 = vmax.f32 %v2168, 0.0
  %v2253 = vmax.f32 %v2171, 0.0
  %v2254 = vmax.f32 %v2174, 0.0
  %v2255 = vmax.f32 %v2177, 0.0
  %v2256 = vmax.f32 %v2180, 0.0
  %v2257 = vmax.f32 %v2183, 0.0
  %v2258 = vmax.f32 %v2186, 0.0
  %v2259 = vmax.f32 %v2189, 0.0
  %v2260 = vmax.f32 %v2192, 0.0
  %v2261 = vmax.f32 %v2195, 0.0
  %v2262 = vmax.f32 %v2198, 0.0
  %v2263 = vmax.f32 %v2201, 0.0
  %v2264 = vmax.f32 %v2204, 0.0
  %v2265 = vmax.f32 %v2207, 0.0
  %v2266 = vmax.f32 %v2210, 0.0
  %v2267 = vmax.f32 %v2213, 0.0
  %v2268 = vmax.f32 %v2216, 0.0
  %v2269 = vmax.f32 %v2219, 0.0
  %2270 = vst [vmem:[%s3] sm:$0xff] %v2220
  %2271 = vst [vmem:[%s3 + $0x8] sm:$0xff] %v2221
  %2272 = vst [vmem:[%s3 + $0x10] sm:$0xff] %v2222
  %2273 = vst [vmem:[%s3 + $0x18] sm:$0xff] %v2223
  %2274 = vst [vmem:[%s3 + $0x20] sm:$0xff] %v2224
  %2275 = vst [vmem:[%s3 + $0x28] sm:$0xff] %v2225
  %2276 = vst [vmem:[%s3 + $0x30] sm:$0xff] %v2226
  %2277 = vst [vmem:[%s3 + $0x38] sm:$0xff] %v2227
  %2278 = vst [vmem:[%s3 + $0x40] sm:$0xff] %v2228
  %2279 = vst [vmem:[%s3 + $0x48] sm:$0xff] %v2229
  %2280 = vst [vmem:[%s3 + $0x50] sm:$0xff] %v2230
  %2281 = vst [vmem:[%s3 + $0x58] sm:$0xff] %v2231
  %2282 = vst [vmem:[%s3 + $0x60] sm:$0xff] %v2232
  %2283 = vst [vmem:[%s3 + $0x68] sm:$0xff] %v2233
  %2284 = vst [vmem:[%s3 + $0x70] sm:$0xff] %v2234
  %2285 = vst [vmem:[%s3 + $0x78] sm:$0xff] %v2235
  %2286 = vst [vmem:[%s3 + $0x80] sm:$0xff] %v2236
  %2287 = vst [vmem:[%s3 + $0x88] sm:$0xff] %v2237
  %2288 = vst [vmem:[%s3 + $0x90] sm:$0xff] %v2238
  %2289 = vst [vmem:[%s3 + $0x98] sm:$0xff] %v2239
  %2290 = vst [vmem:[%s3 + $0xa0] sm:$0xff] %v2240
  %2291 = vst [vmem:[%s3 + $0xa8] sm:$0xff] %v2241
  %2292 = vst [vmem:[%s3 + $0xb0] sm:$0xff] %v2242
  %2293 = vst [vmem:[%s3 + $0xb8] sm:$0xff] %v2243
  %2294 = vst [vmem:[%s3 + $0xc0] sm:$0xff] %v2244
  %2295 = vst [vmem:[%s3 + $0xc8] sm:$0xff] %v2245
  %2296 = vst [vmem:[%s3 + $0xd0] sm:$0xff] %v2246
  %2297 = vst [vmem:[%s3 + $0xd8] sm:$0xff] %v2247
  %2298 = vst [vmem:[%s3 + $0xe0] sm:$0xff] %v2248
  %2299 = vst [vmem:[%s3 + $0xe8] sm:$0xff] %v2249
  %2300 = vst [vmem:[%s3 + $0xf0] sm:$0xff] %v2250
  %2301 = vst [vmem:[%s3 + $0xf8] sm:$0xff] %v2251
  %2302 = vst [vmem:[%s3 + $0x100] sm:$0xff] %v2252
  %2303 = vst [vmem:[%s3 + $0x108] sm:$0xff] %v2253
  %2304 = vst [vmem:[%s3 + $0x110] sm:$0xff] %v2254
  %2305 = vst [vmem:[%s3 + $0x118] sm:$0xff] %v2255
  %2306 = vst [vmem:[%s3 + $0x120] sm:$0xff] %v2256
  %2307 = vst [vmem:[%s3 + $0x128] sm:$0xff] %v2257
  %2308 = vst [vmem:[%s3 + $0x130] sm:$0xff] %v2258
  %2309 = vst [vmem:[%s3 + $0x138] sm:$0xff] %v2259
  %2310 = vst [vmem:[%s3 + $0x140] sm:$0xff] %v2260
  %2311 = vst [vmem:[%s3 + $0x148] sm:$0xff] %v2261
  %2312 = vst [vmem:[%s3 + $0x150] sm:$0xff] %v2262
  %2313 = vst [vmem:[%s3 + $0x158] sm:$0xff] %v2263
  %2314 = vst [vmem:[%s3 + $0x160] sm:$0xff] %v2264
  %2315 = vst [vmem:[%s3 + $0x168] sm:$0xff] %v2265
  %2316 = vst [vmem:[%s3 + $0x170] sm:$0xff] %v2266
  %2317 = vst [vmem:[%s3 + $0x178] sm:$0xff] %v2267
  %2318 = vst [vmem:[%s3 + $0x180] sm:$0xff] %v2268
  %2319 = vst [vmem:[%s3 + $0x188] sm:$0xff] %v2269
  // Predicated region
  $region14: #{watermarked_forward.3} parent=0 // pred_check
    _
  $region15: #{watermarked_forward.3} parent=0 // pred_check_branch
    %2321 = sbr.rel (0) target = $region17
  $region16: #{watermarked_forward.3} parent=0 // pred_region
    _
  $region17: #{watermarked_forward.3} parent=0 // pred_fallthru
    _
  // Predicated region
  $region18: #{watermarked_forward.3} parent=0 // pred_check
    _
  $region19: #{watermarked_forward.3} parent=0 // pred_check_branch
    %2323 = sbr.rel (0) target = $region21
  $region20: #{watermarked_forward.3} parent=0 // pred_region
    _
  $region21: #{watermarked_forward.3} parent=0 // pred_fallthru
    _

// kernel: watermarked_forward.4
$region0: #{watermarked_forward.4}
  #allocation0 [shape = 'u32[]', space=smem, size = 0x4, offset = 0x4, fixed_abs, tag = 'smem constant byte address 0x4 - core index']
  #allocation1 [shape = 'u32[144,128]{1,0:T(1,128)}', space=vmem, size = 0x12000, scoped, tag = 'internal scratch']
  %s0 = inlined_call_operand.vmem [shape: bf16[4,64,150], index: 0, kind: input, shape index: {}]
  %s1 = inlined_call_operand.vmem [shape: bf16[150,128], index: 1, kind: input, shape index: {}]
  %s2 = inlined_call_operand.vmem [shape: f32[1,128], index: 2, kind: input, shape index: {}]
  %s3 = inlined_call_operand.vmem [shape: f32[64,128], index: 3, kind: output, shape index: {}]
  %s4 = sld [smem:[#allocation0]]
  $region22: #{watermarked_forward.4} parent=0
    _
  %s6 = ssub.s32 1, %s4
  %s7 = scalar_select 0, %s6, %s4
  // Predicated region
  $region2: #{watermarked_forward.4} parent=0 // pred_check
    _
  $region3: #{watermarked_forward.4} parent=0 // pred_check_branch
    %9 = sbr.rel (0) target = $region5
  $region4: #{watermarked_forward.4} parent=0 // pred_region
    _
  $region5: #{watermarked_forward.4} parent=0 // pred_fallthru
    _
  // Predicated region
  $region6: #{watermarked_forward.4} parent=0 // pred_check
    _
  $region7: #{watermarked_forward.4} parent=0 // pred_check_branch
    %11 = sbr.rel (0) target = $region9
  $region8: #{watermarked_forward.4} parent=0 // pred_region
    _
  $region9: #{watermarked_forward.4} parent=0 // pred_fallthru
    _
  // Predicated region
  $region10: #{watermarked_forward.4} parent=0 // pred_check
    _
  $region11: #{watermarked_forward.4} parent=0 // pred_check_branch
    %13 = sbr.rel (0) target = $region13
  $region12: #{watermarked_forward.4} parent=0 // pred_region
    _
  $region13: #{watermarked_forward.4} parent=0 // pred_fallthru
    _
  %v15 = vld [vmem:[%s0] sm:$0xff]
  %v16 = vld [vmem:[%s0 + $0x8] sm:$0xff]
  %v17 = vld [vmem:[%s0 + $0x10] sm:$0xff]
  %v18 = vld [vmem:[%s0 + $0x18] sm:$0xff]
  %v19 = vld [vmem:[%s0 + $0x20] sm:$0xff]
  %v20 = vld [vmem:[%s0 + $0x28] sm:$0xff]
  %v21 = vld [vmem:[%s0 + $0x30] sm:$0xff]
  %v22 = vld [vmem:[%s0 + $0x38] sm:$0xff]
  %v23 = vld [vmem:[%s0 + $0x40] sm:$0xff]
  %v24 = vld [vmem:[%s0 + $0x48] sm:$0xff]
  %v25 = vld [vmem:[%s0 + $0x50] sm:$0xff]
  %v26 = vld [vmem:[%s0 + $0x58] sm:$0xff]
  %v27 = vld [vmem:[%s0 + $0x60] sm:$0xff]
  %v28 = vld [vmem:[%s0 + $0x68] sm:$0xff]
  %v29 = vld [vmem:[%s0 + $0x70] sm:$0xff]
  %v30 = vld [vmem:[%s0 + $0x78] sm:$0xff]
  %v31 = vld [vmem:[%s0 + $0x80] sm:$0xff]
  %v32 = vld [vmem:[%s0 + $0x88] sm:$0xff]
  %v33 = vld [vmem:[%s0 + $0x90] sm:$0xff]
  %v34 = vld [vmem:[%s0 + $0x98] sm:$0xff]
  %v35 = vld [vmem:[%s0 + $0xa0] sm:$0xff]
  %v36 = vld [vmem:[%s0 + $0xa8] sm:$0xff]
  %v37 = vld [vmem:[%s0 + $0xb0] sm:$0xff]
  %v38 = vld [vmem:[%s0 + $0xb8] sm:$0xff]
  %v39 = vld [vmem:[%s0 + $0xc0] sm:$0xff]
  %v40 = vld [vmem:[%s0 + $0xc8] sm:$0xff]
  %v41 = vld [vmem:[%s0 + $0xd0] sm:$0xff]
  %v42 = vld [vmem:[%s0 + $0xd8] sm:$0xff]
  %v43 = vld [vmem:[%s0 + $0xe0] sm:$0xff]
  %v44 = vld [vmem:[%s0 + $0xe8] sm:$0xff]
  %v45 = vld [vmem:[%s0 + $0xf0] sm:$0xff]
  %v46 = vld [vmem:[%s0 + $0xf8] sm:$0xff]
  %v47 = vld [vmem:[%s1] sm:$0xf]
  %v48 = vld [vmem:[%s1 + $0x4] sm:$0xf]
  %v49 = vld [vmem:[%s1 + $0x8] sm:$0xf]
  %v50 = vld [vmem:[%s1 + $0xc] sm:$0xf]
  %v51 = vld [vmem:[%s1 + $0x10] sm:$0xf]
  %v52 = vld [vmem:[%s1 + $0x14] sm:$0xf]
  %v53 = vld [vmem:[%s1 + $0x18] sm:$0xf]
  %v54 = vld [vmem:[%s1 + $0x1c] sm:$0xf]
  %v55 = vld [vmem:[%s1 + $0x20] sm:$0xf]
  %v56 = vld [vmem:[%s1 + $0x24] sm:$0xf]
  %v57 = vld [vmem:[%s1 + $0x28] sm:$0xf]
  %v58 = vld [vmem:[%s1 + $0x2c] sm:$0xf]
  %v59 = vld [vmem:[%s1 + $0x30] sm:$0xf]
  %v60 = vld [vmem:[%s1 + $0x34] sm:$0xf]
  %v61 = vld [vmem:[%s1 + $0x38] sm:$0xf]
  %v62 = vld [vmem:[%s1 + $0x3c] sm:$0xf]
  %v63 = vld [vmem:[%s1 + $0x40] sm:$0xf]
  %v64 = vld [vmem:[%s1 + $0x44] sm:$0xf]
  %v65 = vld [vmem:[%s1 + $0x48] sm:$0x7]
  %v66 = vld [vmem:[%s2] sm:$0x1]
  %v99 = vunpack.c.l.b16 %v15
  %v100 = vunpack.c.h.b16 %v15
  %v101 = vunpack.c.l.b16 %v16
  %v102 = vunpack.c.h.b16 %v16
  %v103 = vunpack.c.l.b16 %v17
  %v104 = vunpack.c.h.b16 %v17
  %v105 = vunpack.c.l.b16 %v18
  %v106 = vunpack.c.h.b16 %v18
  %v107 = vunpack.c.l.b16 %v19
  %v108 = vunpack.c.h.b16 %v19
  %v109 = vunpack.c.l.b16 %v20
  %v110 = vunpack.c.h.b16 %v20
  %v111 = vunpack.c.l.b16 %v21
  %v112 = vunpack.c.h.b16 %v21
  %v113 = vunpack.c.l.b16 %v22
  %v114 = vunpack.c.h.b16 %v22
  %v115 = vunpack.c.l.b16 %v23
  %v116 = vunpack.c.h.b16 %v23
  %v117 = vunpack.c.l.b16 %v24
  %v118 = vunpack.c.h.b16 %v24
  %v119 = vunpack.c.l.b16 %v25
  %v120 = vunpack.c.h.b16 %v25
  %v121 = vunpack.c.l.b16 %v26
  %v122 = vunpack.c.h.b16 %v26
  %v123 = vunpack.c.l.b16 %v27
  %v124 = vunpack.c.h.b16 %v27
  %v125 = vunpack.c.l.b16 %v28
  %v126 = vunpack.c.h.b16 %v28
  %v127 = vunpack.c.l.b16 %v29
  %v128 = vunpack.c.h.b16 %v29
  %v129 = vunpack.c.l.b16 %v30
  %v130 = vunpack.c.h.b16 %v30
  %v131 = vunpack.c.l.b16 %v31
  %v132 = vunpack.c.h.b16 %v31
  %v133 = vunpack.c.l.b16 %v32
  %v134 = vunpack.c.h.b16 %v32
  %v135 = vunpack.c.l.b16 %v33
  %v136 = vunpack.c.h.b16 %v33
  %v137 = vunpack.c.l.b16 %v34
  %v138 = vunpack.c.h.b16 %v34
  %v139 = vunpack.c.l.b16 %v35
  %v140 = vunpack.c.h.b16 %v35
  %v141 = vunpack.c.l.b16 %v36
  %v142 = vunpack.c.h.b16 %v36
  %v143 = vunpack.c.l.b16 %v37
  %v144 = vunpack.c.h.b16 %v37
  %v145 = vunpack.c.l.b16 %v38
  %v146 = vunpack.c.h.b16 %v38
  %v147 = vunpack.c.l.b16 %v39
  %v148 = vunpack.c.h.b16 %v39
  %v149 = vunpack.c.l.b16 %v40
  %v150 = vunpack.c.h.b16 %v40
  %v151 = vunpack.c.l.b16 %v41
  %v152 = vunpack.c.h.b16 %v41
  %v153 = vunpack.c.l.b16 %v42
  %v154 = vunpack.c.h.b16 %v42
  %v155 = vunpack.c.l.b16 %v43
  %v156 = vunpack.c.h.b16 %v43
  %v157 = vunpack.c.l.b16 %v44
  %v158 = vunpack.c.h.b16 %v44
  %v159 = vunpack.c.l.b16 %v45
  %v160 = vunpack.c.h.b16 %v45
  %v161 = vunpack.c.l.b16 %v46
  %v162 = vunpack.c.h.b16 %v46
  %v163 = vpack.c.b16 %v101, %v99
  %v164 = vpack.c.b16 %v102, %v100
  %v165 = vpack.c.b16 %v105, %v103
  %v166 = vpack.c.b16 %v106, %v104
  %v167 = vpack.c.b16 %v109, %v107
  %v168 = vpack.c.b16 %v110, %v108
  %v169 = vpack.c.b16 %v113, %v111
  %v170 = vpack.c.b16 %v114, %v112
  %v171 = vpack.c.b16 %v117, %v115
  %v172 = vpack.c.b16 %v118, %v116
  %v173 = vpack.c.b16 %v121, %v119
  %v174 = vpack.c.b16 %v122, %v120
  %v175 = vpack.c.b16 %v125, %v123
  %v176 = vpack.c.b16 %v126, %v124
  %v177 = vpack.c.b16 %v129, %v127
  %v178 = vpack.c.b16 %v130, %v128
  %v179 = vpack.c.b16 %v133, %v131
  %v180 = vpack.c.b16 %v134, %v132
  %v181 = vpack.c.b16 %v137, %v135
  %v182 = vpack.c.b16 %v138, %v136
  %v183 = vpack.c.b16 %v141, %v139
  %v184 = vpack.c.b16 %v142, %v140
  %v185 = vpack.c.b16 %v145, %v143
  %v186 = vpack.c.b16 %v146, %v144
  %v187 = vpack.c.b16 %v149, %v147
  %v188 = vpack.c.b16 %v150, %v148
  %v189 = vpack.c.b16 %v153, %v151
  %v190 = vpack.c.b16 %v154, %v152
  %v191 = vpack.c.b16 %v157, %v155
  %v192 = vpack.c.b16 %v158, %v156
  %v193 = vpack.c.b16 %v161, %v159
  %v194 = vpack.c.b16 %v162, %v160
  %v230 = vunpack.c.l.b16 %v47
  %v231 = vunpack.c.l.b16 %v48
  %v232 = vunpack.c.l.b16 %v49
  %v233 = vunpack.c.l.b16 %v50
  %v234 = vunpack.c.l.b16 %v51
  %v235 = vunpack.c.l.b16 %v52
  %v236 = vunpack.c.l.b16 %v53
  %v237 = vunpack.c.l.b16 %v54
  %v238 = vunpack.c.l.b16 %v55
  %v239 = vunpack.c.l.b16 %v56
  %v240 = vunpack.c.l.b16 %v57
  %v241 = vunpack.c.l.b16 %v58
  %v242 = vunpack.c.l.b16 %v59
  %v243 = vunpack.c.l.b16 %v60
  %v244 = vunpack.c.l.b16 %v61
  %v245 = vunpack.c.l.b16 %v62
  %v246 = vunpack.c.l.b16 %v63
  %v247 = vunpack.c.l.b16 %v64
  %v248 = vunpack.c.l.b16 %v65
  %v249 = vpack.c.b16 %v231, %v230
  %v250 = vpack.c.b16 %v233, %v232
  %v251 = vpack.c.b16 %v235, %v234
  %v252 = vpack.c.b16 %v237, %v236
  %v253 = vpack.c.b16 %v239, %v238
  %v254 = vpack.c.b16 %v241, %v240
  %v255 = vpack.c.b16 %v243, %v242
  %v256 = vpack.c.b16 %v245, %v244
  %v257 = vpack.c.b16 %v247, %v246
  %v258 = vpack.c.b16 %v248, %v248
  %vm268 = vcmask 179200
  %v270 = vsel %vm268, %v164, 0
  %v273 = vsel %vm268, %v166, 0
  %v276 = vsel %vm268, %v168, 0
  %v279 = vsel %vm268, %v170, 0
  %v282 = vsel %vm268, %v172, 0
  %v285 = vsel %vm268, %v174, 0
  %v288 = vsel %vm268, %v176, 0
  %v291 = vsel %vm268, %v178, 0
  %v294 = vsel %vm268, %v180, 0
  %v297 = vsel %vm268, %v182, 0
  %v300 = vsel %vm268, %v184, 0
  %v303 = vsel %vm268, %v186, 0
  %v306 = vsel %vm268, %v188, 0
  %v309 = vsel %vm268, %v190, 0
  %v312 = vsel %vm268, %v192, 0
  %v315 = vsel %vm268, %v194, 0
  %vm317 = vcmask 1042432
  %v319 = vsel %vm317, %v258, 0
  %321 = vmatprep.subr.bf16.mxu0 0
  %322 = vmatpush1.bf16.msra.mxu0 %v249
  %323 = vmatprep.subr.bf16.mxu0 0
  %324 = vmatpush1.bf16.msra.mxu0 %v250
  %325 = vmatprep.subr.bf16.mxu0 0
  %326 = vmatpush1.bf16.msra.mxu0 %v251
  %327 = vmatprep.subr.bf16.mxu0 0
  %328 = vmatpush1.bf16.msra.mxu0 %v252
  %329 = vmatprep.subr.bf16.mxu0 0
  %330 = vmatpush1.bf16.msra.mxu0 %v253
  %331 = vmatprep.subr.bf16.mxu0 0
  %332 = vmatpush1.bf16.msra.mxu0 %v254
  %333 = vmatprep.subr.bf16.mxu0 0
  %334 = vmatpush1.bf16.msra.mxu0 %v255
  %335 = vmatprep.subr.bf16.mxu0 0
  %336 = vmatpush1.bf16.msra.mxu0 %v256
  %337 = vmatprep.subr.bf16.mxu0 0
  %338 = vmatpush1.bf16.msra.mxu0 %v257
  %339 = vmatprep.subr.bf16.mxu0 0
  %340 = vmatpush1.bf16.msra.mxu0 %v319
  %341 = vmatprep.subr.bf16.mxu0 0
  %342 = vmatpush1.bf16.msra.mxu0 0
  %343 = vmatprep.subr.bf16.mxu0 0
  %344 = vmatpush1.bf16.msra.mxu0 0
  %345 = vmatprep.subr.bf16.mxu0 0
  %346 = vmatpush1.bf16.msra.mxu0 0
  %347 = vmatprep.subr.bf16.mxu0 0
  %348 = vmatpush1.bf16.msra.mxu0 0
  %349 = vmatprep.subr.bf16.mxu0 0
  %350 = vmatpush1.bf16.msra.mxu0 0
  %351 = vmatprep.subr.bf16.mxu0 0
  %352 = vmatpush1.bf16.msra.mxu0 0
  %353 = vmatprep.mubr.bf16.mxu0 %v270
  %354 = vmatmul.mubr.bf16.gmra.mrb[0].mxu0 %v163
  %v355 = vpop.f32.mrb[0].mxu0
  %v356 = vadd.f32 0.0, %v355
  %v357 = vpop.f32.mrb[0].mxu0
  %v358 = vpop.f32.mrb[0].mxu0
  %v359 = vadd.f32 0.0, %v358
  %v360 = vpop.f32.mrb[0].mxu0
  %361 = vmatprep.mubr.bf16.mxu0 %v273
  %362 = vmatmul.mubr.bf16.gmra.mrb[0].mxu0 %v165
  %v363 = vpop.f32.mrb[0].mxu0
  %v364 = vadd.f32 0.0, %v363
  %v365 = vpop.f32.mrb[0].mxu0
  %v366 = vpop.f32.mrb[0].mxu0
  %v367 = vadd.f32 0.0, %v366
  %v368 = vpop.f32.mrb[0].mxu0
  %369 = vmatprep.mubr.bf16.mxu0 %v276
  %370 = vmatmul.mubr.bf16.gmra.mrb[0].mxu0 %v167
  %v371 = vpop.f32.mrb[0].mxu0
  %v372 = vadd.f32 0.0, %v371
  %v373 = vpop.f32.mrb[0].mxu0
  %v374 = vpop.f32.mrb[0].mxu0
  %v375 = vadd.f32 0.0, %v374
  %v376 = vpop.f32.mrb[0].mxu0
  %377 = vmatprep.mubr.bf16.mxu0 %v279
  %378 = vmatmul.mubr.bf16.gmra.mrb[0].mxu0 %v169
  %v379 = vpop.f32.mrb[0].mxu0
  %v380 = vadd.f32 0.0, %v379
  %v381 = vpop.f32.mrb[0].mxu0
  %v382 = vpop.f32.mrb[0].mxu0
  %v383 = vadd.f32 0.0, %v382
  %v384 = vpop.f32.mrb[0].mxu0
  %385 = vmatprep.mubr.bf16.mxu0 %v282
  %386 = vmatmul.mubr.bf16.gmra.mrb[0].mxu0 %v171
  %v387 = vpop.f32.mrb[0].mxu0
  %v388 = vadd.f32 0.0, %v387
  %v389 = vpop.f32.mrb[0].mxu0
  %v390 = vpop.f32.mrb[0].mxu0
  %v391 = vadd.f32 0.0, %v390
  %v392 = vpop.f32.mrb[0].mxu0
  %393 = vmatprep.mubr.bf16.mxu0 %v285
  %394 = vmatmul.mubr.bf16.gmra.mrb[0].mxu0 %v173
  %v395 = vpop.f32.mrb[0].mxu0
  %v396 = vadd.f32 0.0, %v395
  %v397 = vpop.f32.mrb[0].mxu0
  %v398 = vpop.f32.mrb[0].mxu0
  %v399 = vadd.f32 0.0, %v398
  %v400 = vpop.f32.mrb[0].mxu0
  %401 = vmatprep.mubr.bf16.mxu0 %v288
  %402 = vmatmul.mubr.bf16.gmra.mrb[0].mxu0 %v175
  %v403 = vpop.f32.mrb[0].mxu0
  %v404 = vadd.f32 0.0, %v403
  %v405 = vpop.f32.mrb[0].mxu0
  %v406 = vpop.f32.mrb[0].mxu0
  %v407 = vadd.f32 0.0, %v406
  %v408 = vpop.f32.mrb[0].mxu0
  %409 = vmatprep.mubr.bf16.mxu0 %v291
  %410 = vmatmul.mubr.bf16.gmra.mrb[0].mxu0 %v177
  %v411 = vpop.f32.mrb[0].mxu0
  %v412 = vadd.f32 0.0, %v411
  %v413 = vpop.f32.mrb[0].mxu0
  %v414 = vpop.f32.mrb[0].mxu0
  %v415 = vadd.f32 0.0, %v414
  %v416 = vpop.f32.mrb[0].mxu0
  %417 = vmatprep.mubr.bf16.mxu0 %v294
  %418 = vmatmul.mubr.bf16.gmra.mrb[0].mxu0 %v179
  %v419 = vpop.f32.mrb[0].mxu0
  %v420 = vadd.f32 0.0, %v419
  %v421 = vpop.f32.mrb[0].mxu0
  %v422 = vpop.f32.mrb[0].mxu0
  %v423 = vadd.f32 0.0, %v422
  %v424 = vpop.f32.mrb[0].mxu0
  %425 = vmatprep.mubr.bf16.mxu0 %v297
  %426 = vmatmul.mubr.bf16.gmra.mrb[0].mxu0 %v181
  %v427 = vpop.f32.mrb[0].mxu0
  %v428 = vadd.f32 0.0, %v427
  %v429 = vpop.f32.mrb[0].mxu0
  %v430 = vpop.f32.mrb[0].mxu0
  %v431 = vadd.f32 0.0, %v430
  %v432 = vpop.f32.mrb[0].mxu0
  %433 = vmatprep.mubr.bf16.mxu0 %v300
  %434 = vmatmul.mubr.bf16.gmra.mrb[0].mxu0 %v183
  %v435 = vpop.f32.mrb[0].mxu0
  %v436 = vadd.f32 0.0, %v435
  %v437 = vpop.f32.mrb[0].mxu0
  %v438 = vpop.f32.mrb[0].mxu0
  %v439 = vadd.f32 0.0, %v438
  %v440 = vpop.f32.mrb[0].mxu0
  %441 = vmatprep.mubr.bf16.mxu0 %v303
  %442 = vmatmul.mubr.bf16.gmra.mrb[0].mxu0 %v185
  %v443 = vpop.f32.mrb[0].mxu0
  %v444 = vadd.f32 0.0, %v443
  %v445 = vpop.f32.mrb[0].mxu0
  %v446 = vpop.f32.mrb[0].mxu0
  %v447 = vadd.f32 0.0, %v446
  %v448 = vpop.f32.mrb[0].mxu0
  %449 = vmatprep.mubr.bf16.mxu0 %v306
  %450 = vmatmul.mubr.bf16.gmra.mrb[0].mxu0 %v187
  %v451 = vpop.f32.mrb[0].mxu0
  %v452 = vadd.f32 0.0, %v451
  %v453 = vpop.f32.mrb[0].mxu0
  %v454 = vpop.f32.mrb[0].mxu0
  %v455 = vadd.f32 0.0, %v454
  %v456 = vpop.f32.mrb[0].mxu0
  %457 = vmatprep.mubr.bf16.mxu0 %v309
  %458 = vmatmul.mubr.bf16.gmra.mrb[0].mxu0 %v189
  %v459 = vpop.f32.mrb[0].mxu0
  %v460 = vadd.f32 0.0, %v459
  %v461 = vpop.f32.mrb[0].mxu0
  %v462 = vpop.f32.mrb[0].mxu0
  %v463 = vadd.f32 0.0, %v462
  %v464 = vpop.f32.mrb[0].mxu0
  %465 = vmatprep.mubr.bf16.mxu0 %v312
  %466 = vmatmul.mubr.bf16.gmra.mrb[0].mxu0 %v191
  %v467 = vpop.f32.mrb[0].mxu0
  %v468 = vadd.f32 0.0, %v467
  %v469 = vpop.f32.mrb[0].mxu0
  %v470 = vpop.f32.mrb[0].mxu0
  %v471 = vadd.f32 0.0, %v470
  %v472 = vpop.f32.mrb[0].mxu0
  %473 = vmatprep.mubr.bf16.mxu0 %v315
  %474 = vmatmul.mubr.bf16.gmra.mrb[0].mxu0 %v193
  %v475 = vpop.f32.mrb[0].mxu0
  %v476 = vadd.f32 0.0, %v475
  %v477 = vpop.f32.mrb[0].mxu0
  %v478 = vpop.f32.mrb[0].mxu0
  %v479 = vadd.f32 0.0, %v478
  %v480 = vpop.f32.mrb[0].mxu0
  %481 = vdwg.mxu0
  %v483 = vlaneseq
  %v484 = vshrl.u32 %v483, 7
  %v485 = vsub.s32 0, %v484
  %v486 = vrot.slane %v66, %v485
  %v488 = vadd.f32 %v356, %v486
  %v489 = vadd.f32 %v359, %v486
  %v490 = vadd.f32 %v364, %v486
  %v491 = vadd.f32 %v367, %v486
  %v492 = vadd.f32 %v372, %v486
  %v493 = vadd.f32 %v375, %v486
  %v494 = vadd.f32 %v380, %v486
  %v495 = vadd.f32 %v383, %v486
  %v496 = vadd.f32 %v388, %v486
  %v497 = vadd.f32 %v391, %v486
  %v498 = vadd.f32 %v396, %v486
  %v499 = vadd.f32 %v399, %v486
  %v500 = vadd.f32 %v404, %v486
  %v501 = vadd.f32 %v407, %v486
  %v502 = vadd.f32 %v412, %v486
  %v503 = vadd.f32 %v415, %v486
  %v504 = vadd.f32 %v420, %v486
  %v505 = vadd.f32 %v423, %v486
  %v506 = vadd.f32 %v428, %v486
  %v507 = vadd.f32 %v431, %v486
  %v508 = vadd.f32 %v436, %v486
  %v509 = vadd.f32 %v439, %v486
  %v510 = vadd.f32 %v444, %v486
  %v511 = vadd.f32 %v447, %v486
  %v512 = vadd.f32 %v452, %v486
  %v513 = vadd.f32 %v455, %v486
  %v514 = vadd.f32 %v460, %v486
  %v515 = vadd.f32 %v463, %v486
  %v516 = vadd.f32 %v468, %v486
  %v517 = vadd.f32 %v471, %v486
  %v518 = vadd.f32 %v476, %v486
  %v519 = vadd.f32 %v479, %v486
  %v520 = vmax.f32 %v488, %v496
  %v521 = vmax.f32 %v520, %v504
  %v522 = vmax.f32 %v521, %v512
  %v523 = vmax.f32 %v489, %v497
  %v524 = vmax.f32 %v523, %v505
  %v525 = vmax.f32 %v524, %v513
  %v526 = vmax.f32 %v490, %v498
  %v527 = vmax.f32 %v526, %v506
  %v528 = vmax.f32 %v527, %v514
  %v529 = vmax.f32 %v491, %v499
  %v530 = vmax.f32 %v529, %v507
  %v531 = vmax.f32 %v530, %v515
  %v532 = vmax.f32 %v492, %v500
  %v533 = vmax.f32 %v532, %v508
  %v534 = vmax.f32 %v533, %v516
  %v535 = vmax.f32 %v493, %v501
  %v536 = vmax.f32 %v535, %v509
  %v537 = vmax.f32 %v536, %v517
  %v538 = vmax.f32 %v494, %v502
  %v539 = vmax.f32 %v538, %v510
  %v540 = vmax.f32 %v539, %v518
  %v541 = vmax.f32 %v495, %v503
  %v542 = vmax.f32 %v541, %v511
  %v543 = vmax.f32 %v542, %v519
  %v544 = vmax.f32 %v522, 0.0
  %v545 = vmax.f32 %v525, 0.0
  %v546 = vmax.f32 %v528, 0.0
  %v547 = vmax.f32 %v531, 0.0
  %v548 = vmax.f32 %v534, 0.0
  %v549 = vmax.f32 %v537, 0.0
  %v550 = vmax.f32 %v540, 0.0
  %v551 = vmax.f32 %v543, 0.0
  %552 = vst [vmem:[%s3] sm:$0xff] %v544
  %553 = vst [vmem:[%s3 + $0x8] sm:$0xff] %v545
  %554 = vst [vmem:[%s3 + $0x10] sm:$0xff] %v546
  %555 = vst [vmem:[%s3 + $0x18] sm:$0xff] %v547
  %556 = vst [vmem:[%s3 + $0x20] sm:$0xff] %v548
  %557 = vst [vmem:[%s3 + $0x28] sm:$0xff] %v549
  %558 = vst [vmem:[%s3 + $0x30] sm:$0xff] %v550
  %559 = vst [vmem:[%s3 + $0x38] sm:$0xff] %v551
  // Predicated region
  $region14: #{watermarked_forward.4} parent=0 // pred_check
    _
  $region15: #{watermarked_forward.4} parent=0 // pred_check_branch
    %561 = sbr.rel (0) target = $region17
  $region16: #{watermarked_forward.4} parent=0 // pred_region
    _
  $region17: #{watermarked_forward.4} parent=0 // pred_fallthru
    _
  // Predicated region
  $region18: #{watermarked_forward.4} parent=0 // pred_check
    _
  $region19: #{watermarked_forward.4} parent=0 // pred_check_branch
    %563 = sbr.rel (0) target = $region21
  $region20: #{watermarked_forward.4} parent=0 // pred_region
    _
  $region21: #{watermarked_forward.4} parent=0 // pred_fallthru
    _

// kernel: watermarked_forward.5
$region0: #{watermarked_forward.5}
  #allocation0 [shape = 'u32[]', space=smem, size = 0x4, offset = 0x4, fixed_abs, tag = 'smem constant byte address 0x4 - core index']
  #allocation1 [shape = 'u32[144,128]{1,0:T(1,128)}', space=vmem, size = 0x12000, scoped, tag = 'internal scratch']
  %s0 = inlined_call_operand.vmem [shape: bf16[16,400], index: 0, kind: input, shape index: {}]
  %s1 = inlined_call_operand.vmem [shape: bf16[400,128], index: 1, kind: input, shape index: {}]
  %s2 = inlined_call_operand.vmem [shape: f32[1,128], index: 2, kind: input, shape index: {}]
  %s3 = inlined_call_operand.vmem [shape: bf16[128,128], index: 3, kind: input, shape index: {}]
  %s4 = inlined_call_operand.vmem [shape: f32[1,128], index: 4, kind: input, shape index: {}]
  %s5 = inlined_call_operand.vmem [shape: bf16[128,128], index: 5, kind: input, shape index: {}]
  %s6 = inlined_call_operand.vmem [shape: f32[1,128], index: 6, kind: input, shape index: {}]
  %s7 = inlined_call_operand.vmem [shape: f32[16,128], index: 7, kind: output, shape index: {}]
  %s8 = sld [smem:[#allocation0]]
  $region38: #{watermarked_forward.5} parent=0
    _
  %s10 = ssub.s32 1, %s8
  %s11 = scalar_select 0, %s10, %s8
  // Predicated region
  $region2: #{watermarked_forward.5} parent=0 // pred_check
    _
  $region3: #{watermarked_forward.5} parent=0 // pred_check_branch
    %13 = sbr.rel (0) target = $region5
  $region4: #{watermarked_forward.5} parent=0 // pred_region
    _
  $region5: #{watermarked_forward.5} parent=0 // pred_fallthru
    _
  // Predicated region
  $region6: #{watermarked_forward.5} parent=0 // pred_check
    _
  $region7: #{watermarked_forward.5} parent=0 // pred_check_branch
    %15 = sbr.rel (0) target = $region9
  $region8: #{watermarked_forward.5} parent=0 // pred_region
    _
  $region9: #{watermarked_forward.5} parent=0 // pred_fallthru
    _
  // Predicated region
  $region10: #{watermarked_forward.5} parent=0 // pred_check
    _
  $region11: #{watermarked_forward.5} parent=0 // pred_check_branch
    %17 = sbr.rel (0) target = $region13
  $region12: #{watermarked_forward.5} parent=0 // pred_region
    _
  $region13: #{watermarked_forward.5} parent=0 // pred_fallthru
    _
  // Predicated region
  $region14: #{watermarked_forward.5} parent=0 // pred_check
    _
  $region15: #{watermarked_forward.5} parent=0 // pred_check_branch
    %19 = sbr.rel (0) target = $region17
  $region16: #{watermarked_forward.5} parent=0 // pred_region
    _
  $region17: #{watermarked_forward.5} parent=0 // pred_fallthru
    _
  // Predicated region
  $region18: #{watermarked_forward.5} parent=0 // pred_check
    _
  $region19: #{watermarked_forward.5} parent=0 // pred_check_branch
    %21 = sbr.rel (0) target = $region21
  $region20: #{watermarked_forward.5} parent=0 // pred_region
    _
  $region21: #{watermarked_forward.5} parent=0 // pred_fallthru
    _
  // Predicated region
  $region22: #{watermarked_forward.5} parent=0 // pred_check
    _
  $region23: #{watermarked_forward.5} parent=0 // pred_check_branch
    %23 = sbr.rel (0) target = $region25
  $region24: #{watermarked_forward.5} parent=0 // pred_region
    _
  $region25: #{watermarked_forward.5} parent=0 // pred_fallthru
    _
  // Predicated region
  $region26: #{watermarked_forward.5} parent=0 // pred_check
    _
  $region27: #{watermarked_forward.5} parent=0 // pred_check_branch
    %25 = sbr.rel (0) target = $region29
  $region28: #{watermarked_forward.5} parent=0 // pred_region
    _
  $region29: #{watermarked_forward.5} parent=0 // pred_fallthru
    _
  %v27 = vld [vmem:[%s0] sm:$0xff]
  %v28 = vld [vmem:[%s0 + $0x8] sm:$0xff]
  %v29 = vld [vmem:[%s0 + $0x10] sm:$0xff]
  %v30 = vld [vmem:[%s0 + $0x18] sm:$0xff]
  %v31 = vld [vmem:[%s1] sm:$0xf]
  %v32 = vld [vmem:[%s1 + $0x4] sm:$0xf]
  %v33 = vld [vmem:[%s1 + $0x8] sm:$0xf]
  %v34 = vld [vmem:[%s1 + $0xc] sm:$0xf]
  %v35 = vld [vmem:[%s1 + $0x10] sm:$0xf]
  %v36 = vld [vmem:[%s1 + $0x14] sm:$0xf]
  %v37 = vld [vmem:[%s1 + $0x18] sm:$0xf]
  %v38 = vld [vmem:[%s1 + $0x1c] sm:$0xf]
  %v39 = vld [vmem:[%s1 + $0x20] sm:$0xf]
  %v40 = vld [vmem:[%s1 + $0x24] sm:$0xf]
  %v41 = vld [vmem:[%s1 + $0x28] sm:$0xf]
  %v42 = vld [vmem:[%s1 + $0x2c] sm:$0xf]
  %v43 = vld [vmem:[%s1 + $0x30] sm:$0xf]
  %v44 = vld [vmem:[%s1 + $0x34] sm:$0xf]
  %v45 = vld [vmem:[%s1 + $0x38] sm:$0xf]
  %v46 = vld [vmem:[%s1 + $0x3c] sm:$0xf]
  %v47 = vld [vmem:[%s1 + $0x40] sm:$0xf]
  %v48 = vld [vmem:[%s1 + $0x44] sm:$0xf]
  %v49 = vld [vmem:[%s1 + $0x48] sm:$0xf]
  %v50 = vld [vmem:[%s1 + $0x4c] sm:$0xf]
  %v51 = vld [vmem:[%s1 + $0x50] sm:$0xf]
  %v52 = vld [vmem:[%s1 + $0x54] sm:$0xf]
  %v53 = vld [vmem:[%s1 + $0x58] sm:$0xf]
  %v54 = vld [vmem:[%s1 + $0x5c] sm:$0xf]
  %v55 = vld [vmem:[%s1 + $0x60] sm:$0xf]
  %v56 = vld [vmem:[%s1 + $0x64] sm:$0xf]
  %v57 = vld [vmem:[%s1 + $0x68] sm:$0xf]
  %v58 = vld [vmem:[%s1 + $0x6c] sm:$0xf]
  %v59 = vld [vmem:[%s1 + $0x70] sm:$0xf]
  %v60 = vld [vmem:[%s1 + $0x74] sm:$0xf]
  %v61 = vld [vmem:[%s1 + $0x78] sm:$0xf]
  %v62 = vld [vmem:[%s1 + $0x7c] sm:$0xf]
  %v63 = vld [vmem:[%s1 + $0x80] sm:$0xf]
  %v64 = vld [vmem:[%s1 + $0x84] sm:$0xf]
  %v65 = vld [vmem:[%s1 + $0x88] sm:$0xf]
  %v66 = vld [vmem:[%s1 + $0x8c] sm:$0xf]
  %v67 = vld [vmem:[%s1 + $0x90] sm:$0xf]
  %v68 = vld [vmem:[%s1 + $0x94] sm:$0xf]
  %v69 = vld [vmem:[%s1 + $0x98] sm:$0xf]
  %v70 = vld [vmem:[%s1 + $0x9c] sm:$0xf]
  %v71 = vld [vmem:[%s1 + $0xa0] sm:$0xf]
  %v72 = vld [vmem:[%s1 + $0xa4] sm:$0xf]
  %v73 = vld [vmem:[%s1 + $0xa8] sm:$0xf]
  %v74 = vld [vmem:[%s1 + $0xac] sm:$0xf]
  %v75 = vld [vmem:[%s1 + $0xb0] sm:$0xf]
  %v76 = vld [vmem:[%s1 + $0xb4] sm:$0xf]
  %v77 = vld [vmem:[%s1 + $0xb8] sm:$0xf]
  %v78 = vld [vmem:[%s1 + $0xbc] sm:$0xf]
  %v79 = vld [vmem:[%s1 + $0xc0] sm:$0xf]
  %v80 = vld [vmem:[%s1 + $0xc4] sm:$0xf]
  %v81 = vld [vmem:[%s2] sm:$0x1]
  %v83 = vlaneseq
  %v84 = vshrl.u32 %v83, 7
  %v85 = vsub.s32 0, %v84
  %v86 = vrot.slane %v81, %v85
  %v92 = vunpack.c.l.b16 %v27
  %v93 = vunpack.c.h.b16 %v27
  %v94 = vunpack.c.l.b16 %v28
  %v95 = vunpack.c.h.b16 %v28
  %v96 = vunpack.c.l.b16 %v29
  %v97 = vunpack.c.h.b16 %v29
  %v98 = vunpack.c.l.b16 %v30
  %v99 = vunpack.c.h.b16 %v30
  %v100 = vpack.c.b16 %v96, %v92
  %v101 = vpack.c.b16 %v97, %v93
  %v102 = vpack.c.b16 %v98, %v94
  %v103 = vpack.c.b16 %v99, %v95
  %v157 = vunpack.c.l.b16 %v31
  %v158 = vunpack.c.l.b16 %v32
  %v159 = vunpack.c.l.b16 %v33
  %v160 = vunpack.c.l.b16 %v34
  %v161 = vunpack.c.l.b16 %v35
  %v162 = vunpack.c.l.b16 %v36
  %v163 = vunpack.c.l.b16 %v37
  %v164 = vunpack.c.l.b16 %v38
  %v165 = vunpack.c.l.b16 %v39
  %v166 = vunpack.c.l.b16 %v40
  %v167 = vunpack.c.l.b16 %v41
  %v168 = vunpack.c.l.b16 %v42
  %v169 = vunpack.c.l.b16 %v43
  %v170 = vunpack.c.l.b16 %v44
  %v171 = vunpack.c.l.b16 %v45
  %v172 = vunpack.c.l.b16 %v46
  %v173 = vunpack.c.l.b16 %v47
  %v174 = vunpack.c.l.b16 %v48
  %v175 = vunpack.c.l.b16 %v49
  %v176 = vunpack.c.l.b16 %v50
  %v177 = vunpack.c.l.b16 %v51
  %v178 = vunpack.c.l.b16 %v52
  %v179 = vunpack.c.l.b16 %v53
  %v180 = vunpack.c.l.b16 %v54
  %v181 = vunpack.c.l.b16 %v55
  %v182 = vunpack.c.l.b16 %v56
  %v183 = vunpack.c.l.b16 %v57
  %v184 = vunpack.c.l.b16 %v58
  %v185 = vunpack.c.l.b16 %v59
  %v186 = vunpack.c.l.b16 %v60
  %v187 = vunpack.c.l.b16 %v61
  %v188 = vunpack.c.l.b16 %v62
  %v189 = vunpack.c.l.b16 %v63
  %v190 = vunpack.c.l.b16 %v64
  %v191 = vunpack.c.l.b16 %v65
  %v192 = vunpack.c.l.b16 %v66
  %v193 = vunpack.c.l.b16 %v67
  %v194 = vunpack.c.l.b16 %v68
  %v195 = vunpack.c.l.b16 %v69
  %v196 = vunpack.c.l.b16 %v70
  %v197 = vunpack.c.l.b16 %v71
  %v198 = vunpack.c.l.b16 %v72
  %v199 = vunpack.c.l.b16 %v73
  %v200 = vunpack.c.l.b16 %v74
  %v201 = vunpack.c.l.b16 %v75
  %v202 = vunpack.c.l.b16 %v76
  %v203 = vunpack.c.l.b16 %v77
  %v204 = vunpack.c.l.b16 %v78
  %v205 = vunpack.c.l.b16 %v79
  %v206 = vunpack.c.l.b16 %v80
  %v207 = vpack.c.b16 %v158, %v157
  %v208 = vpack.c.b16 %v160, %v159
  %v209 = vpack.c.b16 %v162, %v161
  %v210 = vpack.c.b16 %v164, %v163
  %v211 = vpack.c.b16 %v166, %v165
  %v212 = vpack.c.b16 %v168, %v167
  %v213 = vpack.c.b16 %v170, %v169
  %v214 = vpack.c.b16 %v172, %v171
  %v215 = vpack.c.b16 %v174, %v173
  %v216 = vpack.c.b16 %v176, %v175
  %v217 = vpack.c.b16 %v178, %v177
  %v218 = vpack.c.b16 %v180, %v179
  %v219 = vpack.c.b16 %v182, %v181
  %v220 = vpack.c.b16 %v184, %v183
  %v221 = vpack.c.b16 %v186, %v185
  %v222 = vpack.c.b16 %v188, %v187
  %v223 = vpack.c.b16 %v190, %v189
  %v224 = vpack.c.b16 %v192, %v191
  %v225 = vpack.c.b16 %v194, %v193
  %v226 = vpack.c.b16 %v196, %v195
  %v227 = vpack.c.b16 %v198, %v197
  %v228 = vpack.c.b16 %v200, %v199
  %v229 = vpack.c.b16 %v202, %v201
  %v230 = vpack.c.b16 %v204, %v203
  %v231 = vpack.c.b16 %v206, %v205
  %vm257 = vcmask 130048
  %v259 = vsel %vm257, %v103, 0
  %261 = vmatprep.subr.bf16.mxu0 0
  %262 = vmatpush1.bf16.msra.mxu0 %v207
  %263 = vmatprep.subr.bf16.mxu0 0
  %264 = vmatpush1.bf16.msra.mxu0 %v208
  %265 = vmatprep.subr.bf16.mxu0 0
  %266 = vmatpush1.bf16.msra.mxu0 %v209
  %267 = vmatprep.subr.bf16.mxu0 0
  %268 = vmatpush1.bf16.msra.mxu0 %v210
  %269 = vmatprep.subr.bf16.mxu0 0
  %270 = vmatpush1.bf16.msra.mxu0 %v211
  %271 = vmatprep.subr.bf16.mxu0 0
  %272 = vmatpush1.bf16.msra.mxu0 %v212
  %273 = vmatprep.subr.bf16.mxu0 0
  %274 = vmatpush1.bf16.msra.mxu0 %v213
  %275 = vmatprep.subr.bf16.mxu0 0
  %276 = vmatpush1.bf16.msra.mxu0 %v214
  %277 = vmatprep.subr.bf16.mxu0 0
  %278 = vmatpush1.bf16.msra.mxu0 %v215
  %279 = vmatprep.subr.bf16.mxu0 0
  %280 = vmatpush1.bf16.msra.mxu0 %v216
  %281 = vmatprep.subr.bf16.mxu0 0
  %282 = vmatpush1.bf16.msra.mxu0 %v217
  %283 = vmatprep.subr.bf16.mxu0 0
  %284 = vmatpush1.bf16.msra.mxu0 %v218
  %285 = vmatprep.subr.bf16.mxu0 0
  %286 = vmatpush1.bf16.msra.mxu0 %v219
  %287 = vmatprep.subr.bf16.mxu0 0
  %288 = vmatpush1.bf16.msra.mxu0 %v220
  %289 = vmatprep.subr.bf16.mxu0 0
  %290 = vmatpush1.bf16.msra.mxu0 %v221
  %291 = vmatprep.subr.bf16.mxu0 0
  %292 = vmatpush1.bf16.msra.mxu0 %v222
  %293 = vmatprep.mubr.bf16.mxu0 %v101
  %294 = vmatmul.mubr.bf16.gmra.mrb[0].mxu0 %v100
  %v295 = vpop.f32.mrb[0].mxu0
  %v296 = vadd.f32 %v86, %v295
  %v297 = vpop.f32.mrb[0].mxu0
  %v298 = vpop.f32.mrb[0].mxu0
  %v299 = vadd.f32 %v86, %v298
  %v300 = vpop.f32.mrb[0].mxu0
  %301 = vdwg.mxu0
  %302 = vmatprep.subr.bf16.mxu0 0
  %303 = vmatpush1.bf16.msra.mxu0 %v223
  %304 = vmatprep.subr.bf16.mxu0 0
  %305 = vmatpush1.bf16.msra.mxu0 %v224
  %306 = vmatprep.subr.bf16.mxu0 0
  %307 = vmatpush1.bf16.msra.mxu0 %v225
  %308 = vmatprep.subr.bf16.mxu0 0
  %309 = vmatpush1.bf16.msra.mxu0 %v226
  %310 = vmatprep.subr.bf16.mxu0 0
  %311 = vmatpush1.bf16.msra.mxu0 %v227
  %312 = vmatprep.subr.bf16.mxu0 0
  %313 = vmatpush1.bf16.msra.mxu0 %v228
  %314 = vmatprep.subr.bf16.mxu0 0
  %315 = vmatpush1.bf16.msra.mxu0 %v229
  %316 = vmatprep.subr.bf16.mxu0 0
  %317 = vmatpush1.bf16.msra.mxu0 %v230
  %318 = vmatprep.subr.bf16.mxu0 0
  %319 = vmatpush1.bf16.msra.mxu0 %v231
  %320 = vmatprep.subr.bf16.mxu0 0
  %321 = vmatpush1.bf16.msra.mxu0 0
  %322 = vmatprep.subr.bf16.mxu0 0
  %323 = vmatpush1.bf16.msra.mxu0 0
  %324 = vmatprep.subr.bf16.mxu0 0
  %325 = vmatpush1.bf16.msra.mxu0 0
  %326 = vmatprep.subr.bf16.mxu0 0
  %327 = vmatpush1.bf16.msra.mxu0 0
  %328 = vmatprep.subr.bf16.mxu0 0
  %329 = vmatpush1.bf16.msra.mxu0 0
  %330 = vmatprep.subr.bf16.mxu0 0
  %331 = vmatpush1.bf16.msra.mxu0 0
  %332 = vmatprep.subr.bf16.mxu0 0
  %333 = vmatpush1.bf16.msra.mxu0 0
  %334 = vmatprep.mubr.bf16.mxu0 %v259
  %335 = vmatmul.mubr.bf16.gmra.mrb[0].mxu0 %v102
  %v336 = vpop.f32.mrb[0].mxu0
  %v337 = vadd.f32 %v296, %v336
  %v338 = vpop.f32.mrb[0].mxu0
  %v339 = vpop.f32.mrb[0].mxu0
  %v340 = vadd.f32 %v299, %v339
  %v341 = vpop.f32.mrb[0].mxu0
  %342 = vdwg.mxu0
  %v343 = vmax.f32 %v337, 0.0
  %v344 = vmax.f32 %v340, 0.0
  %v345 = vpack.c.bf16 %v344, %v343
  %v346 = vld [vmem:[%s3] sm:$0xf]
  %v347 = vld [vmem:[%s3 + $0x4] sm:$0xf]
  %v348 = vld [vmem:[%s3 + $0x8] sm:$0xf]
  %v349 = vld [vmem:[%s3 + $0xc] sm:$0xf]
  %v350 = vld [vmem:[%s3 + $0x10] sm:$0xf]
  %v351 = vld [vmem:[%s3 + $0x14] sm:$0xf]
  %v352 = vld [vmem:[%s3 + $0x18] sm:$0xf]
  %v353 = vld [vmem:[%s3 + $0x1c] sm:$0xf]
  %v354 = vld [vmem:[%s3 + $0x20] sm:$0xf]
  %v355 = vld [vmem:[%s3 + $0x24] sm:$0xf]
  %v356 = vld [vmem:[%s3 + $0x28] sm:$0xf]
  %v357 = vld [vmem:[%s3 + $0x2c] sm:$0xf]
  %v358 = vld [vmem:[%s3 + $0x30] sm:$0xf]
  %v359 = vld [vmem:[%s3 + $0x34] sm:$0xf]
  %v360 = vld [vmem:[%s3 + $0x38] sm:$0xf]
  %v361 = vld [vmem:[%s3 + $0x3c] sm:$0xf]
  %v362 = vld [vmem:[%s4] sm:$0x1]
  %v364 = vlaneseq
  %v365 = vshrl.u32 %v364, 7
  %v366 = vsub.s32 0, %v365
  %v367 = vrot.slane %v362, %v366
  %v385 = vunpack.c.l.b16 %v346
  %v386 = vunpack.c.l.b16 %v347
  %v387 = vunpack.c.l.b16 %v348
  %v388 = vunpack.c.l.b16 %v349
  %v389 = vunpack.c.l.b16 %v350
  %v390 = vunpack.c.l.b16 %v351
  %v391 = vunpack.c.l.b16 %v352
  %v392 = vunpack.c.l.b16 %v353
  %v393 = vunpack.c.l.b16 %v354
  %v394 = vunpack.c.l.b16 %v355
  %v395 = vunpack.c.l.b16 %v356
  %v396 = vunpack.c.l.b16 %v357
  %v397 = vunpack.c.l.b16 %v358
  %v398 = vunpack.c.l.b16 %v359
  %v399 = vunpack.c.l.b16 %v360
  %v400 = vunpack.c.l.b16 %v361
  %v401 = vpack.c.b16 %v386, %v385
  %v402 = vpack.c.b16 %v388, %v387
  %v403 = vpack.c.b16 %v390, %v389
  %v404 = vpack.c.b16 %v392, %v391
  %v405 = vpack.c.b16 %v394, %v393
  %v406 = vpack.c.b16 %v396, %v395
  %v407 = vpack.c.b16 %v398, %v397
  %v408 = vpack.c.b16 %v400, %v399
  %417 = vmatprep.subr.bf16.mxu0 0
  %418 = vmatpush1.bf16.msra.mxu0 %v401
  %419 = vmatprep.subr.bf16.mxu0 0
  %420 = vmatpush1.bf16.msra.mxu0 %v402
  %421 = vmatprep.subr.bf16.mxu0 0
  %422 = vmatpush1.bf16.msra.mxu0 %v403
  %423 = vmatprep.subr.bf16.mxu0 0
  %424 = vmatpush1.bf16.msra.mxu0 %v404
  %425 = vmatprep.subr.bf16.mxu0 0
  %426 = vmatpush1.bf16.msra.mxu0 %v405
  %427 = vmatprep.subr.bf16.mxu0 0
  %428 = vmatpush1.bf16.msra.mxu0 %v406
  %429 = vmatprep.subr.bf16.mxu0 0
  %430 = vmatpush1.bf16.msra.mxu0 %v407
  %431 = vmatprep.subr.bf16.mxu0 0
  %432 = vmatpush1.bf16.msra.mxu0 %v408
  %433 = vmatprep.subr.bf16.mxu0 0
  %434 = vmatpush1.bf16.msra.mxu0 0
  %435 = vmatprep.subr.bf16.mxu0 0
  %436 = vmatpush1.bf16.msra.mxu0 0
  %437 = vmatprep.subr.bf16.mxu0 0
  %438 = vmatpush1.bf16.msra.mxu0 0
  %439 = vmatprep.subr.bf16.mxu0 0
  %440 = vmatpush1.bf16.msra.mxu0 0
  %441 = vmatprep.subr.bf16.mxu0 0
  %442 = vmatpush1.bf16.msra.mxu0 0
  %443 = vmatprep.subr.bf16.mxu0 0
  %444 = vmatpush1.bf16.msra.mxu0 0
  %445 = vmatprep.subr.bf16.mxu0 0
  %446 = vmatpush1.bf16.msra.mxu0 0
  %447 = vmatprep.subr.bf16.mxu0 0
  %448 = vmatpush1.bf16.msra.mxu0 0
  %449 = vmatprep.mubr.bf16.mxu0 0
  %450 = vmatmul.mubr.bf16.gmra.mrb[0].mxu0 %v345
  %v451 = vpop.f32.mrb[0].mxu0
  %v452 = vadd.f32 %v367, %v451
  %v453 = vpop.f32.mrb[0].mxu0
  %v454 = vpop.f32.mrb[0].mxu0
  %v455 = vadd.f32 %v367, %v454
  %v456 = vpop.f32.mrb[0].mxu0
  %457 = vdwg.mxu0
  %v458 = vmax.f32 %v452, 0.0
  %v459 = vmax.f32 %v455, 0.0
  %v460 = vpack.c.bf16 %v459, %v458
  %v461 = vld [vmem:[%s5] sm:$0xf]
  %v462 = vld [vmem:[%s5 + $0x4] sm:$0xf]
  %v463 = vld [vmem:[%s5 + $0x8] sm:$0xf]
  %v464 = vld [vmem:[%s5 + $0xc] sm:$0xf]
  %v465 = vld [vmem:[%s5 + $0x10] sm:$0xf]
  %v466 = vld [vmem:[%s5 + $0x14] sm:$0xf]
  %v467 = vld [vmem:[%s5 + $0x18] sm:$0xf]
  %v468 = vld [vmem:[%s5 + $0x1c] sm:$0xf]
  %v469 = vld [vmem:[%s5 + $0x20] sm:$0xf]
  %v470 = vld [vmem:[%s5 + $0x24] sm:$0xf]
  %v471 = vld [vmem:[%s5 + $0x28] sm:$0xf]
  %v472 = vld [vmem:[%s5 + $0x2c] sm:$0xf]
  %v473 = vld [vmem:[%s5 + $0x30] sm:$0xf]
  %v474 = vld [vmem:[%s5 + $0x34] sm:$0xf]
  %v475 = vld [vmem:[%s5 + $0x38] sm:$0xf]
  %v476 = vld [vmem:[%s5 + $0x3c] sm:$0xf]
  %v477 = vld [vmem:[%s6] sm:$0x1]
  %v479 = vlaneseq
  %v480 = vshrl.u32 %v479, 7
  %v481 = vsub.s32 0, %v480
  %v482 = vrot.slane %v477, %v481
  %v500 = vunpack.c.l.b16 %v461
  %v501 = vunpack.c.l.b16 %v462
  %v502 = vunpack.c.l.b16 %v463
  %v503 = vunpack.c.l.b16 %v464
  %v504 = vunpack.c.l.b16 %v465
  %v505 = vunpack.c.l.b16 %v466
  %v506 = vunpack.c.l.b16 %v467
  %v507 = vunpack.c.l.b16 %v468
  %v508 = vunpack.c.l.b16 %v469
  %v509 = vunpack.c.l.b16 %v470
  %v510 = vunpack.c.l.b16 %v471
  %v511 = vunpack.c.l.b16 %v472
  %v512 = vunpack.c.l.b16 %v473
  %v513 = vunpack.c.l.b16 %v474
  %v514 = vunpack.c.l.b16 %v475
  %v515 = vunpack.c.l.b16 %v476
  %v516 = vpack.c.b16 %v501, %v500
  %v517 = vpack.c.b16 %v503, %v502
  %v518 = vpack.c.b16 %v505, %v504
  %v519 = vpack.c.b16 %v507, %v506
  %v520 = vpack.c.b16 %v509, %v508
  %v521 = vpack.c.b16 %v511, %v510
  %v522 = vpack.c.b16 %v513, %v512
  %v523 = vpack.c.b16 %v515, %v514
  %532 = vmatprep.subr.bf16.mxu0 0
  %533 = vmatpush1.bf16.msra.mxu0 %v516
  %534 = vmatprep.subr.bf16.mxu0 0
  %535 = vmatpush1.bf16.msra.mxu0 %v517
  %536 = vmatprep.subr.bf16.mxu0 0
  %537 = vmatpush1.bf16.msra.mxu0 %v518
  %538 = vmatprep.subr.bf16.mxu0 0
  %539 = vmatpush1.bf16.msra.mxu0 %v519
  %540 = vmatprep.subr.bf16.mxu0 0
  %541 = vmatpush1.bf16.msra.mxu0 %v520
  %542 = vmatprep.subr.bf16.mxu0 0
  %543 = vmatpush1.bf16.msra.mxu0 %v521
  %544 = vmatprep.subr.bf16.mxu0 0
  %545 = vmatpush1.bf16.msra.mxu0 %v522
  %546 = vmatprep.subr.bf16.mxu0 0
  %547 = vmatpush1.bf16.msra.mxu0 %v523
  %548 = vmatprep.subr.bf16.mxu0 0
  %549 = vmatpush1.bf16.msra.mxu0 0
  %550 = vmatprep.subr.bf16.mxu0 0
  %551 = vmatpush1.bf16.msra.mxu0 0
  %552 = vmatprep.subr.bf16.mxu0 0
  %553 = vmatpush1.bf16.msra.mxu0 0
  %554 = vmatprep.subr.bf16.mxu0 0
  %555 = vmatpush1.bf16.msra.mxu0 0
  %556 = vmatprep.subr.bf16.mxu0 0
  %557 = vmatpush1.bf16.msra.mxu0 0
  %558 = vmatprep.subr.bf16.mxu0 0
  %559 = vmatpush1.bf16.msra.mxu0 0
  %560 = vmatprep.subr.bf16.mxu0 0
  %561 = vmatpush1.bf16.msra.mxu0 0
  %562 = vmatprep.subr.bf16.mxu0 0
  %563 = vmatpush1.bf16.msra.mxu0 0
  %564 = vmatprep.mubr.bf16.mxu0 0
  %565 = vmatmul.mubr.bf16.gmra.mrb[0].mxu0 %v460
  %v566 = vpop.f32.mrb[0].mxu0
  %v567 = vadd.f32 %v482, %v566
  %v568 = vpop.f32.mrb[0].mxu0
  %v569 = vpop.f32.mrb[0].mxu0
  %v570 = vadd.f32 %v482, %v569
  %v571 = vpop.f32.mrb[0].mxu0
  %572 = vdwg.mxu0
  %v573 = vlaneseq
  %v574 = vand.u32 %v573, 127
  %vm575 = vcmp.lt.s32.totalorder %v574, 10
  %v576 = vsel %vm575, %v567, -1e+30
  %v577 = vsel %vm575, %v570, -1e+30
  %578 = vmax.xlane.f32.xlu0 %v576
  %v579 = vpop.xlane.xlu0 %578
  %580 = vmax.xlane.f32.xlu0 %v577
  %v581 = vpop.xlane.xlu0 %580
  %v582 = vsub.f32 %v576, %v579
  %v583 = vsub.f32 %v577, %v581
  %v584 = vmul.f32 %v582, 1.442695
  %v585 = vpow.pop %v584
  %v586 = vmul.f32 %v583, 1.442695
  %v587 = vpow.pop %v586
  %588 = vadd.xlane.f32.xlu0 %v585
  %v589 = vpop.xlane.xlu0 %588
  %590 = vadd.xlane.f32.xlu0 %v587
  %v591 = vpop.xlane.xlu0 %590
  %v592 = vlog2.pop %v589
  %v593 = vmul.f32 %v592, 0.6931472
  %v594 = vlog2.pop %v591
  %v595 = vmul.f32 %v594, 0.6931472
  %v596 = vsub.f32 %v582, %v593
  %v597 = vsub.f32 %v583, %v595
  %598 = vst [vmem:[%s7] sm:$0xff] %v596
  %599 = vst [vmem:[%s7 + $0x8] sm:$0xff] %v597
  // Predicated region
  $region30: #{watermarked_forward.5} parent=0 // pred_check
    _
  $region31: #{watermarked_forward.5} parent=0 // pred_check_branch
    %601 = sbr.rel (0) target = $region33
  $region32: #{watermarked_forward.5} parent=0 // pred_region
    _
  $region33: #{watermarked_forward.5} parent=0 // pred_fallthru
    _
  // Predicated region
  $region34: #{watermarked_forward.5} parent=0 // pred_check
    _
  $region35: #{watermarked_forward.5} parent=0 // pred_check_branch
    %603 = sbr.rel (0) target = $region37
  $region36: #{watermarked_forward.5} parent=0 // pred_region
    _
  $region37: #{watermarked_forward.5} parent=0 // pred_fallthru
    _

</llo_original>
